<compile_context>
chip_gen: v7x
topology: tpu7x:2x2x1
jax: 0.10.0
libtpu: 0.0.40
codegen_flags: <defaults>
</compile_context>

<pallas_src>
import functools

import jax
import jax.numpy as jnp
from jax import lax
from jax.experimental import pallas as pl
from jax.experimental.pallas import tpu as pltpu


# ----------------------------------------------------------------------------
# Fused ShuffleEncoder transformer kernel:
#   patch-embed Linear + (pos + bias) add  ->  num_layers x TransformerEncoderLayer
#   (post-norm, relu, eval-mode dropout)   ->  mlp_head LayerNorm + Linear
# Activations stay resident in VMEM as (B*P, D) for the whole call.
# ----------------------------------------------------------------------------

def fused_shuffle_encoder_kernel(tok_ref, posb_ref, bias_ref,
                                 pw_ref,
                                 wqkv_ref, bqkv_ref, wo_ref, bo_ref,
                                 g1_ref, be1_ref, g2_ref, be2_ref,
                                 w1_ref, b1_ref, w2_ref, b2_ref,
                                 hg_ref, hbe_ref, hw_ref, hb_ref,
                                 o_ref, *, nhead, num_layers, eps):
    f32 = jnp.float32

    def layernorm(y, g, b):
        mu = jnp.mean(y, axis=-1, keepdims=True)
        var = jnp.mean((y - mu) ** 2, axis=-1, keepdims=True)
        return (y - mu) * lax.rsqrt(var + eps) * g + b

    # --- patch embedding + (positional embedding + patch bias) (dropout = identity) ---
    x = jnp.dot(tok_ref[...], pw_ref[...], preferred_element_type=f32) + posb_ref[...]
    BP, D = x.shape
    hd = D // nhead
    bias = bias_ref[...]                                   # (B*P*H, B*P*H) additive mask

    # --- transformer encoder layers (post-norm, relu, eval mode) ---
    for l in range(num_layers):
        qkv = jnp.dot(x, wqkv_ref[l], preferred_element_type=f32) + bqkv_ref[l]
        # head-major flatten: row (h*BP + t) holds head h of flat token t
        # (1/sqrt(hd) attention scale is already folded into the Q part of wqkv/bqkv)
        qf = jnp.concatenate(
            [qkv[:, h * hd:(h + 1) * hd] for h in range(nhead)], axis=0)
        kf = jnp.concatenate(
            [qkv[:, D + h * hd:D + (h + 1) * hd] for h in range(nhead)], axis=0)
        vf = jnp.concatenate(
            [qkv[:, 2 * D + h * hd:2 * D + (h + 1) * hd] for h in range(nhead)], axis=0)
        # one batched score matmul for all (batch, head) pairs, masked block-diagonal
        s = lax.dot_general(qf, kf, (((1,), (1,)), ((), ())),
                            preferred_element_type=f32) + bias
        s = s - jnp.max(s, axis=-1, keepdims=True)
        probs = jnp.exp(s)
        probs = probs * pl.reciprocal(jnp.sum(probs, axis=-1, keepdims=True), approx=True)
        ctxf = jnp.dot(probs, vf, preferred_element_type=f32)          # (B*P*H, hd)
        # un-flatten: heads back along lanes -> (B*P, D), matching out_proj layout
        ctx = jnp.concatenate(
            [ctxf[h * BP:(h + 1) * BP, :] for h in range(nhead)], axis=1)
        attn = jnp.dot(ctx, wo_ref[l], preferred_element_type=f32) + bo_ref[l]

        y = layernorm(x + attn, g1_ref[l], be1_ref[l])                 # residual + LN1
        h1 = jnp.maximum(jnp.dot(y, w1_ref[l], preferred_element_type=f32) + b1_ref[l], 0.0)
        z = jnp.dot(h1, w2_ref[l], preferred_element_type=f32) + b2_ref[l]
        x = layernorm(y + z, g2_ref[l], be2_ref[l])                    # residual + LN2

    # --- mlp_head: LayerNorm + Linear(d_model -> patch_dim) ---
    yh = layernorm(x, hg_ref[...], hbe_ref[...])
    o_ref[...] = (jnp.dot(yh, hw_ref[...], preferred_element_type=f32)
                  + hb_ref[...]).astype(o_ref.dtype)


# ----------------------------------------------------------------------------
# pallas_call wrapper (single grid step; all weights full-block in VMEM)
# ----------------------------------------------------------------------------

def shuffle_encoder_transformer(tokens2d, posb2d, attn_bias, prm, *,
                                nhead, num_layers, eps=1e-5):
    BP = tokens2d.shape[0]
    out_dim = prm["head_wt"].shape[1]
    inputs = (tokens2d, posb2d, attn_bias,
              prm["patch_wt"],
              prm["wqkv"], prm["bqkv"], prm["wo"], prm["bo"],
              prm["g1"], prm["be1"], prm["g2"], prm["be2"],
              prm["w1"], prm["b1"], prm["w2"], prm["b2"],
              prm["head_g"], prm["head_be"], prm["head_wt"], prm["head_b"])

    def full_spec(a):
        return pl.BlockSpec(a.shape, lambda i, n=a.ndim: (0,) * n)

    kern = functools.partial(fused_shuffle_encoder_kernel,
                             nhead=nhead, num_layers=num_layers, eps=eps)
    return pl.pallas_call(
        kern,
        out_shape=jax.ShapeDtypeStruct((BP, out_dim), jnp.float32),
        grid=(1,),
        in_specs=[full_spec(a) for a in inputs],
        out_specs=pl.BlockSpec((BP, out_dim), lambda i: (0, 0)),
        compiler_params=pltpu.CompilerParams(dimension_semantics=("arbitrary",)),
    )(*inputs)


# ----------------------------------------------------------------------------
# JAX glue: Kaleidoscope shuffle, (un)patchify, attention mask
# ----------------------------------------------------------------------------

def kaleidoscope_indexes(nu, N):
    # TODO(synk): exact Kaleidoscope.MKTkaleidoscopeIndexes source was not provided;
    # reproduced as the multiplicative kaleidoscope map i -> (nu * i) mod N.
    return (nu * jnp.arange(N)) % N


def apply_kt(x, idx):
    # gather along both spatial axes (Kaleidoscope.ApplyKTTransform)
    return x[:, :, idx, :][:, :, :, idx]


def pseudo_inv_kt(x, idx):
    # scatter-back (Kaleidoscope.pseudoInvMKTransform); exact inverse when idx is a bijection
    inv = jnp.argsort(idx)
    return x[:, :, inv, :][:, :, :, inv]


def patchify(x, nu, shift):
    # 'b c (h p1) (w p2) -> b (h w) (p1 p2 c)'
    B, C, H, W = x.shape
    x = x.reshape(B, C, nu, shift, nu, shift)
    x = jnp.transpose(x, (0, 2, 4, 3, 5, 1))      # b h w p1 p2 c
    return x.reshape(B, nu * nu, shift * shift * C)


def unpatchify(x, nu, shift, C):
    # 'b (h w) (p1 p2 c) -> b c (h p1) (w p2)'
    B = x.shape[0]
    x = x.reshape(B, nu, nu, shift, shift, C)
    x = jnp.transpose(x, (0, 5, 1, 3, 2, 4))      # b c h p1 w p2
    return x.reshape(B, C, nu * shift, nu * shift)


def make_attn_bias(B, P, nhead):
    # additive mask for the head-major flattened attention:
    # flat row i <-> (head = i // (B*P), flat token = i % (B*P), batch = token // P)
    T = B * P
    i = jnp.arange(T * nhead)
    head = i // T
    batch = (i % T) // P
    same = (head[:, None] == head[None, :]) & (batch[:, None] == batch[None, :])
    return jnp.where(same, 0.0, -1e9).astype(jnp.float32)


# ----------------------------------------------------------------------------
# Parameter init (deterministic, synthetic; per-layer weights stacked on axis 0)
# ----------------------------------------------------------------------------

def init_shuffle_encoder_params(key, patch_dim, D, F, num_patches, num_enc_layers, nhead):
    k_embed, k_pos, k_head, k_layers = jax.random.split(key, 4)
    kl = jax.random.split(k_layers, 4 * num_enc_layers)
    std = 0.02
    L = num_enc_layers
    scale = 1.0 / ((D // nhead) ** 0.5)

    def nrm(k, shape):
        return jax.random.normal(k, shape, jnp.float32) * std

    wqkv = jnp.stack([nrm(kl[4 * l + 0], (D, 3 * D)) for l in range(L)])  # in_proj_weight.T
    bqkv = jnp.zeros((L, 1, 3 * D), jnp.float32)
    # fold the 1/sqrt(head_dim) attention scale into the Q projection (math-identical)
    wqkv = wqkv.at[:, :, :D].multiply(scale)
    bqkv = bqkv.at[:, :, :D].multiply(scale)
    return dict(
        patch_wt=nrm(k_embed, (patch_dim, D)),
        patch_b=jnp.zeros((1, D), jnp.float32),
        pos=nrm(k_pos, (1, num_patches, D)),
        wqkv=wqkv, bqkv=bqkv,
        wo=jnp.stack([nrm(kl[4 * l + 1], (D, D)) for l in range(L)]),     # out_proj.weight.T
        bo=jnp.zeros((L, 1, D), jnp.float32),
        g1=jnp.ones((L, 1, D), jnp.float32), be1=jnp.zeros((L, 1, D), jnp.float32),
        g2=jnp.ones((L, 1, D), jnp.float32), be2=jnp.zeros((L, 1, D), jnp.float32),
        w1=jnp.stack([nrm(kl[4 * l + 2], (D, F)) for l in range(L)]),     # linear1.weight.T
        b1=jnp.zeros((L, 1, F), jnp.float32),
        w2=jnp.stack([nrm(kl[4 * l + 3], (F, D)) for l in range(L)]),     # linear2.weight.T
        b2=jnp.zeros((L, 1, D), jnp.float32),
        head_g=jnp.ones((1, D), jnp.float32),
        head_be=jnp.zeros((1, D), jnp.float32),
        head_wt=nrm(k_head, (D, patch_dim)),
        head_b=jnp.zeros((1, patch_dim), jnp.float32),
    )


# ----------------------------------------------------------------------------
# Forward passes
# ----------------------------------------------------------------------------

def shuffle_encoder_forward(img, prm, cfg):
    nu, shift, C = cfg["nu"], cfg["shift"], cfg["numCh"]
    nhead, L = cfg["nhead"], cfg["num_encoder_layers"]
    idx = cfg["mkt"]
    B = img.shape[0]
    P = nu * nu

    x = apply_kt(img, idx)
    x = x[:, :, :-1, :-1]                                  # case 1: crop last row/column
    tokens = patchify(x, nu, shift).reshape(B * P, -1)     # (B*P, patch_dim)
    # positional embedding tiled over batch, with the patch-linear bias folded in
    posb2d = jnp.tile(prm["pos"][0], (B, 1)) + prm["patch_b"]   # (B*P, d_model)
    out2d = shuffle_encoder_transformer(tokens, posb2d, cfg["attn_bias"], prm,
                                        nhead=nhead, num_layers=L)
    x = unpatchify(out2d.reshape(B, P, -1), nu, shift, C)  # (B, C, N-1, N-1)
    x = jnp.pad(x, ((0, 0), (0, 0), (0, 1), (0, 1)))       # case 1: zero last row/column
    x = pseudo_inv_kt(x, idx)
    return x


def shuffle_vit_forward(xprev, layer_params, cfg):
    im = xprev
    for prm in layer_params:
        im = shuffle_encoder_forward(im, prm, cfg)
    return im


# ----------------------------------------------------------------------------
# main
# ----------------------------------------------------------------------------

if __name__ == "__main__":
    # ShuffleVIT config (small but consistent with the module defaults):
    B, numCh, N = 2, 1, 17
    nu, sigma = 2, 1
    layerNo = 2
    nhead = 8
    num_encoder_layers = 2

    assert (N - sigma) % nu == 0, "demo uses case 1"
    shift = (N - sigma) // nu                  # 8
    patch_dim = shift * shift * numCh          # 64
    d_model = patch_dim                        # default: shift*shift*numCh = 64
    dim_feedforward = int(d_model ** 1.5)      # default: 512
    num_patches = nu * nu                      # 4

    cfg = dict(nu=nu, shift=shift, N=N, numCh=numCh, nhead=nhead,
               num_encoder_layers=num_encoder_layers,
               mkt=kaleidoscope_indexes(nu, N),
               attn_bias=make_attn_bias(B, num_patches, nhead))

    key = jax.random.PRNGKey(0)
    k_img, *k_layers = jax.random.split(key, 1 + layerNo)
    layer_params = [
        init_shuffle_encoder_params(k, patch_dim, d_model, dim_feedforward,
                                    num_patches, num_encoder_layers, nhead)
        for k in k_layers
    ]

    x = jax.random.normal(k_img, (B, numCh, N, N), jnp.float32)

    fwd = jax.jit(lambda im, params: shuffle_vit_forward(im, params, cfg))
    out = jax.block_until_ready(fwd(x, layer_params))

    assert out.shape == (B, numCh, N, N), out.shape
    assert bool(jnp.all(jnp.isfinite(out)))
    print("KERNEL_OK")
</pallas_src>

<mosaic_0001>
module attributes {stable_mosaic.version = 11 : i64} {
  func.func @fused_shuffle_encoder_kernel(%arg0: i32, %arg1: memref<8x64xf32, #tpu.memory_space<vmem>>, %arg2: memref<8x64xf32, #tpu.memory_space<vmem>>, %arg3: memref<64x64xf32, #tpu.memory_space<vmem>>, %arg4: memref<64x64xf32, #tpu.memory_space<vmem>>, %arg5: memref<2x64x192xf32, #tpu.memory_space<vmem>>, %arg6: memref<2x1x192xf32, #tpu.memory_space<vmem>>, %arg7: memref<2x64x64xf32, #tpu.memory_space<vmem>>, %arg8: memref<2x1x64xf32, #tpu.memory_space<vmem>>, %arg9: memref<2x1x64xf32, #tpu.memory_space<vmem>>, %arg10: memref<2x1x64xf32, #tpu.memory_space<vmem>>, %arg11: memref<2x1x64xf32, #tpu.memory_space<vmem>>, %arg12: memref<2x1x64xf32, #tpu.memory_space<vmem>>, %arg13: memref<2x64x512xf32, #tpu.memory_space<vmem>>, %arg14: memref<2x1x512xf32, #tpu.memory_space<vmem>>, %arg15: memref<2x512x64xf32, #tpu.memory_space<vmem>>, %arg16: memref<2x1x64xf32, #tpu.memory_space<vmem>>, %arg17: memref<1x64xf32, #tpu.memory_space<vmem>>, %arg18: memref<1x64xf32, #tpu.memory_space<vmem>>, %arg19: memref<64x64xf32, #tpu.memory_space<vmem>>, %arg20: memref<1x64xf32, #tpu.memory_space<vmem>>, %arg21: memref<8x64xf32, #tpu.memory_space<vmem>>) attributes {dimension_semantics = [#tpu.dimension_semantics<arbitrary>], iteration_bounds = array<i64: 1>, scalar_prefetch = 0 : i64, scratch_operands = 0 : i64, tpu.core_type = #tpu.core_type<tc>, window_params = [{pipeline_mode = #tpu.pipeline_mode<synchronous>, transform_indices = @transform_0, window_bounds = array<i64: 8, 64>}, {pipeline_mode = #tpu.pipeline_mode<synchronous>, transform_indices = @transform_1, window_bounds = array<i64: 8, 64>}, {pipeline_mode = #tpu.pipeline_mode<synchronous>, transform_indices = @transform_2, window_bounds = array<i64: 64, 64>}, {pipeline_mode = #tpu.pipeline_mode<synchronous>, transform_indices = @transform_3, window_bounds = array<i64: 64, 64>}, {pipeline_mode = #tpu.pipeline_mode<synchronous>, transform_indices = @transform_4, window_bounds = array<i64: 2, 64, 192>}, {pipeline_mode = #tpu.pipeline_mode<synchronous>, transform_indices = @transform_5, window_bounds = array<i64: 2, 1, 192>}, {pipeline_mode = #tpu.pipeline_mode<synchronous>, transform_indices = @transform_6, window_bounds = array<i64: 2, 64, 64>}, {pipeline_mode = #tpu.pipeline_mode<synchronous>, transform_indices = @transform_7, window_bounds = array<i64: 2, 1, 64>}, {pipeline_mode = #tpu.pipeline_mode<synchronous>, transform_indices = @transform_8, window_bounds = array<i64: 2, 1, 64>}, {pipeline_mode = #tpu.pipeline_mode<synchronous>, transform_indices = @transform_9, window_bounds = array<i64: 2, 1, 64>}, {pipeline_mode = #tpu.pipeline_mode<synchronous>, transform_indices = @transform_10, window_bounds = array<i64: 2, 1, 64>}, {pipeline_mode = #tpu.pipeline_mode<synchronous>, transform_indices = @transform_11, window_bounds = array<i64: 2, 1, 64>}, {pipeline_mode = #tpu.pipeline_mode<synchronous>, transform_indices = @transform_12, window_bounds = array<i64: 2, 64, 512>}, {pipeline_mode = #tpu.pipeline_mode<synchronous>, transform_indices = @transform_13, window_bounds = array<i64: 2, 1, 512>}, {pipeline_mode = #tpu.pipeline_mode<synchronous>, transform_indices = @transform_14, window_bounds = array<i64: 2, 512, 64>}, {pipeline_mode = #tpu.pipeline_mode<synchronous>, transform_indices = @transform_15, window_bounds = array<i64: 2, 1, 64>}, {pipeline_mode = #tpu.pipeline_mode<synchronous>, transform_indices = @transform_16, window_bounds = array<i64: 1, 64>}, {pipeline_mode = #tpu.pipeline_mode<synchronous>, transform_indices = @transform_17, window_bounds = array<i64: 1, 64>}, {pipeline_mode = #tpu.pipeline_mode<synchronous>, transform_indices = @transform_18, window_bounds = array<i64: 64, 64>}, {pipeline_mode = #tpu.pipeline_mode<synchronous>, transform_indices = @transform_19, window_bounds = array<i64: 1, 64>}, {pipeline_mode = #tpu.pipeline_mode<synchronous>, transform_indices = @transform_20, window_bounds = array<i64: 8, 64>}]} {
    %c0 = arith.constant 0 : index
    %c0_0 = arith.constant 0 : index
    %0 = vector.load %arg1[%c0, %c0_0] : memref<8x64xf32, #tpu.memory_space<vmem>>, vector<8x64xf32>
    %c0_1 = arith.constant 0 : index
    %c0_2 = arith.constant 0 : index
    %1 = vector.load %arg4[%c0_1, %c0_2] : memref<64x64xf32, #tpu.memory_space<vmem>>, vector<64x64xf32>
    %cst = arith.constant dense<0.000000e+00> : vector<8x64xf32>
    %2 = tpu.matmul %0, %1, %cst {dimension_numbers = #tpu.dot_dimension_numbers<[1], [0], [0], [1], [0, 0, 1, 1], [], []>} : vector<8x64xf32>, vector<64x64xf32>, vector<8x64xf32> -> vector<8x64xf32>
    %c0_3 = arith.constant 0 : index
    %c0_4 = arith.constant 0 : index
    %3 = vector.load %arg2[%c0_3, %c0_4] : memref<8x64xf32, #tpu.memory_space<vmem>>, vector<8x64xf32>
    %4 = arith.addf %2, %3 : vector<8x64xf32>
    %c0_5 = arith.constant 0 : index
    %c0_6 = arith.constant 0 : index
    %5 = vector.load %arg3[%c0_5, %c0_6] : memref<64x64xf32, #tpu.memory_space<vmem>>, vector<64x64xf32>
    %c0_7 = arith.constant 0 : index
    %c0_8 = arith.constant 0 : index
    %c0_9 = arith.constant 0 : index
    %6 = vector.load %arg5[%c0_7, %c0_8, %c0_9] : memref<2x64x192xf32, #tpu.memory_space<vmem>>, vector<1x64x192xf32>
    %7 = vector.shape_cast %6 : vector<1x64x192xf32> to vector<64x192xf32>
    %cst_10 = arith.constant dense<0.000000e+00> : vector<8x192xf32>
    %8 = tpu.matmul %4, %7, %cst_10 {dimension_numbers = #tpu.dot_dimension_numbers<[1], [0], [0], [1], [0, 0, 1, 1], [], []>} : vector<8x64xf32>, vector<64x192xf32>, vector<8x192xf32> -> vector<8x192xf32>
    %c0_11 = arith.constant 0 : index
    %c0_12 = arith.constant 0 : index
    %c0_13 = arith.constant 0 : index
    %9 = vector.load %arg6[%c0_11, %c0_12, %c0_13] : memref<2x1x192xf32, #tpu.memory_space<vmem>>, vector<1x1x192xf32>
    %10 = vector.shape_cast %9 : vector<1x1x192xf32> to vector<1x192xf32>
    %11 = vector.broadcast %10 : vector<1x192xf32> to vector<8x192xf32>
    %12 = arith.addf %8, %11 : vector<8x192xf32>
    %13 = vector.extract_strided_slice %12 {offsets = [0, 0], sizes = [8, 8], strides = [1, 1]} : vector<8x192xf32> to vector<8x8xf32>
    %14 = vector.extract_strided_slice %12 {offsets = [0, 8], sizes = [8, 8], strides = [1, 1]} : vector<8x192xf32> to vector<8x8xf32>
    %15 = vector.extract_strided_slice %12 {offsets = [0, 16], sizes = [8, 8], strides = [1, 1]} : vector<8x192xf32> to vector<8x8xf32>
    %16 = vector.extract_strided_slice %12 {offsets = [0, 24], sizes = [8, 8], strides = [1, 1]} : vector<8x192xf32> to vector<8x8xf32>
    %17 = vector.extract_strided_slice %12 {offsets = [0, 32], sizes = [8, 8], strides = [1, 1]} : vector<8x192xf32> to vector<8x8xf32>
    %18 = vector.extract_strided_slice %12 {offsets = [0, 40], sizes = [8, 8], strides = [1, 1]} : vector<8x192xf32> to vector<8x8xf32>
    %19 = vector.extract_strided_slice %12 {offsets = [0, 48], sizes = [8, 8], strides = [1, 1]} : vector<8x192xf32> to vector<8x8xf32>
    %20 = vector.extract_strided_slice %12 {offsets = [0, 56], sizes = [8, 8], strides = [1, 1]} : vector<8x192xf32> to vector<8x8xf32>
    %21 = tpu.concatenate %13, %14, %15, %16, %17, %18, %19, %20 in 0 : vector<8x8xf32>, vector<8x8xf32>, vector<8x8xf32>, vector<8x8xf32>, vector<8x8xf32>, vector<8x8xf32>, vector<8x8xf32>, vector<8x8xf32> -> vector<64x8xf32>
    %22 = vector.extract_strided_slice %12 {offsets = [0, 64], sizes = [8, 8], strides = [1, 1]} : vector<8x192xf32> to vector<8x8xf32>
    %23 = vector.extract_strided_slice %12 {offsets = [0, 72], sizes = [8, 8], strides = [1, 1]} : vector<8x192xf32> to vector<8x8xf32>
    %24 = vector.extract_strided_slice %12 {offsets = [0, 80], sizes = [8, 8], strides = [1, 1]} : vector<8x192xf32> to vector<8x8xf32>
    %25 = vector.extract_strided_slice %12 {offsets = [0, 88], sizes = [8, 8], strides = [1, 1]} : vector<8x192xf32> to vector<8x8xf32>
    %26 = vector.extract_strided_slice %12 {offsets = [0, 96], sizes = [8, 8], strides = [1, 1]} : vector<8x192xf32> to vector<8x8xf32>
    %27 = vector.extract_strided_slice %12 {offsets = [0, 104], sizes = [8, 8], strides = [1, 1]} : vector<8x192xf32> to vector<8x8xf32>
    %28 = vector.extract_strided_slice %12 {offsets = [0, 112], sizes = [8, 8], strides = [1, 1]} : vector<8x192xf32> to vector<8x8xf32>
    %29 = vector.extract_strided_slice %12 {offsets = [0, 120], sizes = [8, 8], strides = [1, 1]} : vector<8x192xf32> to vector<8x8xf32>
    %30 = tpu.concatenate %22, %23, %24, %25, %26, %27, %28, %29 in 0 : vector<8x8xf32>, vector<8x8xf32>, vector<8x8xf32>, vector<8x8xf32>, vector<8x8xf32>, vector<8x8xf32>, vector<8x8xf32>, vector<8x8xf32> -> vector<64x8xf32>
    %31 = vector.extract_strided_slice %12 {offsets = [0, 128], sizes = [8, 8], strides = [1, 1]} : vector<8x192xf32> to vector<8x8xf32>
    %32 = vector.extract_strided_slice %12 {offsets = [0, 136], sizes = [8, 8], strides = [1, 1]} : vector<8x192xf32> to vector<8x8xf32>
    %33 = vector.extract_strided_slice %12 {offsets = [0, 144], sizes = [8, 8], strides = [1, 1]} : vector<8x192xf32> to vector<8x8xf32>
    %34 = vector.extract_strided_slice %12 {offsets = [0, 152], sizes = [8, 8], strides = [1, 1]} : vector<8x192xf32> to vector<8x8xf32>
    %35 = vector.extract_strided_slice %12 {offsets = [0, 160], sizes = [8, 8], strides = [1, 1]} : vector<8x192xf32> to vector<8x8xf32>
    %36 = vector.extract_strided_slice %12 {offsets = [0, 168], sizes = [8, 8], strides = [1, 1]} : vector<8x192xf32> to vector<8x8xf32>
    %37 = vector.extract_strided_slice %12 {offsets = [0, 176], sizes = [8, 8], strides = [1, 1]} : vector<8x192xf32> to vector<8x8xf32>
    %38 = vector.extract_strided_slice %12 {offsets = [0, 184], sizes = [8, 8], strides = [1, 1]} : vector<8x192xf32> to vector<8x8xf32>
    %39 = tpu.concatenate %31, %32, %33, %34, %35, %36, %37, %38 in 0 : vector<8x8xf32>, vector<8x8xf32>, vector<8x8xf32>, vector<8x8xf32>, vector<8x8xf32>, vector<8x8xf32>, vector<8x8xf32>, vector<8x8xf32> -> vector<64x8xf32>
    %cst_14 = arith.constant dense<0.000000e+00> : vector<64x64xf32>
    %40 = tpu.matmul %21, %30, %cst_14 {dimension_numbers = #tpu.dot_dimension_numbers<[1], [1], [0], [0], [0, 0, 1, 0], [], []>} : vector<64x8xf32>, vector<64x8xf32>, vector<64x64xf32> -> vector<64x64xf32>
    %41 = arith.addf %40, %5 : vector<64x64xf32>
    %cst_15 = arith.constant dense<0xFF800000> : vector<64xf32>
    %42 = vector.multi_reduction <maximumf>, %41, %cst_15 [1] : vector<64x64xf32> to vector<64xf32>
    %43 = vector.shape_cast %42 : vector<64xf32> to vector<64x1xf32>
    %44 = vector.broadcast %43 : vector<64x1xf32> to vector<64x64xf32>
    %45 = arith.subf %41, %44 : vector<64x64xf32>
    %46 = math.exp %45 : vector<64x64xf32>
    %cst_16 = arith.constant dense<0.000000e+00> : vector<64xf32>
    %47 = vector.multi_reduction <add>, %46, %cst_16 [1] : vector<64x64xf32> to vector<64xf32>
    %48 = vector.shape_cast %47 : vector<64xf32> to vector<64x1xf32>
    %49 = tpu.reciprocal %48 {approx = true} : vector<64x1xf32> -> vector<64x1xf32>
    %50 = vector.broadcast %49 : vector<64x1xf32> to vector<64x64xf32>
    %51 = arith.mulf %46, %50 : vector<64x64xf32>
    %cst_17 = arith.constant dense<0.000000e+00> : vector<64x8xf32>
    %52 = tpu.matmul %51, %39, %cst_17 {dimension_numbers = #tpu.dot_dimension_numbers<[1], [0], [0], [1], [0, 0, 1, 1], [], []>} : vector<64x64xf32>, vector<64x8xf32>, vector<64x8xf32> -> vector<64x8xf32>
    %53 = vector.extract_strided_slice %52 {offsets = [0, 0], sizes = [8, 8], strides = [1, 1]} : vector<64x8xf32> to vector<8x8xf32>
    %54 = vector.extract_strided_slice %52 {offsets = [8, 0], sizes = [8, 8], strides = [1, 1]} : vector<64x8xf32> to vector<8x8xf32>
    %55 = vector.extract_strided_slice %52 {offsets = [16, 0], sizes = [8, 8], strides = [1, 1]} : vector<64x8xf32> to vector<8x8xf32>
    %56 = vector.extract_strided_slice %52 {offsets = [24, 0], sizes = [8, 8], strides = [1, 1]} : vector<64x8xf32> to vector<8x8xf32>
    %57 = vector.extract_strided_slice %52 {offsets = [32, 0], sizes = [8, 8], strides = [1, 1]} : vector<64x8xf32> to vector<8x8xf32>
    %58 = vector.extract_strided_slice %52 {offsets = [40, 0], sizes = [8, 8], strides = [1, 1]} : vector<64x8xf32> to vector<8x8xf32>
    %59 = vector.extract_strided_slice %52 {offsets = [48, 0], sizes = [8, 8], strides = [1, 1]} : vector<64x8xf32> to vector<8x8xf32>
    %60 = vector.extract_strided_slice %52 {offsets = [56, 0], sizes = [8, 8], strides = [1, 1]} : vector<64x8xf32> to vector<8x8xf32>
    %61 = tpu.concatenate %53, %54, %55, %56, %57, %58, %59, %60 in 1 : vector<8x8xf32>, vector<8x8xf32>, vector<8x8xf32>, vector<8x8xf32>, vector<8x8xf32>, vector<8x8xf32>, vector<8x8xf32>, vector<8x8xf32> -> vector<8x64xf32>
    %c0_18 = arith.constant 0 : index
    %c0_19 = arith.constant 0 : index
    %c0_20 = arith.constant 0 : index
    %62 = vector.load %arg7[%c0_18, %c0_19, %c0_20] : memref<2x64x64xf32, #tpu.memory_space<vmem>>, vector<1x64x64xf32>
    %63 = vector.shape_cast %62 : vector<1x64x64xf32> to vector<64x64xf32>
    %cst_21 = arith.constant dense<0.000000e+00> : vector<8x64xf32>
    %64 = tpu.matmul %61, %63, %cst_21 {dimension_numbers = #tpu.dot_dimension_numbers<[1], [0], [0], [1], [0, 0, 1, 1], [], []>} : vector<8x64xf32>, vector<64x64xf32>, vector<8x64xf32> -> vector<8x64xf32>
    %c0_22 = arith.constant 0 : index
    %c0_23 = arith.constant 0 : index
    %c0_24 = arith.constant 0 : index
    %65 = vector.load %arg8[%c0_22, %c0_23, %c0_24] : memref<2x1x64xf32, #tpu.memory_space<vmem>>, vector<1x1x64xf32>
    %66 = vector.shape_cast %65 : vector<1x1x64xf32> to vector<1x64xf32>
    %67 = vector.broadcast %66 : vector<1x64xf32> to vector<8x64xf32>
    %68 = arith.addf %64, %67 : vector<8x64xf32>
    %69 = arith.addf %4, %68 : vector<8x64xf32>
    %c0_25 = arith.constant 0 : index
    %c0_26 = arith.constant 0 : index
    %c0_27 = arith.constant 0 : index
    %70 = vector.load %arg9[%c0_25, %c0_26, %c0_27] : memref<2x1x64xf32, #tpu.memory_space<vmem>>, vector<1x1x64xf32>
    %71 = vector.shape_cast %70 : vector<1x1x64xf32> to vector<1x64xf32>
    %c0_28 = arith.constant 0 : index
    %c0_29 = arith.constant 0 : index
    %c0_30 = arith.constant 0 : index
    %72 = vector.load %arg10[%c0_28, %c0_29, %c0_30] : memref<2x1x64xf32, #tpu.memory_space<vmem>>, vector<1x1x64xf32>
    %73 = vector.shape_cast %72 : vector<1x1x64xf32> to vector<1x64xf32>
    %cst_31 = arith.constant dense<0.000000e+00> : vector<8xf32>
    %74 = vector.multi_reduction <add>, %69, %cst_31 [1] : vector<8x64xf32> to vector<8xf32>
    %75 = vector.shape_cast %74 : vector<8xf32> to vector<8x1xf32>
    %cst_32 = arith.constant 6.400000e+01 : f32
    %76 = vector.broadcast %cst_32 : f32 to vector<8x1xf32>
    %77 = arith.divf %75, %76 : vector<8x1xf32>
    %78 = vector.broadcast %77 : vector<8x1xf32> to vector<8x64xf32>
    %79 = arith.subf %69, %78 : vector<8x64xf32>
    %80 = arith.mulf %79, %79 : vector<8x64xf32>
    %cst_33 = arith.constant dense<0.000000e+00> : vector<8xf32>
    %81 = vector.multi_reduction <add>, %80, %cst_33 [1] : vector<8x64xf32> to vector<8xf32>
    %82 = vector.shape_cast %81 : vector<8xf32> to vector<8x1xf32>
    %cst_34 = arith.constant 6.400000e+01 : f32
    %83 = vector.broadcast %cst_34 : f32 to vector<8x1xf32>
    %84 = arith.divf %82, %83 : vector<8x1xf32>
    %85 = vector.broadcast %77 : vector<8x1xf32> to vector<8x64xf32>
    %86 = arith.subf %69, %85 : vector<8x64xf32>
    %cst_35 = arith.constant 9.99999974E-6 : f32
    %87 = vector.broadcast %cst_35 : f32 to vector<8x1xf32>
    %88 = arith.addf %84, %87 : vector<8x1xf32>
    %89 = math.rsqrt %88 : vector<8x1xf32>
    %90 = vector.broadcast %89 : vector<8x1xf32> to vector<8x64xf32>
    %91 = arith.mulf %86, %90 : vector<8x64xf32>
    %92 = vector.broadcast %71 : vector<1x64xf32> to vector<8x64xf32>
    %93 = arith.mulf %91, %92 : vector<8x64xf32>
    %94 = vector.broadcast %73 : vector<1x64xf32> to vector<8x64xf32>
    %95 = arith.addf %93, %94 : vector<8x64xf32>
    %c0_36 = arith.constant 0 : index
    %c0_37 = arith.constant 0 : index
    %c0_38 = arith.constant 0 : index
    %96 = vector.load %arg13[%c0_36, %c0_37, %c0_38] : memref<2x64x512xf32, #tpu.memory_space<vmem>>, vector<1x64x512xf32>
    %97 = vector.shape_cast %96 : vector<1x64x512xf32> to vector<64x512xf32>
    %cst_39 = arith.constant dense<0.000000e+00> : vector<8x512xf32>
    %98 = tpu.matmul %95, %97, %cst_39 {dimension_numbers = #tpu.dot_dimension_numbers<[1], [0], [0], [1], [0, 0, 1, 1], [], []>} : vector<8x64xf32>, vector<64x512xf32>, vector<8x512xf32> -> vector<8x512xf32>
    %c0_40 = arith.constant 0 : index
    %c0_41 = arith.constant 0 : index
    %c0_42 = arith.constant 0 : index
    %99 = vector.load %arg14[%c0_40, %c0_41, %c0_42] : memref<2x1x512xf32, #tpu.memory_space<vmem>>, vector<1x1x512xf32>
    %100 = vector.shape_cast %99 : vector<1x1x512xf32> to vector<1x512xf32>
    %101 = vector.broadcast %100 : vector<1x512xf32> to vector<8x512xf32>
    %102 = arith.addf %98, %101 : vector<8x512xf32>
    %cst_43 = arith.constant 0.000000e+00 : f32
    %103 = vector.broadcast %cst_43 : f32 to vector<8x512xf32>
    %104 = arith.maximumf %102, %103 : vector<8x512xf32>
    %c0_44 = arith.constant 0 : index
    %c0_45 = arith.constant 0 : index
    %c0_46 = arith.constant 0 : index
    %105 = vector.load %arg15[%c0_44, %c0_45, %c0_46] : memref<2x512x64xf32, #tpu.memory_space<vmem>>, vector<1x512x64xf32>
    %106 = vector.shape_cast %105 : vector<1x512x64xf32> to vector<512x64xf32>
    %cst_47 = arith.constant dense<0.000000e+00> : vector<8x64xf32>
    %107 = tpu.matmul %104, %106, %cst_47 {dimension_numbers = #tpu.dot_dimension_numbers<[1], [0], [0], [1], [0, 0, 1, 1], [], []>} : vector<8x512xf32>, vector<512x64xf32>, vector<8x64xf32> -> vector<8x64xf32>
    %c0_48 = arith.constant 0 : index
    %c0_49 = arith.constant 0 : index
    %c0_50 = arith.constant 0 : index
    %108 = vector.load %arg16[%c0_48, %c0_49, %c0_50] : memref<2x1x64xf32, #tpu.memory_space<vmem>>, vector<1x1x64xf32>
    %109 = vector.shape_cast %108 : vector<1x1x64xf32> to vector<1x64xf32>
    %110 = vector.broadcast %109 : vector<1x64xf32> to vector<8x64xf32>
    %111 = arith.addf %107, %110 : vector<8x64xf32>
    %112 = arith.addf %95, %111 : vector<8x64xf32>
    %c0_51 = arith.constant 0 : index
    %c0_52 = arith.constant 0 : index
    %c0_53 = arith.constant 0 : index
    %113 = vector.load %arg11[%c0_51, %c0_52, %c0_53] : memref<2x1x64xf32, #tpu.memory_space<vmem>>, vector<1x1x64xf32>
    %114 = vector.shape_cast %113 : vector<1x1x64xf32> to vector<1x64xf32>
    %c0_54 = arith.constant 0 : index
    %c0_55 = arith.constant 0 : index
    %c0_56 = arith.constant 0 : index
    %115 = vector.load %arg12[%c0_54, %c0_55, %c0_56] : memref<2x1x64xf32, #tpu.memory_space<vmem>>, vector<1x1x64xf32>
    %116 = vector.shape_cast %115 : vector<1x1x64xf32> to vector<1x64xf32>
    %cst_57 = arith.constant dense<0.000000e+00> : vector<8xf32>
    %117 = vector.multi_reduction <add>, %112, %cst_57 [1] : vector<8x64xf32> to vector<8xf32>
    %118 = vector.shape_cast %117 : vector<8xf32> to vector<8x1xf32>
    %cst_58 = arith.constant 6.400000e+01 : f32
    %119 = vector.broadcast %cst_58 : f32 to vector<8x1xf32>
    %120 = arith.divf %118, %119 : vector<8x1xf32>
    %121 = vector.broadcast %120 : vector<8x1xf32> to vector<8x64xf32>
    %122 = arith.subf %112, %121 : vector<8x64xf32>
    %123 = arith.mulf %122, %122 : vector<8x64xf32>
    %cst_59 = arith.constant dense<0.000000e+00> : vector<8xf32>
    %124 = vector.multi_reduction <add>, %123, %cst_59 [1] : vector<8x64xf32> to vector<8xf32>
    %125 = vector.shape_cast %124 : vector<8xf32> to vector<8x1xf32>
    %cst_60 = arith.constant 6.400000e+01 : f32
    %126 = vector.broadcast %cst_60 : f32 to vector<8x1xf32>
    %127 = arith.divf %125, %126 : vector<8x1xf32>
    %128 = vector.broadcast %120 : vector<8x1xf32> to vector<8x64xf32>
    %129 = arith.subf %112, %128 : vector<8x64xf32>
    %cst_61 = arith.constant 9.99999974E-6 : f32
    %130 = vector.broadcast %cst_61 : f32 to vector<8x1xf32>
    %131 = arith.addf %127, %130 : vector<8x1xf32>
    %132 = math.rsqrt %131 : vector<8x1xf32>
    %133 = vector.broadcast %132 : vector<8x1xf32> to vector<8x64xf32>
    %134 = arith.mulf %129, %133 : vector<8x64xf32>
    %135 = vector.broadcast %114 : vector<1x64xf32> to vector<8x64xf32>
    %136 = arith.mulf %134, %135 : vector<8x64xf32>
    %137 = vector.broadcast %116 : vector<1x64xf32> to vector<8x64xf32>
    %138 = arith.addf %136, %137 : vector<8x64xf32>
    %c1 = arith.constant 1 : index
    %c0_62 = arith.constant 0 : index
    %c0_63 = arith.constant 0 : index
    %139 = vector.load %arg5[%c1, %c0_62, %c0_63] : memref<2x64x192xf32, #tpu.memory_space<vmem>>, vector<1x64x192xf32>
    %140 = vector.shape_cast %139 : vector<1x64x192xf32> to vector<64x192xf32>
    %cst_64 = arith.constant dense<0.000000e+00> : vector<8x192xf32>
    %141 = tpu.matmul %138, %140, %cst_64 {dimension_numbers = #tpu.dot_dimension_numbers<[1], [0], [0], [1], [0, 0, 1, 1], [], []>} : vector<8x64xf32>, vector<64x192xf32>, vector<8x192xf32> -> vector<8x192xf32>
    %c1_65 = arith.constant 1 : index
    %c0_66 = arith.constant 0 : index
    %c0_67 = arith.constant 0 : index
    %142 = vector.load %arg6[%c1_65, %c0_66, %c0_67] : memref<2x1x192xf32, #tpu.memory_space<vmem>>, vector<1x1x192xf32>
    %143 = vector.shape_cast %142 : vector<1x1x192xf32> to vector<1x192xf32>
    %144 = vector.broadcast %143 : vector<1x192xf32> to vector<8x192xf32>
    %145 = arith.addf %141, %144 : vector<8x192xf32>
    %146 = vector.extract_strided_slice %145 {offsets = [0, 0], sizes = [8, 8], strides = [1, 1]} : vector<8x192xf32> to vector<8x8xf32>
    %147 = vector.extract_strided_slice %145 {offsets = [0, 8], sizes = [8, 8], strides = [1, 1]} : vector<8x192xf32> to vector<8x8xf32>
    %148 = vector.extract_strided_slice %145 {offsets = [0, 16], sizes = [8, 8], strides = [1, 1]} : vector<8x192xf32> to vector<8x8xf32>
    %149 = vector.extract_strided_slice %145 {offsets = [0, 24], sizes = [8, 8], strides = [1, 1]} : vector<8x192xf32> to vector<8x8xf32>
    %150 = vector.extract_strided_slice %145 {offsets = [0, 32], sizes = [8, 8], strides = [1, 1]} : vector<8x192xf32> to vector<8x8xf32>
    %151 = vector.extract_strided_slice %145 {offsets = [0, 40], sizes = [8, 8], strides = [1, 1]} : vector<8x192xf32> to vector<8x8xf32>
    %152 = vector.extract_strided_slice %145 {offsets = [0, 48], sizes = [8, 8], strides = [1, 1]} : vector<8x192xf32> to vector<8x8xf32>
    %153 = vector.extract_strided_slice %145 {offsets = [0, 56], sizes = [8, 8], strides = [1, 1]} : vector<8x192xf32> to vector<8x8xf32>
    %154 = tpu.concatenate %146, %147, %148, %149, %150, %151, %152, %153 in 0 : vector<8x8xf32>, vector<8x8xf32>, vector<8x8xf32>, vector<8x8xf32>, vector<8x8xf32>, vector<8x8xf32>, vector<8x8xf32>, vector<8x8xf32> -> vector<64x8xf32>
    %155 = vector.extract_strided_slice %145 {offsets = [0, 64], sizes = [8, 8], strides = [1, 1]} : vector<8x192xf32> to vector<8x8xf32>
    %156 = vector.extract_strided_slice %145 {offsets = [0, 72], sizes = [8, 8], strides = [1, 1]} : vector<8x192xf32> to vector<8x8xf32>
    %157 = vector.extract_strided_slice %145 {offsets = [0, 80], sizes = [8, 8], strides = [1, 1]} : vector<8x192xf32> to vector<8x8xf32>
    %158 = vector.extract_strided_slice %145 {offsets = [0, 88], sizes = [8, 8], strides = [1, 1]} : vector<8x192xf32> to vector<8x8xf32>
    %159 = vector.extract_strided_slice %145 {offsets = [0, 96], sizes = [8, 8], strides = [1, 1]} : vector<8x192xf32> to vector<8x8xf32>
    %160 = vector.extract_strided_slice %145 {offsets = [0, 104], sizes = [8, 8], strides = [1, 1]} : vector<8x192xf32> to vector<8x8xf32>
    %161 = vector.extract_strided_slice %145 {offsets = [0, 112], sizes = [8, 8], strides = [1, 1]} : vector<8x192xf32> to vector<8x8xf32>
    %162 = vector.extract_strided_slice %145 {offsets = [0, 120], sizes = [8, 8], strides = [1, 1]} : vector<8x192xf32> to vector<8x8xf32>
    %163 = tpu.concatenate %155, %156, %157, %158, %159, %160, %161, %162 in 0 : vector<8x8xf32>, vector<8x8xf32>, vector<8x8xf32>, vector<8x8xf32>, vector<8x8xf32>, vector<8x8xf32>, vector<8x8xf32>, vector<8x8xf32> -> vector<64x8xf32>
    %164 = vector.extract_strided_slice %145 {offsets = [0, 128], sizes = [8, 8], strides = [1, 1]} : vector<8x192xf32> to vector<8x8xf32>
    %165 = vector.extract_strided_slice %145 {offsets = [0, 136], sizes = [8, 8], strides = [1, 1]} : vector<8x192xf32> to vector<8x8xf32>
    %166 = vector.extract_strided_slice %145 {offsets = [0, 144], sizes = [8, 8], strides = [1, 1]} : vector<8x192xf32> to vector<8x8xf32>
    %167 = vector.extract_strided_slice %145 {offsets = [0, 152], sizes = [8, 8], strides = [1, 1]} : vector<8x192xf32> to vector<8x8xf32>
    %168 = vector.extract_strided_slice %145 {offsets = [0, 160], sizes = [8, 8], strides = [1, 1]} : vector<8x192xf32> to vector<8x8xf32>
    %169 = vector.extract_strided_slice %145 {offsets = [0, 168], sizes = [8, 8], strides = [1, 1]} : vector<8x192xf32> to vector<8x8xf32>
    %170 = vector.extract_strided_slice %145 {offsets = [0, 176], sizes = [8, 8], strides = [1, 1]} : vector<8x192xf32> to vector<8x8xf32>
    %171 = vector.extract_strided_slice %145 {offsets = [0, 184], sizes = [8, 8], strides = [1, 1]} : vector<8x192xf32> to vector<8x8xf32>
    %172 = tpu.concatenate %164, %165, %166, %167, %168, %169, %170, %171 in 0 : vector<8x8xf32>, vector<8x8xf32>, vector<8x8xf32>, vector<8x8xf32>, vector<8x8xf32>, vector<8x8xf32>, vector<8x8xf32>, vector<8x8xf32> -> vector<64x8xf32>
    %cst_68 = arith.constant dense<0.000000e+00> : vector<64x64xf32>
    %173 = tpu.matmul %154, %163, %cst_68 {dimension_numbers = #tpu.dot_dimension_numbers<[1], [1], [0], [0], [0, 0, 1, 0], [], []>} : vector<64x8xf32>, vector<64x8xf32>, vector<64x64xf32> -> vector<64x64xf32>
    %174 = arith.addf %173, %5 : vector<64x64xf32>
    %cst_69 = arith.constant dense<0xFF800000> : vector<64xf32>
    %175 = vector.multi_reduction <maximumf>, %174, %cst_69 [1] : vector<64x64xf32> to vector<64xf32>
    %176 = vector.shape_cast %175 : vector<64xf32> to vector<64x1xf32>
    %177 = vector.broadcast %176 : vector<64x1xf32> to vector<64x64xf32>
    %178 = arith.subf %174, %177 : vector<64x64xf32>
    %179 = math.exp %178 : vector<64x64xf32>
    %cst_70 = arith.constant dense<0.000000e+00> : vector<64xf32>
    %180 = vector.multi_reduction <add>, %179, %cst_70 [1] : vector<64x64xf32> to vector<64xf32>
    %181 = vector.shape_cast %180 : vector<64xf32> to vector<64x1xf32>
    %182 = tpu.reciprocal %181 {approx = true} : vector<64x1xf32> -> vector<64x1xf32>
    %183 = vector.broadcast %182 : vector<64x1xf32> to vector<64x64xf32>
    %184 = arith.mulf %179, %183 : vector<64x64xf32>
    %cst_71 = arith.constant dense<0.000000e+00> : vector<64x8xf32>
    %185 = tpu.matmul %184, %172, %cst_71 {dimension_numbers = #tpu.dot_dimension_numbers<[1], [0], [0], [1], [0, 0, 1, 1], [], []>} : vector<64x64xf32>, vector<64x8xf32>, vector<64x8xf32> -> vector<64x8xf32>
    %186 = vector.extract_strided_slice %185 {offsets = [0, 0], sizes = [8, 8], strides = [1, 1]} : vector<64x8xf32> to vector<8x8xf32>
    %187 = vector.extract_strided_slice %185 {offsets = [8, 0], sizes = [8, 8], strides = [1, 1]} : vector<64x8xf32> to vector<8x8xf32>
    %188 = vector.extract_strided_slice %185 {offsets = [16, 0], sizes = [8, 8], strides = [1, 1]} : vector<64x8xf32> to vector<8x8xf32>
    %189 = vector.extract_strided_slice %185 {offsets = [24, 0], sizes = [8, 8], strides = [1, 1]} : vector<64x8xf32> to vector<8x8xf32>
    %190 = vector.extract_strided_slice %185 {offsets = [32, 0], sizes = [8, 8], strides = [1, 1]} : vector<64x8xf32> to vector<8x8xf32>
    %191 = vector.extract_strided_slice %185 {offsets = [40, 0], sizes = [8, 8], strides = [1, 1]} : vector<64x8xf32> to vector<8x8xf32>
    %192 = vector.extract_strided_slice %185 {offsets = [48, 0], sizes = [8, 8], strides = [1, 1]} : vector<64x8xf32> to vector<8x8xf32>
    %193 = vector.extract_strided_slice %185 {offsets = [56, 0], sizes = [8, 8], strides = [1, 1]} : vector<64x8xf32> to vector<8x8xf32>
    %194 = tpu.concatenate %186, %187, %188, %189, %190, %191, %192, %193 in 1 : vector<8x8xf32>, vector<8x8xf32>, vector<8x8xf32>, vector<8x8xf32>, vector<8x8xf32>, vector<8x8xf32>, vector<8x8xf32>, vector<8x8xf32> -> vector<8x64xf32>
    %c1_72 = arith.constant 1 : index
    %c0_73 = arith.constant 0 : index
    %c0_74 = arith.constant 0 : index
    %195 = vector.load %arg7[%c1_72, %c0_73, %c0_74] : memref<2x64x64xf32, #tpu.memory_space<vmem>>, vector<1x64x64xf32>
    %196 = vector.shape_cast %195 : vector<1x64x64xf32> to vector<64x64xf32>
    %cst_75 = arith.constant dense<0.000000e+00> : vector<8x64xf32>
    %197 = tpu.matmul %194, %196, %cst_75 {dimension_numbers = #tpu.dot_dimension_numbers<[1], [0], [0], [1], [0, 0, 1, 1], [], []>} : vector<8x64xf32>, vector<64x64xf32>, vector<8x64xf32> -> vector<8x64xf32>
    %c1_76 = arith.constant 1 : index
    %c0_77 = arith.constant 0 : index
    %c0_78 = arith.constant 0 : index
    %198 = vector.load %arg8[%c1_76, %c0_77, %c0_78] : memref<2x1x64xf32, #tpu.memory_space<vmem>>, vector<1x1x64xf32>
    %199 = vector.shape_cast %198 : vector<1x1x64xf32> to vector<1x64xf32>
    %200 = vector.broadcast %199 : vector<1x64xf32> to vector<8x64xf32>
    %201 = arith.addf %197, %200 : vector<8x64xf32>
    %202 = arith.addf %138, %201 : vector<8x64xf32>
    %c1_79 = arith.constant 1 : index
    %c0_80 = arith.constant 0 : index
    %c0_81 = arith.constant 0 : index
    %203 = vector.load %arg9[%c1_79, %c0_80, %c0_81] : memref<2x1x64xf32, #tpu.memory_space<vmem>>, vector<1x1x64xf32>
    %204 = vector.shape_cast %203 : vector<1x1x64xf32> to vector<1x64xf32>
    %c1_82 = arith.constant 1 : index
    %c0_83 = arith.constant 0 : index
    %c0_84 = arith.constant 0 : index
    %205 = vector.load %arg10[%c1_82, %c0_83, %c0_84] : memref<2x1x64xf32, #tpu.memory_space<vmem>>, vector<1x1x64xf32>
    %206 = vector.shape_cast %205 : vector<1x1x64xf32> to vector<1x64xf32>
    %cst_85 = arith.constant dense<0.000000e+00> : vector<8xf32>
    %207 = vector.multi_reduction <add>, %202, %cst_85 [1] : vector<8x64xf32> to vector<8xf32>
    %208 = vector.shape_cast %207 : vector<8xf32> to vector<8x1xf32>
    %cst_86 = arith.constant 6.400000e+01 : f32
    %209 = vector.broadcast %cst_86 : f32 to vector<8x1xf32>
    %210 = arith.divf %208, %209 : vector<8x1xf32>
    %211 = vector.broadcast %210 : vector<8x1xf32> to vector<8x64xf32>
    %212 = arith.subf %202, %211 : vector<8x64xf32>
    %213 = arith.mulf %212, %212 : vector<8x64xf32>
    %cst_87 = arith.constant dense<0.000000e+00> : vector<8xf32>
    %214 = vector.multi_reduction <add>, %213, %cst_87 [1] : vector<8x64xf32> to vector<8xf32>
    %215 = vector.shape_cast %214 : vector<8xf32> to vector<8x1xf32>
    %cst_88 = arith.constant 6.400000e+01 : f32
    %216 = vector.broadcast %cst_88 : f32 to vector<8x1xf32>
    %217 = arith.divf %215, %216 : vector<8x1xf32>
    %218 = vector.broadcast %210 : vector<8x1xf32> to vector<8x64xf32>
    %219 = arith.subf %202, %218 : vector<8x64xf32>
    %cst_89 = arith.constant 9.99999974E-6 : f32
    %220 = vector.broadcast %cst_89 : f32 to vector<8x1xf32>
    %221 = arith.addf %217, %220 : vector<8x1xf32>
    %222 = math.rsqrt %221 : vector<8x1xf32>
    %223 = vector.broadcast %222 : vector<8x1xf32> to vector<8x64xf32>
    %224 = arith.mulf %219, %223 : vector<8x64xf32>
    %225 = vector.broadcast %204 : vector<1x64xf32> to vector<8x64xf32>
    %226 = arith.mulf %224, %225 : vector<8x64xf32>
    %227 = vector.broadcast %206 : vector<1x64xf32> to vector<8x64xf32>
    %228 = arith.addf %226, %227 : vector<8x64xf32>
    %c1_90 = arith.constant 1 : index
    %c0_91 = arith.constant 0 : index
    %c0_92 = arith.constant 0 : index
    %229 = vector.load %arg13[%c1_90, %c0_91, %c0_92] : memref<2x64x512xf32, #tpu.memory_space<vmem>>, vector<1x64x512xf32>
    %230 = vector.shape_cast %229 : vector<1x64x512xf32> to vector<64x512xf32>
    %cst_93 = arith.constant dense<0.000000e+00> : vector<8x512xf32>
    %231 = tpu.matmul %228, %230, %cst_93 {dimension_numbers = #tpu.dot_dimension_numbers<[1], [0], [0], [1], [0, 0, 1, 1], [], []>} : vector<8x64xf32>, vector<64x512xf32>, vector<8x512xf32> -> vector<8x512xf32>
    %c1_94 = arith.constant 1 : index
    %c0_95 = arith.constant 0 : index
    %c0_96 = arith.constant 0 : index
    %232 = vector.load %arg14[%c1_94, %c0_95, %c0_96] : memref<2x1x512xf32, #tpu.memory_space<vmem>>, vector<1x1x512xf32>
    %233 = vector.shape_cast %232 : vector<1x1x512xf32> to vector<1x512xf32>
    %234 = vector.broadcast %233 : vector<1x512xf32> to vector<8x512xf32>
    %235 = arith.addf %231, %234 : vector<8x512xf32>
    %cst_97 = arith.constant 0.000000e+00 : f32
    %236 = vector.broadcast %cst_97 : f32 to vector<8x512xf32>
    %237 = arith.maximumf %235, %236 : vector<8x512xf32>
    %c1_98 = arith.constant 1 : index
    %c0_99 = arith.constant 0 : index
    %c0_100 = arith.constant 0 : index
    %238 = vector.load %arg15[%c1_98, %c0_99, %c0_100] : memref<2x512x64xf32, #tpu.memory_space<vmem>>, vector<1x512x64xf32>
    %239 = vector.shape_cast %238 : vector<1x512x64xf32> to vector<512x64xf32>
    %cst_101 = arith.constant dense<0.000000e+00> : vector<8x64xf32>
    %240 = tpu.matmul %237, %239, %cst_101 {dimension_numbers = #tpu.dot_dimension_numbers<[1], [0], [0], [1], [0, 0, 1, 1], [], []>} : vector<8x512xf32>, vector<512x64xf32>, vector<8x64xf32> -> vector<8x64xf32>
    %c1_102 = arith.constant 1 : index
    %c0_103 = arith.constant 0 : index
    %c0_104 = arith.constant 0 : index
    %241 = vector.load %arg16[%c1_102, %c0_103, %c0_104] : memref<2x1x64xf32, #tpu.memory_space<vmem>>, vector<1x1x64xf32>
    %242 = vector.shape_cast %241 : vector<1x1x64xf32> to vector<1x64xf32>
    %243 = vector.broadcast %242 : vector<1x64xf32> to vector<8x64xf32>
    %244 = arith.addf %240, %243 : vector<8x64xf32>
    %245 = arith.addf %228, %244 : vector<8x64xf32>
    %c1_105 = arith.constant 1 : index
    %c0_106 = arith.constant 0 : index
    %c0_107 = arith.constant 0 : index
    %246 = vector.load %arg11[%c1_105, %c0_106, %c0_107] : memref<2x1x64xf32, #tpu.memory_space<vmem>>, vector<1x1x64xf32>
    %247 = vector.shape_cast %246 : vector<1x1x64xf32> to vector<1x64xf32>
    %c1_108 = arith.constant 1 : index
    %c0_109 = arith.constant 0 : index
    %c0_110 = arith.constant 0 : index
    %248 = vector.load %arg12[%c1_108, %c0_109, %c0_110] : memref<2x1x64xf32, #tpu.memory_space<vmem>>, vector<1x1x64xf32>
    %249 = vector.shape_cast %248 : vector<1x1x64xf32> to vector<1x64xf32>
    %cst_111 = arith.constant dense<0.000000e+00> : vector<8xf32>
    %250 = vector.multi_reduction <add>, %245, %cst_111 [1] : vector<8x64xf32> to vector<8xf32>
    %251 = vector.shape_cast %250 : vector<8xf32> to vector<8x1xf32>
    %cst_112 = arith.constant 6.400000e+01 : f32
    %252 = vector.broadcast %cst_112 : f32 to vector<8x1xf32>
    %253 = arith.divf %251, %252 : vector<8x1xf32>
    %254 = vector.broadcast %253 : vector<8x1xf32> to vector<8x64xf32>
    %255 = arith.subf %245, %254 : vector<8x64xf32>
    %256 = arith.mulf %255, %255 : vector<8x64xf32>
    %cst_113 = arith.constant dense<0.000000e+00> : vector<8xf32>
    %257 = vector.multi_reduction <add>, %256, %cst_113 [1] : vector<8x64xf32> to vector<8xf32>
    %258 = vector.shape_cast %257 : vector<8xf32> to vector<8x1xf32>
    %cst_114 = arith.constant 6.400000e+01 : f32
    %259 = vector.broadcast %cst_114 : f32 to vector<8x1xf32>
    %260 = arith.divf %258, %259 : vector<8x1xf32>
    %261 = vector.broadcast %253 : vector<8x1xf32> to vector<8x64xf32>
    %262 = arith.subf %245, %261 : vector<8x64xf32>
    %cst_115 = arith.constant 9.99999974E-6 : f32
    %263 = vector.broadcast %cst_115 : f32 to vector<8x1xf32>
    %264 = arith.addf %260, %263 : vector<8x1xf32>
    %265 = math.rsqrt %264 : vector<8x1xf32>
    %266 = vector.broadcast %265 : vector<8x1xf32> to vector<8x64xf32>
    %267 = arith.mulf %262, %266 : vector<8x64xf32>
    %268 = vector.broadcast %247 : vector<1x64xf32> to vector<8x64xf32>
    %269 = arith.mulf %267, %268 : vector<8x64xf32>
    %270 = vector.broadcast %249 : vector<1x64xf32> to vector<8x64xf32>
    %271 = arith.addf %269, %270 : vector<8x64xf32>
    %c0_116 = arith.constant 0 : index
    %c0_117 = arith.constant 0 : index
    %272 = vector.load %arg17[%c0_116, %c0_117] : memref<1x64xf32, #tpu.memory_space<vmem>>, vector<1x64xf32>
    %c0_118 = arith.constant 0 : index
    %c0_119 = arith.constant 0 : index
    %273 = vector.load %arg18[%c0_118, %c0_119] : memref<1x64xf32, #tpu.memory_space<vmem>>, vector<1x64xf32>
    %cst_120 = arith.constant dense<0.000000e+00> : vector<8xf32>
    %274 = vector.multi_reduction <add>, %271, %cst_120 [1] : vector<8x64xf32> to vector<8xf32>
    %275 = vector.shape_cast %274 : vector<8xf32> to vector<8x1xf32>
    %cst_121 = arith.constant 6.400000e+01 : f32
    %276 = vector.broadcast %cst_121 : f32 to vector<8x1xf32>
    %277 = arith.divf %275, %276 : vector<8x1xf32>
    %278 = vector.broadcast %277 : vector<8x1xf32> to vector<8x64xf32>
    %279 = arith.subf %271, %278 : vector<8x64xf32>
    %280 = arith.mulf %279, %279 : vector<8x64xf32>
    %cst_122 = arith.constant dense<0.000000e+00> : vector<8xf32>
    %281 = vector.multi_reduction <add>, %280, %cst_122 [1] : vector<8x64xf32> to vector<8xf32>
    %282 = vector.shape_cast %281 : vector<8xf32> to vector<8x1xf32>
    %cst_123 = arith.constant 6.400000e+01 : f32
    %283 = vector.broadcast %cst_123 : f32 to vector<8x1xf32>
    %284 = arith.divf %282, %283 : vector<8x1xf32>
    %285 = vector.broadcast %277 : vector<8x1xf32> to vector<8x64xf32>
    %286 = arith.subf %271, %285 : vector<8x64xf32>
    %cst_124 = arith.constant 9.99999974E-6 : f32
    %287 = vector.broadcast %cst_124 : f32 to vector<8x1xf32>
    %288 = arith.addf %284, %287 : vector<8x1xf32>
    %289 = math.rsqrt %288 : vector<8x1xf32>
    %290 = vector.broadcast %289 : vector<8x1xf32> to vector<8x64xf32>
    %291 = arith.mulf %286, %290 : vector<8x64xf32>
    %292 = vector.broadcast %272 : vector<1x64xf32> to vector<8x64xf32>
    %293 = arith.mulf %291, %292 : vector<8x64xf32>
    %294 = vector.broadcast %273 : vector<1x64xf32> to vector<8x64xf32>
    %295 = arith.addf %293, %294 : vector<8x64xf32>
    %c0_125 = arith.constant 0 : index
    %c0_126 = arith.constant 0 : index
    %296 = vector.load %arg19[%c0_125, %c0_126] : memref<64x64xf32, #tpu.memory_space<vmem>>, vector<64x64xf32>
    %cst_127 = arith.constant dense<0.000000e+00> : vector<8x64xf32>
    %297 = tpu.matmul %295, %296, %cst_127 {dimension_numbers = #tpu.dot_dimension_numbers<[1], [0], [0], [1], [0, 0, 1, 1], [], []>} : vector<8x64xf32>, vector<64x64xf32>, vector<8x64xf32> -> vector<8x64xf32>
    %c0_128 = arith.constant 0 : index
    %c0_129 = arith.constant 0 : index
    %298 = vector.load %arg20[%c0_128, %c0_129] : memref<1x64xf32, #tpu.memory_space<vmem>>, vector<1x64xf32>
    %299 = vector.broadcast %298 : vector<1x64xf32> to vector<8x64xf32>
    %300 = arith.addf %297, %299 : vector<8x64xf32>
    %c0_130 = arith.constant 0 : index
    %c0_131 = arith.constant 0 : index
    %301 = vector.load %arg21[%c0_130, %c0_131] : memref<8x64xf32, #tpu.memory_space<vmem>>, vector<8x64xf32>
    tpu.vector_store %arg21[%c0_130, %c0_131], %300 {strides = array<i32>} : memref<8x64xf32, #tpu.memory_space<vmem>>, vector<8x64xf32>,
    return
  }
  func.func @transform_0(%arg0: i32) -> (i32, i32) {
    %c0_i32 = arith.constant 0 : i32
    %c0_i32_0 = arith.constant 0 : i32
    %c0_i32_1 = arith.constant 0 : i32
    return %c0_i32, %c0_i32_0 : i32, i32
  }
  func.func @transform_1(%arg0: i32) -> (i32, i32) {
    %c0_i32 = arith.constant 0 : i32
    %c0_i32_0 = arith.constant 0 : i32
    %c0_i32_1 = arith.constant 0 : i32
    return %c0_i32, %c0_i32_0 : i32, i32
  }
  func.func @transform_2(%arg0: i32) -> (i32, i32) {
    %c0_i32 = arith.constant 0 : i32
    %c0_i32_0 = arith.constant 0 : i32
    %c0_i32_1 = arith.constant 0 : i32
    return %c0_i32, %c0_i32_0 : i32, i32
  }
  func.func @transform_3(%arg0: i32) -> (i32, i32) {
    %c0_i32 = arith.constant 0 : i32
    %c0_i32_0 = arith.constant 0 : i32
    %c0_i32_1 = arith.constant 0 : i32
    return %c0_i32, %c0_i32_0 : i32, i32
  }
  func.func @transform_4(%arg0: i32) -> (i32, i32, i32) {
    %c0_i32 = arith.constant 0 : i32
    %c0_i32_0 = arith.constant 0 : i32
    %c0_i32_1 = arith.constant 0 : i32
    %c0_i32_2 = arith.constant 0 : i32
    return %c0_i32, %c0_i32_0, %c0_i32_1 : i32, i32, i32
  }
  func.func @transform_5(%arg0: i32) -> (i32, i32, i32) {
    %c0_i32 = arith.constant 0 : i32
    %c0_i32_0 = arith.constant 0 : i32
    %c0_i32_1 = arith.constant 0 : i32
    %c0_i32_2 = arith.constant 0 : i32
    return %c0_i32, %c0_i32_0, %c0_i32_1 : i32, i32, i32
  }
  func.func @transform_6(%arg0: i32) -> (i32, i32, i32) {
    %c0_i32 = arith.constant 0 : i32
    %c0_i32_0 = arith.constant 0 : i32
    %c0_i32_1 = arith.constant 0 : i32
    %c0_i32_2 = arith.constant 0 : i32
    return %c0_i32, %c0_i32_0, %c0_i32_1 : i32, i32, i32
  }
  func.func @transform_7(%arg0: i32) -> (i32, i32, i32) {
    %c0_i32 = arith.constant 0 : i32
    %c0_i32_0 = arith.constant 0 : i32
    %c0_i32_1 = arith.constant 0 : i32
    %c0_i32_2 = arith.constant 0 : i32
    return %c0_i32, %c0_i32_0, %c0_i32_1 : i32, i32, i32
  }
  func.func @transform_8(%arg0: i32) -> (i32, i32, i32) {
    %c0_i32 = arith.constant 0 : i32
    %c0_i32_0 = arith.constant 0 : i32
    %c0_i32_1 = arith.constant 0 : i32
    %c0_i32_2 = arith.constant 0 : i32
    return %c0_i32, %c0_i32_0, %c0_i32_1 : i32, i32, i32
  }
  func.func @transform_9(%arg0: i32) -> (i32, i32, i32) {
    %c0_i32 = arith.constant 0 : i32
    %c0_i32_0 = arith.constant 0 : i32
    %c0_i32_1 = arith.constant 0 : i32
    %c0_i32_2 = arith.constant 0 : i32
    return %c0_i32, %c0_i32_0, %c0_i32_1 : i32, i32, i32
  }
  func.func @transform_10(%arg0: i32) -> (i32, i32, i32) {
    %c0_i32 = arith.constant 0 : i32
    %c0_i32_0 = arith.constant 0 : i32
    %c0_i32_1 = arith.constant 0 : i32
    %c0_i32_2 = arith.constant 0 : i32
    return %c0_i32, %c0_i32_0, %c0_i32_1 : i32, i32, i32
  }
  func.func @transform_11(%arg0: i32) -> (i32, i32, i32) {
    %c0_i32 = arith.constant 0 : i32
    %c0_i32_0 = arith.constant 0 : i32
    %c0_i32_1 = arith.constant 0 : i32
    %c0_i32_2 = arith.constant 0 : i32
    return %c0_i32, %c0_i32_0, %c0_i32_1 : i32, i32, i32
  }
  func.func @transform_12(%arg0: i32) -> (i32, i32, i32) {
    %c0_i32 = arith.constant 0 : i32
    %c0_i32_0 = arith.constant 0 : i32
    %c0_i32_1 = arith.constant 0 : i32
    %c0_i32_2 = arith.constant 0 : i32
    return %c0_i32, %c0_i32_0, %c0_i32_1 : i32, i32, i32
  }
  func.func @transform_13(%arg0: i32) -> (i32, i32, i32) {
    %c0_i32 = arith.constant 0 : i32
    %c0_i32_0 = arith.constant 0 : i32
    %c0_i32_1 = arith.constant 0 : i32
    %c0_i32_2 = arith.constant 0 : i32
    return %c0_i32, %c0_i32_0, %c0_i32_1 : i32, i32, i32
  }
  func.func @transform_14(%arg0: i32) -> (i32, i32, i32) {
    %c0_i32 = arith.constant 0 : i32
    %c0_i32_0 = arith.constant 0 : i32
    %c0_i32_1 = arith.constant 0 : i32
    %c0_i32_2 = arith.constant 0 : i32
    return %c0_i32, %c0_i32_0, %c0_i32_1 : i32, i32, i32
  }
  func.func @transform_15(%arg0: i32) -> (i32, i32, i32) {
    %c0_i32 = arith.constant 0 : i32
    %c0_i32_0 = arith.constant 0 : i32
    %c0_i32_1 = arith.constant 0 : i32
    %c0_i32_2 = arith.constant 0 : i32
    return %c0_i32, %c0_i32_0, %c0_i32_1 : i32, i32, i32
  }
  func.func @transform_16(%arg0: i32) -> (i32, i32) {
    %c0_i32 = arith.constant 0 : i32
    %c0_i32_0 = arith.constant 0 : i32
    %c0_i32_1 = arith.constant 0 : i32
    return %c0_i32, %c0_i32_0 : i32, i32
  }
  func.func @transform_17(%arg0: i32) -> (i32, i32) {
    %c0_i32 = arith.constant 0 : i32
    %c0_i32_0 = arith.constant 0 : i32
    %c0_i32_1 = arith.constant 0 : i32
    return %c0_i32, %c0_i32_0 : i32, i32
  }
  func.func @transform_18(%arg0: i32) -> (i32, i32) {
    %c0_i32 = arith.constant 0 : i32
    %c0_i32_0 = arith.constant 0 : i32
    %c0_i32_1 = arith.constant 0 : i32
    return %c0_i32, %c0_i32_0 : i32, i32
  }
  func.func @transform_19(%arg0: i32) -> (i32, i32) {
    %c0_i32 = arith.constant 0 : i32
    %c0_i32_0 = arith.constant 0 : i32
    %c0_i32_1 = arith.constant 0 : i32
    return %c0_i32, %c0_i32_0 : i32, i32
  }
  func.func @transform_20(%arg0: i32) -> (i32, i32) {
    %c0_i32 = arith.constant 0 : i32
    %c0_i32_0 = arith.constant 0 : i32
    %c0_i32_1 = arith.constant 0 : i32
    return %c0_i32, %c0_i32_0 : i32, i32
  }
}

</mosaic_0001>

<llo_original>
// kernel: _lambda_.2
$region0: #{_lambda_.2}
  #allocation0 [shape = 'u32[]', space=smem, size = 0x4, offset = 0x4, fixed_abs, tag = 'smem constant byte address 0x4 - core index']
  #allocation1 [shape = 'u32[144,128]{1,0:T(1,128)}', space=vmem, size = 0x12000, scoped, tag = 'internal scratch']
  %s0 = inlined_call_operand.vmem [shape: f32[8,64], index: 0, kind: input, shape index: {}]
  %s1 = inlined_call_operand.vmem [shape: f32[8,64], index: 1, kind: input, shape index: {}]
  %s2 = inlined_call_operand.vmem [shape: f32[64,64], index: 2, kind: input, shape index: {}]
  %s3 = inlined_call_operand.vmem [shape: f32[64,64], index: 3, kind: input, shape index: {}]
  %s4 = inlined_call_operand.vmem [shape: f32[2,64,192], index: 4, kind: input, shape index: {}]
  %s5 = inlined_call_operand.vmem [shape: f32[2,1,192], index: 5, kind: input, shape index: {}]
  %s6 = inlined_call_operand.vmem [shape: f32[2,64,64], index: 6, kind: input, shape index: {}]
  %s7 = inlined_call_operand.vmem [shape: f32[2,1,64], index: 7, kind: input, shape index: {}]
  %s8 = inlined_call_operand.vmem [shape: f32[2,1,64], index: 8, kind: input, shape index: {}]
  %s9 = inlined_call_operand.vmem [shape: f32[2,1,64], index: 9, kind: input, shape index: {}]
  %s10 = inlined_call_operand.vmem [shape: f32[2,1,64], index: 10, kind: input, shape index: {}]
  %s11 = inlined_call_operand.vmem [shape: f32[2,1,64], index: 11, kind: input, shape index: {}]
  %s12 = inlined_call_operand.vmem [shape: f32[2,64,512], index: 12, kind: input, shape index: {}]
  %s13 = inlined_call_operand.vmem [shape: f32[2,1,512], index: 13, kind: input, shape index: {}]
  %s14 = inlined_call_operand.vmem [shape: f32[2,512,64], index: 14, kind: input, shape index: {}]
  %s15 = inlined_call_operand.vmem [shape: f32[2,1,64], index: 15, kind: input, shape index: {}]
  %s16 = inlined_call_operand.vmem [shape: f32[1,64], index: 16, kind: input, shape index: {}]
  %s17 = inlined_call_operand.vmem [shape: f32[1,64], index: 17, kind: input, shape index: {}]
  %s18 = inlined_call_operand.vmem [shape: f32[64,64], index: 18, kind: input, shape index: {}]
  %s19 = inlined_call_operand.vmem [shape: f32[1,64], index: 19, kind: input, shape index: {}]
  %s20 = inlined_call_operand.vmem [shape: f32[8,64], index: 20, kind: output, shape index: {}]
  %s21 = sld [smem:[#allocation0]]
  $region90: #{_lambda_.2} parent=0
    _
  %s23 = ssub.s32 1, %s21
  %s24 = scalar_select 0, %s23, %s21
  // Predicated region
  $region2: #{_lambda_.2} parent=0 // pred_check
    _
  $region3: #{_lambda_.2} parent=0 // pred_check_branch
    %26 = sbr.rel (0) target = $region5
  $region4: #{_lambda_.2} parent=0 // pred_region
    _
  $region5: #{_lambda_.2} parent=0 // pred_fallthru
    _
  // Predicated region
  $region6: #{_lambda_.2} parent=0 // pred_check
    _
  $region7: #{_lambda_.2} parent=0 // pred_check_branch
    %28 = sbr.rel (0) target = $region9
  $region8: #{_lambda_.2} parent=0 // pred_region
    _
  $region9: #{_lambda_.2} parent=0 // pred_fallthru
    _
  // Predicated region
  $region10: #{_lambda_.2} parent=0 // pred_check
    _
  $region11: #{_lambda_.2} parent=0 // pred_check_branch
    %30 = sbr.rel (0) target = $region13
  $region12: #{_lambda_.2} parent=0 // pred_region
    _
  $region13: #{_lambda_.2} parent=0 // pred_fallthru
    _
  // Predicated region
  $region14: #{_lambda_.2} parent=0 // pred_check
    _
  $region15: #{_lambda_.2} parent=0 // pred_check_branch
    %32 = sbr.rel (0) target = $region17
  $region16: #{_lambda_.2} parent=0 // pred_region
    _
  $region17: #{_lambda_.2} parent=0 // pred_fallthru
    _
  // Predicated region
  $region18: #{_lambda_.2} parent=0 // pred_check
    _
  $region19: #{_lambda_.2} parent=0 // pred_check_branch
    %34 = sbr.rel (0) target = $region21
  $region20: #{_lambda_.2} parent=0 // pred_region
    _
  $region21: #{_lambda_.2} parent=0 // pred_fallthru
    _
  // Predicated region
  $region22: #{_lambda_.2} parent=0 // pred_check
    _
  $region23: #{_lambda_.2} parent=0 // pred_check_branch
    %36 = sbr.rel (0) target = $region25
  $region24: #{_lambda_.2} parent=0 // pred_region
    _
  $region25: #{_lambda_.2} parent=0 // pred_fallthru
    _
  // Predicated region
  $region26: #{_lambda_.2} parent=0 // pred_check
    _
  $region27: #{_lambda_.2} parent=0 // pred_check_branch
    %38 = sbr.rel (0) target = $region29
  $region28: #{_lambda_.2} parent=0 // pred_region
    _
  $region29: #{_lambda_.2} parent=0 // pred_fallthru
    _
  // Predicated region
  $region30: #{_lambda_.2} parent=0 // pred_check
    _
  $region31: #{_lambda_.2} parent=0 // pred_check_branch
    %40 = sbr.rel (0) target = $region33
  $region32: #{_lambda_.2} parent=0 // pred_region
    _
  $region33: #{_lambda_.2} parent=0 // pred_fallthru
    _
  // Predicated region
  $region34: #{_lambda_.2} parent=0 // pred_check
    _
  $region35: #{_lambda_.2} parent=0 // pred_check_branch
    %42 = sbr.rel (0) target = $region37
  $region36: #{_lambda_.2} parent=0 // pred_region
    _
  $region37: #{_lambda_.2} parent=0 // pred_fallthru
    _
  // Predicated region
  $region38: #{_lambda_.2} parent=0 // pred_check
    _
  $region39: #{_lambda_.2} parent=0 // pred_check_branch
    %44 = sbr.rel (0) target = $region41
  $region40: #{_lambda_.2} parent=0 // pred_region
    _
  $region41: #{_lambda_.2} parent=0 // pred_fallthru
    _
  // Predicated region
  $region42: #{_lambda_.2} parent=0 // pred_check
    _
  $region43: #{_lambda_.2} parent=0 // pred_check_branch
    %46 = sbr.rel (0) target = $region45
  $region44: #{_lambda_.2} parent=0 // pred_region
    _
  $region45: #{_lambda_.2} parent=0 // pred_fallthru
    _
  // Predicated region
  $region46: #{_lambda_.2} parent=0 // pred_check
    _
  $region47: #{_lambda_.2} parent=0 // pred_check_branch
    %48 = sbr.rel (0) target = $region49
  $region48: #{_lambda_.2} parent=0 // pred_region
    _
  $region49: #{_lambda_.2} parent=0 // pred_fallthru
    _
  // Predicated region
  $region50: #{_lambda_.2} parent=0 // pred_check
    _
  $region51: #{_lambda_.2} parent=0 // pred_check_branch
    %50 = sbr.rel (0) target = $region53
  $region52: #{_lambda_.2} parent=0 // pred_region
    _
  $region53: #{_lambda_.2} parent=0 // pred_fallthru
    _
  // Predicated region
  $region54: #{_lambda_.2} parent=0 // pred_check
    _
  $region55: #{_lambda_.2} parent=0 // pred_check_branch
    %52 = sbr.rel (0) target = $region57
  $region56: #{_lambda_.2} parent=0 // pred_region
    _
  $region57: #{_lambda_.2} parent=0 // pred_fallthru
    _
  // Predicated region
  $region58: #{_lambda_.2} parent=0 // pred_check
    _
  $region59: #{_lambda_.2} parent=0 // pred_check_branch
    %54 = sbr.rel (0) target = $region61
  $region60: #{_lambda_.2} parent=0 // pred_region
    _
  $region61: #{_lambda_.2} parent=0 // pred_fallthru
    _
  // Predicated region
  $region62: #{_lambda_.2} parent=0 // pred_check
    _
  $region63: #{_lambda_.2} parent=0 // pred_check_branch
    %56 = sbr.rel (0) target = $region65
  $region64: #{_lambda_.2} parent=0 // pred_region
    _
  $region65: #{_lambda_.2} parent=0 // pred_fallthru
    _
  // Predicated region
  $region66: #{_lambda_.2} parent=0 // pred_check
    _
  $region67: #{_lambda_.2} parent=0 // pred_check_branch
    %58 = sbr.rel (0) target = $region69
  $region68: #{_lambda_.2} parent=0 // pred_region
    _
  $region69: #{_lambda_.2} parent=0 // pred_fallthru
    _
  // Predicated region
  $region70: #{_lambda_.2} parent=0 // pred_check
    _
  $region71: #{_lambda_.2} parent=0 // pred_check_branch
    %60 = sbr.rel (0) target = $region73
  $region72: #{_lambda_.2} parent=0 // pred_region
    _
  $region73: #{_lambda_.2} parent=0 // pred_fallthru
    _
  // Predicated region
  $region74: #{_lambda_.2} parent=0 // pred_check
    _
  $region75: #{_lambda_.2} parent=0 // pred_check_branch
    %62 = sbr.rel (0) target = $region77
  $region76: #{_lambda_.2} parent=0 // pred_region
    _
  $region77: #{_lambda_.2} parent=0 // pred_fallthru
    _
  // Predicated region
  $region78: #{_lambda_.2} parent=0 // pred_check
    _
  $region79: #{_lambda_.2} parent=0 // pred_check_branch
    %64 = sbr.rel (0) target = $region81
  $region80: #{_lambda_.2} parent=0 // pred_region
    _
  $region81: #{_lambda_.2} parent=0 // pred_fallthru
    _
  %v65 = vld [vmem:[%s0] sm:$0xff]
  %v66 = vld [vmem:[%s3] sm:$0xff]
  %v67 = vld [vmem:[%s3 + $0x8] sm:$0xff]
  %v68 = vld [vmem:[%s3 + $0x10] sm:$0xff]
  %v69 = vld [vmem:[%s3 + $0x18] sm:$0xff]
  %v70 = vld [vmem:[%s3 + $0x20] sm:$0xff]
  %v71 = vld [vmem:[%s3 + $0x28] sm:$0xff]
  %v72 = vld [vmem:[%s3 + $0x30] sm:$0xff]
  %v73 = vld [vmem:[%s3 + $0x38] sm:$0xff]
  %v74 = vld [vmem:[%s1] sm:$0xff]
  %vm75 = vcmask 523264
  %v77 = vsel %vm75, %v65, 0
  %79 = vmatprep.subr.mxu0 0.0
  %80 = vmatpush1.msra.mxu0 %v66
  %81 = vmatprep.subr.mxu0 0.0
  %82 = vmatpush1.msra.mxu0 %v67
  %83 = vmatprep.subr.mxu0 0.0
  %84 = vmatpush1.msra.mxu0 %v68
  %85 = vmatprep.subr.mxu0 0.0
  %86 = vmatpush1.msra.mxu0 %v69
  %87 = vmatprep.subr.mxu0 0.0
  %88 = vmatpush1.msra.mxu0 %v70
  %89 = vmatprep.subr.mxu0 0.0
  %90 = vmatpush1.msra.mxu0 %v71
  %91 = vmatprep.subr.mxu0 0.0
  %92 = vmatpush1.msra.mxu0 %v72
  %93 = vmatprep.subr.mxu0 0.0
  %94 = vmatpush1.msra.mxu0 %v73
  %95 = vmatprep.subr.mxu0 0.0
  %96 = vmatpush1.msra.mxu0 0.0
  %97 = vmatprep.subr.mxu0 0.0
  %98 = vmatpush1.msra.mxu0 0.0
  %99 = vmatprep.subr.mxu0 0.0
  %100 = vmatpush1.msra.mxu0 0.0
  %101 = vmatprep.subr.mxu0 0.0
  %102 = vmatpush1.msra.mxu0 0.0
  %103 = vmatprep.subr.mxu0 0.0
  %104 = vmatpush1.msra.mxu0 0.0
  %105 = vmatprep.subr.mxu0 0.0
  %106 = vmatpush1.msra.mxu0 0.0
  %107 = vmatprep.subr.mxu0 0.0
  %108 = vmatpush1.msra.mxu0 0.0
  %109 = vmatprep.subr.mxu0 0.0
  %110 = vmatpush1.msra.mxu0 0.0
  %111 = vmatprep.subr.mxu0 0.0
  %112 = vmatpush1.msra.mxu0 0.0
  %113 = vmatprep.subr.mxu0 0.0
  %114 = vmatpush1.msra.mxu0 0.0
  %115 = vmatprep.subr.mxu0 0.0
  %116 = vmatpush1.msra.mxu0 0.0
  %117 = vmatprep.subr.mxu0 0.0
  %118 = vmatpush1.msra.mxu0 0.0
  %119 = vmatprep.subr.mxu0 0.0
  %120 = vmatpush1.msra.mxu0 0.0
  %121 = vmatprep.subr.mxu0 0.0
  %122 = vmatpush1.msra.mxu0 0.0
  %123 = vmatprep.subr.mxu0 0.0
  %124 = vmatpush1.msra.mxu0 0.0
  %125 = vmatprep.subr.mxu0 0.0
  %126 = vmatpush1.msra.mxu0 0.0
  %127 = vmatprep.subr.mxu0 0.0
  %128 = vmatpush1.msra.mxu0 0.0
  %129 = vmatprep.subr.mxu0 0.0
  %130 = vmatpush1.msra.mxu0 0.0
  %131 = vmatprep.subr.mxu0 0.0
  %132 = vmatpush1.msra.mxu0 0.0
  %133 = vmatprep.subr.mxu0 0.0
  %134 = vmatpush1.msra.mxu0 0.0
  %135 = vmatprep.subr.mxu0 0.0
  %136 = vmatpush1.msra.mxu0 0.0
  %137 = vmatprep.subr.mxu0 0.0
  %138 = vmatpush1.msra.mxu0 0.0
  %139 = vmatprep.subr.mxu0 0.0
  %140 = vmatpush1.msra.mxu0 0.0
  %141 = vmatprep.subr.mxu0 0.0
  %142 = vmatpush1.msra.mxu0 0.0
  %143 = vmatprep.mubr.f32.mxu0 0.0
  %144 = vmatmul.mubr.f32.gmra.mrb[0].mxu0 %v77
  %v145 = vpop.f32.mrb[0].mxu0
  %v146 = vadd.f32 %v74, %v145
  %v147 = vpop.f32.mrb[0].mxu0
  %148 = vdwg.mxu0
  %v149 = vld [vmem:[%s2] sm:$0xff]
  %v150 = vld [vmem:[%s2 + $0x8] sm:$0xff]
  %v151 = vld [vmem:[%s2 + $0x10] sm:$0xff]
  %v152 = vld [vmem:[%s2 + $0x18] sm:$0xff]
  %v153 = vld [vmem:[%s2 + $0x20] sm:$0xff]
  %v154 = vld [vmem:[%s2 + $0x28] sm:$0xff]
  %v155 = vld [vmem:[%s2 + $0x30] sm:$0xff]
  %v156 = vld [vmem:[%s2 + $0x38] sm:$0xff]
  %v157 = vld [vmem:[%s4] sm:$0xff]
  %v158 = vld [vmem:[%s4 + $0x8] sm:$0xff]
  %v159 = vld [vmem:[%s4 + $0x10] sm:$0xff]
  %v160 = vld [vmem:[%s4 + $0x18] sm:$0xff]
  %v161 = vld [vmem:[%s4 + $0x20] sm:$0xff]
  %v162 = vld [vmem:[%s4 + $0x28] sm:$0xff]
  %v163 = vld [vmem:[%s4 + $0x30] sm:$0xff]
  %v164 = vld [vmem:[%s4 + $0x38] sm:$0xff]
  %v165 = vld [vmem:[%s4 + $0x40] sm:$0xff]
  %v166 = vld [vmem:[%s4 + $0x48] sm:$0xff]
  %v167 = vld [vmem:[%s4 + $0x50] sm:$0xff]
  %v168 = vld [vmem:[%s4 + $0x58] sm:$0xff]
  %v169 = vld [vmem:[%s4 + $0x60] sm:$0xff]
  %v170 = vld [vmem:[%s4 + $0x68] sm:$0xff]
  %v171 = vld [vmem:[%s4 + $0x70] sm:$0xff]
  %v172 = vld [vmem:[%s4 + $0x78] sm:$0xff]
  %v173 = vld [vmem:[%s5] sm:$0x3]
  %v175 = vlaneseq
  %v176 = vshrl.u32 %v175, 7
  %v177 = vsub.s32 0, %v176
  %v178 = vrot.slane %v173, %v177
  %v179 = vlaneseq
  %v180 = vshrl.u32 %v179, 7
  %v181 = vsub.s32 1, %v180
  %v182 = vrot.slane %v173, %v181
  %v186 = vsel %vm75, %v146, 0
  %188 = vmatprep.subr.mxu0 %v158
  %189 = vmatpush1.msra.mxu0 %v157
  %190 = vmatprep.subr.mxu0 %v160
  %191 = vmatpush1.msra.mxu0 %v159
  %192 = vmatprep.subr.mxu0 %v162
  %193 = vmatpush1.msra.mxu0 %v161
  %194 = vmatprep.subr.mxu0 %v164
  %195 = vmatpush1.msra.mxu0 %v163
  %196 = vmatprep.subr.mxu0 %v166
  %197 = vmatpush1.msra.mxu0 %v165
  %198 = vmatprep.subr.mxu0 %v168
  %199 = vmatpush1.msra.mxu0 %v167
  %200 = vmatprep.subr.mxu0 %v170
  %201 = vmatpush1.msra.mxu0 %v169
  %202 = vmatprep.subr.mxu0 %v172
  %203 = vmatpush1.msra.mxu0 %v171
  %204 = vmatprep.subr.mxu0 0.0
  %205 = vmatpush1.msra.mxu0 0.0
  %206 = vmatprep.subr.mxu0 0.0
  %207 = vmatpush1.msra.mxu0 0.0
  %208 = vmatprep.subr.mxu0 0.0
  %209 = vmatpush1.msra.mxu0 0.0
  %210 = vmatprep.subr.mxu0 0.0
  %211 = vmatpush1.msra.mxu0 0.0
  %212 = vmatprep.subr.mxu0 0.0
  %213 = vmatpush1.msra.mxu0 0.0
  %214 = vmatprep.subr.mxu0 0.0
  %215 = vmatpush1.msra.mxu0 0.0
  %216 = vmatprep.subr.mxu0 0.0
  %217 = vmatpush1.msra.mxu0 0.0
  %218 = vmatprep.subr.mxu0 0.0
  %219 = vmatpush1.msra.mxu0 0.0
  %220 = vmatprep.subr.mxu0 0.0
  %221 = vmatpush1.msra.mxu0 0.0
  %222 = vmatprep.subr.mxu0 0.0
  %223 = vmatpush1.msra.mxu0 0.0
  %224 = vmatprep.subr.mxu0 0.0
  %225 = vmatpush1.msra.mxu0 0.0
  %226 = vmatprep.subr.mxu0 0.0
  %227 = vmatpush1.msra.mxu0 0.0
  %228 = vmatprep.subr.mxu0 0.0
  %229 = vmatpush1.msra.mxu0 0.0
  %230 = vmatprep.subr.mxu0 0.0
  %231 = vmatpush1.msra.mxu0 0.0
  %232 = vmatprep.subr.mxu0 0.0
  %233 = vmatpush1.msra.mxu0 0.0
  %234 = vmatprep.subr.mxu0 0.0
  %235 = vmatpush1.msra.mxu0 0.0
  %236 = vmatprep.subr.mxu0 0.0
  %237 = vmatpush1.msra.mxu0 0.0
  %238 = vmatprep.subr.mxu0 0.0
  %239 = vmatpush1.msra.mxu0 0.0
  %240 = vmatprep.subr.mxu0 0.0
  %241 = vmatpush1.msra.mxu0 0.0
  %242 = vmatprep.subr.mxu0 0.0
  %243 = vmatpush1.msra.mxu0 0.0
  %244 = vmatprep.subr.mxu0 0.0
  %245 = vmatpush1.msra.mxu0 0.0
  %246 = vmatprep.subr.mxu0 0.0
  %247 = vmatpush1.msra.mxu0 0.0
  %248 = vmatprep.subr.mxu0 0.0
  %249 = vmatpush1.msra.mxu0 0.0
  %250 = vmatprep.subr.mxu0 0.0
  %251 = vmatpush1.msra.mxu0 0.0
  %252 = vmatprep.mubr.f32.mxu0 0.0
  %253 = vmatmul.mubr.f32.gmra.mrb[0].mxu0 %v186
  %v254 = vpop.f32.mrb[0].mxu0
  %v255 = vadd.f32 %v178, %v254
  %v256 = vpop.f32.mrb[0].mxu0
  %v257 = vadd.f32 %v182, %v256
  %258 = vdwg.mxu0
  %260 = vrot.lane.b32.xlu0 %v255, 120
  %v261 = vpop.permute.xlu0 %260
  %262 = vrot.lane.b32.xlu0 %v255, 112
  %v263 = vpop.permute.xlu0 %262
  %264 = vrot.lane.b32.xlu0 %v255, 104
  %v265 = vpop.permute.xlu0 %264
  %266 = vrot.lane.b32.xlu0 %v255, 96
  %v267 = vpop.permute.xlu0 %266
  %268 = vrot.lane.b32.xlu0 %v255, 88
  %v269 = vpop.permute.xlu0 %268
  %270 = vrot.lane.b32.xlu0 %v255, 80
  %v271 = vpop.permute.xlu0 %270
  %272 = vrot.lane.b32.xlu0 %v255, 72
  %v273 = vpop.permute.xlu0 %272
  %275 = vrot.lane.b32.xlu0 %v257, 120
  %v276 = vpop.permute.xlu0 %275
  %278 = vrot.lane.b32.xlu0 %v257, 112
  %v279 = vpop.permute.xlu0 %278
  %281 = vrot.lane.b32.xlu0 %v257, 104
  %v282 = vpop.permute.xlu0 %281
  %284 = vrot.lane.b32.xlu0 %v257, 96
  %v285 = vpop.permute.xlu0 %284
  %287 = vrot.lane.b32.xlu0 %v257, 88
  %v288 = vpop.permute.xlu0 %287
  %290 = vrot.lane.b32.xlu0 %v257, 80
  %v291 = vpop.permute.xlu0 %290
  %293 = vrot.lane.b32.xlu0 %v257, 72
  %v294 = vpop.permute.xlu0 %293
  %296 = vrot.lane.b32.xlu0 %v255, 64
  %v297 = vpop.permute.xlu0 %296
  %298 = vrot.lane.b32.xlu0 %v261, 64
  %v299 = vpop.permute.xlu0 %298
  %300 = vrot.lane.b32.xlu0 %v263, 64
  %v301 = vpop.permute.xlu0 %300
  %302 = vrot.lane.b32.xlu0 %v265, 64
  %v303 = vpop.permute.xlu0 %302
  %304 = vrot.lane.b32.xlu0 %v267, 64
  %v305 = vpop.permute.xlu0 %304
  %306 = vrot.lane.b32.xlu0 %v269, 64
  %v307 = vpop.permute.xlu0 %306
  %308 = vrot.lane.b32.xlu0 %v271, 64
  %v309 = vpop.permute.xlu0 %308
  %310 = vrot.lane.b32.xlu0 %v273, 64
  %v311 = vpop.permute.xlu0 %310
  %vm312 = vcmask 64512
  %v313 = vsel %vm312, %v255, 0
  %v315 = vsel %vm312, %v261, 0
  %v317 = vsel %vm312, %v263, 0
  %v319 = vsel %vm312, %v265, 0
  %v321 = vsel %vm312, %v267, 0
  %v323 = vsel %vm312, %v269, 0
  %v325 = vsel %vm312, %v271, 0
  %v327 = vsel %vm312, %v273, 0
  %v329 = vsel %vm312, %v297, 0
  %v331 = vsel %vm312, %v299, 0
  %v333 = vsel %vm312, %v301, 0
  %v335 = vsel %vm312, %v303, 0
  %v337 = vsel %vm312, %v305, 0
  %v339 = vsel %vm312, %v307, 0
  %v341 = vsel %vm312, %v309, 0
  %v343 = vsel %vm312, %v311, 0
  %345 = vmatprep.subr.mxu0 0.0
  %346 = vmatpush1.xpose.msra.mxu0 %v329
  %347 = vmatprep.subr.mxu0 0.0
  %348 = vmatpush1.xpose.msra.mxu0 %v331
  %349 = vmatprep.subr.mxu0 0.0
  %350 = vmatpush1.xpose.msra.mxu0 %v333
  %351 = vmatprep.subr.mxu0 0.0
  %352 = vmatpush1.xpose.msra.mxu0 %v335
  %353 = vmatprep.subr.mxu0 0.0
  %354 = vmatpush1.xpose.msra.mxu0 %v337
  %355 = vmatprep.subr.mxu0 0.0
  %356 = vmatpush1.xpose.msra.mxu0 %v339
  %357 = vmatprep.subr.mxu0 0.0
  %358 = vmatpush1.xpose.msra.mxu0 %v341
  %359 = vmatprep.subr.mxu0 0.0
  %360 = vmatpush1.xpose.msra.mxu0 %v343
  %361 = vmatprep.subr.mxu0 0.0
  %362 = vmatpush1.xpose.msra.mxu0 0.0
  %363 = vmatprep.subr.mxu0 0.0
  %364 = vmatpush1.xpose.msra.mxu0 0.0
  %365 = vmatprep.subr.mxu0 0.0
  %366 = vmatpush1.xpose.msra.mxu0 0.0
  %367 = vmatprep.subr.mxu0 0.0
  %368 = vmatpush1.xpose.msra.mxu0 0.0
  %369 = vmatprep.subr.mxu0 0.0
  %370 = vmatpush1.xpose.msra.mxu0 0.0
  %371 = vmatprep.subr.mxu0 0.0
  %372 = vmatpush1.xpose.msra.mxu0 0.0
  %373 = vmatprep.subr.mxu0 0.0
  %374 = vmatpush1.xpose.msra.mxu0 0.0
  %375 = vmatprep.subr.mxu0 0.0
  %376 = vmatpush1.xpose.msra.mxu0 0.0
  %377 = vmatprep.subr.mxu0 0.0
  %378 = vmatpush1.xpose.msra.mxu0 0.0
  %379 = vmatprep.subr.mxu0 0.0
  %380 = vmatpush1.xpose.msra.mxu0 0.0
  %381 = vmatprep.subr.mxu0 0.0
  %382 = vmatpush1.xpose.msra.mxu0 0.0
  %383 = vmatprep.subr.mxu0 0.0
  %384 = vmatpush1.xpose.msra.mxu0 0.0
  %385 = vmatprep.subr.mxu0 0.0
  %386 = vmatpush1.xpose.msra.mxu0 0.0
  %387 = vmatprep.subr.mxu0 0.0
  %388 = vmatpush1.xpose.msra.mxu0 0.0
  %389 = vmatprep.subr.mxu0 0.0
  %390 = vmatpush1.xpose.msra.mxu0 0.0
  %391 = vmatprep.subr.mxu0 0.0
  %392 = vmatpush1.xpose.msra.mxu0 0.0
  %393 = vmatprep.subr.mxu0 0.0
  %394 = vmatpush1.xpose.msra.mxu0 0.0
  %395 = vmatprep.subr.mxu0 0.0
  %396 = vmatpush1.xpose.msra.mxu0 0.0
  %397 = vmatprep.subr.mxu0 0.0
  %398 = vmatpush1.xpose.msra.mxu0 0.0
  %399 = vmatprep.subr.mxu0 0.0
  %400 = vmatpush1.xpose.msra.mxu0 0.0
  %401 = vmatprep.subr.mxu0 0.0
  %402 = vmatpush1.xpose.msra.mxu0 0.0
  %403 = vmatprep.subr.mxu0 0.0
  %404 = vmatpush1.xpose.msra.mxu0 0.0
  %405 = vmatprep.subr.mxu0 0.0
  %406 = vmatpush1.xpose.msra.mxu0 0.0
  %407 = vmatprep.subr.mxu0 0.0
  %408 = vmatpush1.xpose.msra.mxu0 0.0
  %409 = vmatprep.mubr.f32.mxu0 0.0
  %410 = vmatmul.mubr.f32.gmra.mrb[0].mxu0 %v313
  %v411 = vpop.f32.mrb[0].mxu0
  %v412 = vadd.f32 %v149, %v411
  %v413 = vpop.f32.mrb[0].mxu0
  %414 = vmatprep.mubr.f32.mxu0 0.0
  %415 = vmatmul.mubr.f32.gmra.mrb[0].mxu0 %v315
  %v416 = vpop.f32.mrb[0].mxu0
  %v417 = vadd.f32 %v150, %v416
  %v418 = vpop.f32.mrb[0].mxu0
  %419 = vmatprep.mubr.f32.mxu0 0.0
  %420 = vmatmul.mubr.f32.gmra.mrb[0].mxu0 %v317
  %v421 = vpop.f32.mrb[0].mxu0
  %v422 = vadd.f32 %v151, %v421
  %v423 = vpop.f32.mrb[0].mxu0
  %424 = vmatprep.mubr.f32.mxu0 0.0
  %425 = vmatmul.mubr.f32.gmra.mrb[0].mxu0 %v319
  %v426 = vpop.f32.mrb[0].mxu0
  %v427 = vadd.f32 %v152, %v426
  %v428 = vpop.f32.mrb[0].mxu0
  %429 = vmatprep.mubr.f32.mxu0 0.0
  %430 = vmatmul.mubr.f32.gmra.mrb[0].mxu0 %v321
  %v431 = vpop.f32.mrb[0].mxu0
  %v432 = vadd.f32 %v153, %v431
  %v433 = vpop.f32.mrb[0].mxu0
  %434 = vmatprep.mubr.f32.mxu0 0.0
  %435 = vmatmul.mubr.f32.gmra.mrb[0].mxu0 %v323
  %v436 = vpop.f32.mrb[0].mxu0
  %v437 = vadd.f32 %v154, %v436
  %v438 = vpop.f32.mrb[0].mxu0
  %439 = vmatprep.mubr.f32.mxu0 0.0
  %440 = vmatmul.mubr.f32.gmra.mrb[0].mxu0 %v325
  %v441 = vpop.f32.mrb[0].mxu0
  %v442 = vadd.f32 %v155, %v441
  %v443 = vpop.f32.mrb[0].mxu0
  %444 = vmatprep.mubr.f32.mxu0 0.0
  %445 = vmatmul.mubr.f32.gmra.mrb[0].mxu0 %v327
  %v446 = vpop.f32.mrb[0].mxu0
  %v447 = vadd.f32 %v156, %v446
  %v448 = vpop.f32.mrb[0].mxu0
  %449 = vdwg.mxu0
  %v450 = vsel %vm75, %v412, -inf
  %451 = vmax.xlane.f32.xlu0 %v450
  %v452 = vpop.xlane.xlu0 %451
  %v453 = vsel %vm75, %v417, -inf
  %454 = vmax.xlane.f32.xlu0 %v453
  %v455 = vpop.xlane.xlu0 %454
  %v456 = vsel %vm75, %v422, -inf
  %457 = vmax.xlane.f32.xlu0 %v456
  %v458 = vpop.xlane.xlu0 %457
  %v459 = vsel %vm75, %v427, -inf
  %460 = vmax.xlane.f32.xlu0 %v459
  %v461 = vpop.xlane.xlu0 %460
  %v462 = vsel %vm75, %v432, -inf
  %463 = vmax.xlane.f32.xlu0 %v462
  %v464 = vpop.xlane.xlu0 %463
  %v465 = vsel %vm75, %v437, -inf
  %466 = vmax.xlane.f32.xlu0 %v465
  %v467 = vpop.xlane.xlu0 %466
  %v468 = vsel %vm75, %v442, -inf
  %469 = vmax.xlane.f32.xlu0 %v468
  %v470 = vpop.xlane.xlu0 %469
  %v471 = vsel %vm75, %v447, -inf
  %472 = vmax.xlane.f32.xlu0 %v471
  %v473 = vpop.xlane.xlu0 %472
  %v474 = vsub.f32 %v412, %v452
  %v475 = vsub.f32 %v417, %v455
  %v476 = vsub.f32 %v422, %v458
  %v477 = vsub.f32 %v427, %v461
  %v478 = vsub.f32 %v432, %v464
  %v479 = vsub.f32 %v437, %v467
  %v480 = vsub.f32 %v442, %v470
  %v481 = vsub.f32 %v447, %v473
  %v482 = vmul.f32 %v474, 1.442695
  %v483 = vpow.pop %v482
  %v484 = vmul.f32 %v475, 1.442695
  %v485 = vpow.pop %v484
  %v486 = vmul.f32 %v476, 1.442695
  %v487 = vpow.pop %v486
  %v488 = vmul.f32 %v477, 1.442695
  %v489 = vpow.pop %v488
  %v490 = vmul.f32 %v478, 1.442695
  %v491 = vpow.pop %v490
  %v492 = vmul.f32 %v479, 1.442695
  %v493 = vpow.pop %v492
  %v494 = vmul.f32 %v480, 1.442695
  %v495 = vpow.pop %v494
  %v496 = vmul.f32 %v481, 1.442695
  %v497 = vpow.pop %v496
  %v498 = vsel %vm75, %v483, 0.0
  %499 = vadd.xlane.f32.xlu0 %v498
  %v500 = vpop.xlane.xlu0 %499
  %v501 = vsel %vm75, %v485, 0.0
  %502 = vadd.xlane.f32.xlu0 %v501
  %v503 = vpop.xlane.xlu0 %502
  %v504 = vsel %vm75, %v487, 0.0
  %505 = vadd.xlane.f32.xlu0 %v504
  %v506 = vpop.xlane.xlu0 %505
  %v507 = vsel %vm75, %v489, 0.0
  %508 = vadd.xlane.f32.xlu0 %v507
  %v509 = vpop.xlane.xlu0 %508
  %v510 = vsel %vm75, %v491, 0.0
  %511 = vadd.xlane.f32.xlu0 %v510
  %v512 = vpop.xlane.xlu0 %511
  %v513 = vsel %vm75, %v493, 0.0
  %514 = vadd.xlane.f32.xlu0 %v513
  %v515 = vpop.xlane.xlu0 %514
  %v516 = vsel %vm75, %v495, 0.0
  %517 = vadd.xlane.f32.xlu0 %v516
  %v518 = vpop.xlane.xlu0 %517
  %v519 = vsel %vm75, %v497, 0.0
  %520 = vadd.xlane.f32.xlu0 %v519
  %v521 = vpop.xlane.xlu0 %520
  %v522 = vrcp.pop %v500
  %v523 = vrcp.pop %v503
  %v524 = vrcp.pop %v506
  %v525 = vrcp.pop %v509
  %v526 = vrcp.pop %v512
  %v527 = vrcp.pop %v515
  %v528 = vrcp.pop %v518
  %v529 = vrcp.pop %v521
  %v530 = vmul.f32 %v483, %v522
  %v531 = vmul.f32 %v485, %v523
  %v532 = vmul.f32 %v487, %v524
  %v533 = vmul.f32 %v489, %v525
  %v534 = vmul.f32 %v491, %v526
  %v535 = vmul.f32 %v493, %v527
  %v536 = vmul.f32 %v495, %v528
  %v537 = vmul.f32 %v497, %v529
  %v539 = vsel %vm75, %v530, 0
  %v542 = vsel %vm75, %v531, 0
  %v545 = vsel %vm75, %v532, 0
  %v548 = vsel %vm75, %v533, 0
  %v551 = vsel %vm75, %v534, 0
  %v554 = vsel %vm75, %v535, 0
  %v557 = vsel %vm75, %v536, 0
  %v560 = vsel %vm75, %v537, 0
  %562 = vmatprep.subr.mxu0 0.0
  %563 = vmatpush1.msra.mxu0 %v257
  %564 = vmatprep.subr.mxu0 0.0
  %565 = vmatpush1.msra.mxu0 %v276
  %566 = vmatprep.subr.mxu0 0.0
  %567 = vmatpush1.msra.mxu0 %v279
  %568 = vmatprep.subr.mxu0 0.0
  %569 = vmatpush1.msra.mxu0 %v282
  %570 = vmatprep.subr.mxu0 0.0
  %571 = vmatpush1.msra.mxu0 %v285
  %572 = vmatprep.subr.mxu0 0.0
  %573 = vmatpush1.msra.mxu0 %v288
  %574 = vmatprep.subr.mxu0 0.0
  %575 = vmatpush1.msra.mxu0 %v291
  %576 = vmatprep.subr.mxu0 0.0
  %577 = vmatpush1.msra.mxu0 %v294
  %578 = vmatprep.subr.mxu0 0.0
  %579 = vmatpush1.msra.mxu0 0.0
  %580 = vmatprep.subr.mxu0 0.0
  %581 = vmatpush1.msra.mxu0 0.0
  %582 = vmatprep.subr.mxu0 0.0
  %583 = vmatpush1.msra.mxu0 0.0
  %584 = vmatprep.subr.mxu0 0.0
  %585 = vmatpush1.msra.mxu0 0.0
  %586 = vmatprep.subr.mxu0 0.0
  %587 = vmatpush1.msra.mxu0 0.0
  %588 = vmatprep.subr.mxu0 0.0
  %589 = vmatpush1.msra.mxu0 0.0
  %590 = vmatprep.subr.mxu0 0.0
  %591 = vmatpush1.msra.mxu0 0.0
  %592 = vmatprep.subr.mxu0 0.0
  %593 = vmatpush1.msra.mxu0 0.0
  %594 = vmatprep.subr.mxu0 0.0
  %595 = vmatpush1.msra.mxu0 0.0
  %596 = vmatprep.subr.mxu0 0.0
  %597 = vmatpush1.msra.mxu0 0.0
  %598 = vmatprep.subr.mxu0 0.0
  %599 = vmatpush1.msra.mxu0 0.0
  %600 = vmatprep.subr.mxu0 0.0
  %601 = vmatpush1.msra.mxu0 0.0
  %602 = vmatprep.subr.mxu0 0.0
  %603 = vmatpush1.msra.mxu0 0.0
  %604 = vmatprep.subr.mxu0 0.0
  %605 = vmatpush1.msra.mxu0 0.0
  %606 = vmatprep.subr.mxu0 0.0
  %607 = vmatpush1.msra.mxu0 0.0
  %608 = vmatprep.subr.mxu0 0.0
  %609 = vmatpush1.msra.mxu0 0.0
  %610 = vmatprep.subr.mxu0 0.0
  %611 = vmatpush1.msra.mxu0 0.0
  %612 = vmatprep.subr.mxu0 0.0
  %613 = vmatpush1.msra.mxu0 0.0
  %614 = vmatprep.subr.mxu0 0.0
  %615 = vmatpush1.msra.mxu0 0.0
  %616 = vmatprep.subr.mxu0 0.0
  %617 = vmatpush1.msra.mxu0 0.0
  %618 = vmatprep.subr.mxu0 0.0
  %619 = vmatpush1.msra.mxu0 0.0
  %620 = vmatprep.subr.mxu0 0.0
  %621 = vmatpush1.msra.mxu0 0.0
  %622 = vmatprep.subr.mxu0 0.0
  %623 = vmatpush1.msra.mxu0 0.0
  %624 = vmatprep.subr.mxu0 0.0
  %625 = vmatpush1.msra.mxu0 0.0
  %626 = vmatprep.mubr.f32.mxu0 0.0
  %627 = vmatmul.mubr.f32.gmra.mrb[0].mxu0 %v539
  %v628 = vpop.f32.mrb[0].mxu0
  %v629 = vadd.f32 0.0, %v628
  %v630 = vpop.f32.mrb[0].mxu0
  %631 = vmatprep.mubr.f32.mxu0 0.0
  %632 = vmatmul.mubr.f32.gmra.mrb[0].mxu0 %v542
  %v633 = vpop.f32.mrb[0].mxu0
  %v634 = vadd.f32 0.0, %v633
  %v635 = vpop.f32.mrb[0].mxu0
  %636 = vmatprep.mubr.f32.mxu0 0.0
  %637 = vmatmul.mubr.f32.gmra.mrb[0].mxu0 %v545
  %v638 = vpop.f32.mrb[0].mxu0
  %v639 = vadd.f32 0.0, %v638
  %v640 = vpop.f32.mrb[0].mxu0
  %641 = vmatprep.mubr.f32.mxu0 0.0
  %642 = vmatmul.mubr.f32.gmra.mrb[0].mxu0 %v548
  %v643 = vpop.f32.mrb[0].mxu0
  %v644 = vadd.f32 0.0, %v643
  %v645 = vpop.f32.mrb[0].mxu0
  %646 = vmatprep.mubr.f32.mxu0 0.0
  %647 = vmatmul.mubr.f32.gmra.mrb[0].mxu0 %v551
  %v648 = vpop.f32.mrb[0].mxu0
  %v649 = vadd.f32 0.0, %v648
  %v650 = vpop.f32.mrb[0].mxu0
  %651 = vmatprep.mubr.f32.mxu0 0.0
  %652 = vmatmul.mubr.f32.gmra.mrb[0].mxu0 %v554
  %v653 = vpop.f32.mrb[0].mxu0
  %v654 = vadd.f32 0.0, %v653
  %v655 = vpop.f32.mrb[0].mxu0
  %656 = vmatprep.mubr.f32.mxu0 0.0
  %657 = vmatmul.mubr.f32.gmra.mrb[0].mxu0 %v557
  %v658 = vpop.f32.mrb[0].mxu0
  %v659 = vadd.f32 0.0, %v658
  %v660 = vpop.f32.mrb[0].mxu0
  %661 = vmatprep.mubr.f32.mxu0 0.0
  %662 = vmatmul.mubr.f32.gmra.mrb[0].mxu0 %v560
  %v663 = vpop.f32.mrb[0].mxu0
  %v664 = vadd.f32 0.0, %v663
  %v665 = vpop.f32.mrb[0].mxu0
  %666 = vdwg.mxu0
  %668 = vrot.lane.b32.xlu0 %v634, 8
  %v669 = vpop.permute.xlu0 %668
  %672 = vrot.lane.b32.xlu0 %v639, 16
  %v673 = vpop.permute.xlu0 %672
  %676 = vrot.lane.b32.xlu0 %v644, 24
  %v677 = vpop.permute.xlu0 %676
  %680 = vrot.lane.b32.xlu0 %v649, 32
  %v681 = vpop.permute.xlu0 %680
  %684 = vrot.lane.b32.xlu0 %v654, 40
  %v685 = vpop.permute.xlu0 %684
  %688 = vrot.lane.b32.xlu0 %v659, 48
  %v689 = vpop.permute.xlu0 %688
  %692 = vrot.lane.b32.xlu0 %v664, 56
  %v693 = vpop.permute.xlu0 %692
  %v695 = vsel %vm312, %v629, %v669
  %vm696 = vcmask 130048
  %v697 = vsel %vm696, %v695, %v673
  %vm698 = vcmask 195584
  %v699 = vsel %vm698, %v697, %v677
  %vm700 = vcmask 261120
  %v701 = vsel %vm700, %v699, %v681
  %vm702 = vcmask 326656
  %v703 = vsel %vm702, %v701, %v685
  %vm704 = vcmask 392192
  %v705 = vsel %vm704, %v703, %v689
  %vm706 = vcmask 457728
  %v707 = vsel %vm706, %v705, %v693
  %v708 = vld [vmem:[%s6] sm:$0xff]
  %v709 = vld [vmem:[%s6 + $0x8] sm:$0xff]
  %v710 = vld [vmem:[%s6 + $0x10] sm:$0xff]
  %v711 = vld [vmem:[%s6 + $0x18] sm:$0xff]
  %v712 = vld [vmem:[%s6 + $0x20] sm:$0xff]
  %v713 = vld [vmem:[%s6 + $0x28] sm:$0xff]
  %v714 = vld [vmem:[%s6 + $0x30] sm:$0xff]
  %v715 = vld [vmem:[%s6 + $0x38] sm:$0xff]
  %v716 = vld [vmem:[%s7] sm:$0x1]
  %v718 = vlaneseq
  %v719 = vshrl.u32 %v718, 7
  %v720 = vsub.s32 0, %v719
  %v721 = vrot.slane %v716, %v720
  %v724 = vsel %vm75, %v707, 0
  %726 = vmatprep.subr.mxu0 0.0
  %727 = vmatpush1.msra.mxu0 %v708
  %728 = vmatprep.subr.mxu0 0.0
  %729 = vmatpush1.msra.mxu0 %v709
  %730 = vmatprep.subr.mxu0 0.0
  %731 = vmatpush1.msra.mxu0 %v710
  %732 = vmatprep.subr.mxu0 0.0
  %733 = vmatpush1.msra.mxu0 %v711
  %734 = vmatprep.subr.mxu0 0.0
  %735 = vmatpush1.msra.mxu0 %v712
  %736 = vmatprep.subr.mxu0 0.0
  %737 = vmatpush1.msra.mxu0 %v713
  %738 = vmatprep.subr.mxu0 0.0
  %739 = vmatpush1.msra.mxu0 %v714
  %740 = vmatprep.subr.mxu0 0.0
  %741 = vmatpush1.msra.mxu0 %v715
  %742 = vmatprep.subr.mxu0 0.0
  %743 = vmatpush1.msra.mxu0 0.0
  %744 = vmatprep.subr.mxu0 0.0
  %745 = vmatpush1.msra.mxu0 0.0
  %746 = vmatprep.subr.mxu0 0.0
  %747 = vmatpush1.msra.mxu0 0.0
  %748 = vmatprep.subr.mxu0 0.0
  %749 = vmatpush1.msra.mxu0 0.0
  %750 = vmatprep.subr.mxu0 0.0
  %751 = vmatpush1.msra.mxu0 0.0
  %752 = vmatprep.subr.mxu0 0.0
  %753 = vmatpush1.msra.mxu0 0.0
  %754 = vmatprep.subr.mxu0 0.0
  %755 = vmatpush1.msra.mxu0 0.0
  %756 = vmatprep.subr.mxu0 0.0
  %757 = vmatpush1.msra.mxu0 0.0
  %758 = vmatprep.subr.mxu0 0.0
  %759 = vmatpush1.msra.mxu0 0.0
  %760 = vmatprep.subr.mxu0 0.0
  %761 = vmatpush1.msra.mxu0 0.0
  %762 = vmatprep.subr.mxu0 0.0
  %763 = vmatpush1.msra.mxu0 0.0
  %764 = vmatprep.subr.mxu0 0.0
  %765 = vmatpush1.msra.mxu0 0.0
  %766 = vmatprep.subr.mxu0 0.0
  %767 = vmatpush1.msra.mxu0 0.0
  %768 = vmatprep.subr.mxu0 0.0
  %769 = vmatpush1.msra.mxu0 0.0
  %770 = vmatprep.subr.mxu0 0.0
  %771 = vmatpush1.msra.mxu0 0.0
  %772 = vmatprep.subr.mxu0 0.0
  %773 = vmatpush1.msra.mxu0 0.0
  %774 = vmatprep.subr.mxu0 0.0
  %775 = vmatpush1.msra.mxu0 0.0
  %776 = vmatprep.subr.mxu0 0.0
  %777 = vmatpush1.msra.mxu0 0.0
  %778 = vmatprep.subr.mxu0 0.0
  %779 = vmatpush1.msra.mxu0 0.0
  %780 = vmatprep.subr.mxu0 0.0
  %781 = vmatpush1.msra.mxu0 0.0
  %782 = vmatprep.subr.mxu0 0.0
  %783 = vmatpush1.msra.mxu0 0.0
  %784 = vmatprep.subr.mxu0 0.0
  %785 = vmatpush1.msra.mxu0 0.0
  %786 = vmatprep.subr.mxu0 0.0
  %787 = vmatpush1.msra.mxu0 0.0
  %788 = vmatprep.subr.mxu0 0.0
  %789 = vmatpush1.msra.mxu0 0.0
  %790 = vmatprep.mubr.f32.mxu0 0.0
  %791 = vmatmul.mubr.f32.gmra.mrb[0].mxu0 %v724
  %v792 = vpop.f32.mrb[0].mxu0
  %v793 = vadd.f32 %v721, %v792
  %v794 = vpop.f32.mrb[0].mxu0
  %795 = vdwg.mxu0
  %v796 = vadd.f32 %v146, %v793
  %v797 = vld [vmem:[%s8] sm:$0x1]
  %v798 = vld [vmem:[%s9] sm:$0x1]
  %v799 = vsel %vm75, %v796, 0.0
  %800 = vadd.xlane.f32.xlu0 %v799
  %v801 = vpop.xlane.xlu0 %800
  %v802 = vrcp.pop 64.0
  %v803 = vmul.f32 %v801, %v802
  %v804 = vsub.f32 %v796, %v803
  %v805 = vmul.f32 %v804, %v804
  %v806 = vsel %vm75, %v805, 0.0
  %807 = vadd.xlane.f32.xlu0 %v806
  %v808 = vpop.xlane.xlu0 %807
  %v809 = vmul.f32 %v808, %v802
  %v810 = vadd.f32 %v809, 1e-05
  %v811 = vrsqrt.pop %v810
  %v812 = vmul.f32 %v804, %v811
  %v814 = vlaneseq
  %v815 = vshrl.u32 %v814, 7
  %v816 = vsub.s32 0, %v815
  %v817 = vrot.slane %v797, %v816
  %v819 = vmul.f32 %v812, %v817
  %v821 = vlaneseq
  %v822 = vshrl.u32 %v821, 7
  %v823 = vsub.s32 0, %v822
  %v824 = vrot.slane %v798, %v823
  %v826 = vadd.f32 %v819, %v824
  %v827 = vld [vmem:[%s12] sm:$0xff]
  %v828 = vld [vmem:[%s12 + $0x8] sm:$0xff]
  %v829 = vld [vmem:[%s12 + $0x10] sm:$0xff]
  %v830 = vld [vmem:[%s12 + $0x18] sm:$0xff]
  %v831 = vld [vmem:[%s12 + $0x20] sm:$0xff]
  %v832 = vld [vmem:[%s12 + $0x28] sm:$0xff]
  %v833 = vld [vmem:[%s12 + $0x30] sm:$0xff]
  %v834 = vld [vmem:[%s12 + $0x38] sm:$0xff]
  %v835 = vld [vmem:[%s12 + $0x40] sm:$0xff]
  %v836 = vld [vmem:[%s12 + $0x48] sm:$0xff]
  %v837 = vld [vmem:[%s12 + $0x50] sm:$0xff]
  %v838 = vld [vmem:[%s12 + $0x58] sm:$0xff]
  %v839 = vld [vmem:[%s12 + $0x60] sm:$0xff]
  %v840 = vld [vmem:[%s12 + $0x68] sm:$0xff]
  %v841 = vld [vmem:[%s12 + $0x70] sm:$0xff]
  %v842 = vld [vmem:[%s12 + $0x78] sm:$0xff]
  %v843 = vld [vmem:[%s12 + $0x80] sm:$0xff]
  %v844 = vld [vmem:[%s12 + $0x88] sm:$0xff]
  %v845 = vld [vmem:[%s12 + $0x90] sm:$0xff]
  %v846 = vld [vmem:[%s12 + $0x98] sm:$0xff]
  %v847 = vld [vmem:[%s12 + $0xa0] sm:$0xff]
  %v848 = vld [vmem:[%s12 + $0xa8] sm:$0xff]
  %v849 = vld [vmem:[%s12 + $0xb0] sm:$0xff]
  %v850 = vld [vmem:[%s12 + $0xb8] sm:$0xff]
  %v851 = vld [vmem:[%s12 + $0xc0] sm:$0xff]
  %v852 = vld [vmem:[%s12 + $0xc8] sm:$0xff]
  %v853 = vld [vmem:[%s12 + $0xd0] sm:$0xff]
  %v854 = vld [vmem:[%s12 + $0xd8] sm:$0xff]
  %v855 = vld [vmem:[%s12 + $0xe0] sm:$0xff]
  %v856 = vld [vmem:[%s12 + $0xe8] sm:$0xff]
  %v857 = vld [vmem:[%s12 + $0xf0] sm:$0xff]
  %v858 = vld [vmem:[%s12 + $0xf8] sm:$0xff]
  %v859 = vld [vmem:[%s13] sm:$0xf]
  %v861 = vlaneseq
  %v862 = vshrl.u32 %v861, 7
  %v863 = vsub.s32 0, %v862
  %v864 = vrot.slane %v859, %v863
  %v865 = vlaneseq
  %v866 = vshrl.u32 %v865, 7
  %v867 = vsub.s32 1, %v866
  %v868 = vrot.slane %v859, %v867
  %v869 = vlaneseq
  %v870 = vshrl.u32 %v869, 7
  %v871 = vsub.s32 2, %v870
  %v872 = vrot.slane %v859, %v871
  %v873 = vlaneseq
  %v874 = vshrl.u32 %v873, 7
  %v875 = vsub.s32 3, %v874
  %v876 = vrot.slane %v859, %v875
  %v882 = vsel %vm75, %v826, 0
  %884 = vmatprep.subr.mxu0 %v828
  %885 = vmatpush1.msra.mxu0 %v827
  %886 = vmatprep.subr.mxu0 %v832
  %887 = vmatpush1.msra.mxu0 %v831
  %888 = vmatprep.subr.mxu0 %v836
  %889 = vmatpush1.msra.mxu0 %v835
  %890 = vmatprep.subr.mxu0 %v840
  %891 = vmatpush1.msra.mxu0 %v839
  %892 = vmatprep.subr.mxu0 %v844
  %893 = vmatpush1.msra.mxu0 %v843
  %894 = vmatprep.subr.mxu0 %v848
  %895 = vmatpush1.msra.mxu0 %v847
  %896 = vmatprep.subr.mxu0 %v852
  %897 = vmatpush1.msra.mxu0 %v851
  %898 = vmatprep.subr.mxu0 %v856
  %899 = vmatpush1.msra.mxu0 %v855
  %900 = vmatprep.subr.mxu0 0.0
  %901 = vmatpush1.msra.mxu0 0.0
  %902 = vmatprep.subr.mxu0 0.0
  %903 = vmatpush1.msra.mxu0 0.0
  %904 = vmatprep.subr.mxu0 0.0
  %905 = vmatpush1.msra.mxu0 0.0
  %906 = vmatprep.subr.mxu0 0.0
  %907 = vmatpush1.msra.mxu0 0.0
  %908 = vmatprep.subr.mxu0 0.0
  %909 = vmatpush1.msra.mxu0 0.0
  %910 = vmatprep.subr.mxu0 0.0
  %911 = vmatpush1.msra.mxu0 0.0
  %912 = vmatprep.subr.mxu0 0.0
  %913 = vmatpush1.msra.mxu0 0.0
  %914 = vmatprep.subr.mxu0 0.0
  %915 = vmatpush1.msra.mxu0 0.0
  %916 = vmatprep.subr.mxu0 0.0
  %917 = vmatpush1.msra.mxu0 0.0
  %918 = vmatprep.subr.mxu0 0.0
  %919 = vmatpush1.msra.mxu0 0.0
  %920 = vmatprep.subr.mxu0 0.0
  %921 = vmatpush1.msra.mxu0 0.0
  %922 = vmatprep.subr.mxu0 0.0
  %923 = vmatpush1.msra.mxu0 0.0
  %924 = vmatprep.subr.mxu0 0.0
  %925 = vmatpush1.msra.mxu0 0.0
  %926 = vmatprep.subr.mxu0 0.0
  %927 = vmatpush1.msra.mxu0 0.0
  %928 = vmatprep.subr.mxu0 0.0
  %929 = vmatpush1.msra.mxu0 0.0
  %930 = vmatprep.subr.mxu0 0.0
  %931 = vmatpush1.msra.mxu0 0.0
  %932 = vmatprep.subr.mxu0 0.0
  %933 = vmatpush1.msra.mxu0 0.0
  %934 = vmatprep.subr.mxu0 0.0
  %935 = vmatpush1.msra.mxu0 0.0
  %936 = vmatprep.subr.mxu0 0.0
  %937 = vmatpush1.msra.mxu0 0.0
  %938 = vmatprep.subr.mxu0 0.0
  %939 = vmatpush1.msra.mxu0 0.0
  %940 = vmatprep.subr.mxu0 0.0
  %941 = vmatpush1.msra.mxu0 0.0
  %942 = vmatprep.subr.mxu0 0.0
  %943 = vmatpush1.msra.mxu0 0.0
  %944 = vmatprep.subr.mxu0 0.0
  %945 = vmatpush1.msra.mxu0 0.0
  %946 = vmatprep.subr.mxu0 0.0
  %947 = vmatpush1.msra.mxu0 0.0
  %948 = vmatprep.mubr.f32.mxu0 0.0
  %949 = vmatmul.mubr.f32.gmra.mrb[0].mxu0 %v882
  %v950 = vpop.f32.mrb[0].mxu0
  %v951 = vadd.f32 %v864, %v950
  %v952 = vpop.f32.mrb[0].mxu0
  %v953 = vadd.f32 %v868, %v952
  %954 = vdwg.mxu0
  %955 = vmatprep.subr.mxu0 %v830
  %956 = vmatpush1.msra.mxu0 %v829
  %957 = vmatprep.subr.mxu0 %v834
  %958 = vmatpush1.msra.mxu0 %v833
  %959 = vmatprep.subr.mxu0 %v838
  %960 = vmatpush1.msra.mxu0 %v837
  %961 = vmatprep.subr.mxu0 %v842
  %962 = vmatpush1.msra.mxu0 %v841
  %963 = vmatprep.subr.mxu0 %v846
  %964 = vmatpush1.msra.mxu0 %v845
  %965 = vmatprep.subr.mxu0 %v850
  %966 = vmatpush1.msra.mxu0 %v849
  %967 = vmatprep.subr.mxu0 %v854
  %968 = vmatpush1.msra.mxu0 %v853
  %969 = vmatprep.subr.mxu0 %v858
  %970 = vmatpush1.msra.mxu0 %v857
  %971 = vmatprep.subr.mxu0 0.0
  %972 = vmatpush1.msra.mxu0 0.0
  %973 = vmatprep.subr.mxu0 0.0
  %974 = vmatpush1.msra.mxu0 0.0
  %975 = vmatprep.subr.mxu0 0.0
  %976 = vmatpush1.msra.mxu0 0.0
  %977 = vmatprep.subr.mxu0 0.0
  %978 = vmatpush1.msra.mxu0 0.0
  %979 = vmatprep.subr.mxu0 0.0
  %980 = vmatpush1.msra.mxu0 0.0
  %981 = vmatprep.subr.mxu0 0.0
  %982 = vmatpush1.msra.mxu0 0.0
  %983 = vmatprep.subr.mxu0 0.0
  %984 = vmatpush1.msra.mxu0 0.0
  %985 = vmatprep.subr.mxu0 0.0
  %986 = vmatpush1.msra.mxu0 0.0
  %987 = vmatprep.subr.mxu0 0.0
  %988 = vmatpush1.msra.mxu0 0.0
  %989 = vmatprep.subr.mxu0 0.0
  %990 = vmatpush1.msra.mxu0 0.0
  %991 = vmatprep.subr.mxu0 0.0
  %992 = vmatpush1.msra.mxu0 0.0
  %993 = vmatprep.subr.mxu0 0.0
  %994 = vmatpush1.msra.mxu0 0.0
  %995 = vmatprep.subr.mxu0 0.0
  %996 = vmatpush1.msra.mxu0 0.0
  %997 = vmatprep.subr.mxu0 0.0
  %998 = vmatpush1.msra.mxu0 0.0
  %999 = vmatprep.subr.mxu0 0.0
  %1000 = vmatpush1.msra.mxu0 0.0
  %1001 = vmatprep.subr.mxu0 0.0
  %1002 = vmatpush1.msra.mxu0 0.0
  %1003 = vmatprep.subr.mxu0 0.0
  %1004 = vmatpush1.msra.mxu0 0.0
  %1005 = vmatprep.subr.mxu0 0.0
  %1006 = vmatpush1.msra.mxu0 0.0
  %1007 = vmatprep.subr.mxu0 0.0
  %1008 = vmatpush1.msra.mxu0 0.0
  %1009 = vmatprep.subr.mxu0 0.0
  %1010 = vmatpush1.msra.mxu0 0.0
  %1011 = vmatprep.subr.mxu0 0.0
  %1012 = vmatpush1.msra.mxu0 0.0
  %1013 = vmatprep.subr.mxu0 0.0
  %1014 = vmatpush1.msra.mxu0 0.0
  %1015 = vmatprep.subr.mxu0 0.0
  %1016 = vmatpush1.msra.mxu0 0.0
  %1017 = vmatprep.subr.mxu0 0.0
  %1018 = vmatpush1.msra.mxu0 0.0
  %1019 = vmatprep.mubr.f32.mxu0 0.0
  %1020 = vmatmul.mubr.f32.gmra.mrb[0].mxu0 %v882
  %v1021 = vpop.f32.mrb[0].mxu0
  %v1022 = vadd.f32 %v872, %v1021
  %v1023 = vpop.f32.mrb[0].mxu0
  %v1024 = vadd.f32 %v876, %v1023
  %1025 = vdwg.mxu0
  %v1026 = vmax.f32 %v951, 0.0
  %v1027 = vmax.f32 %v953, 0.0
  %v1028 = vmax.f32 %v1022, 0.0
  %v1029 = vmax.f32 %v1024, 0.0
  %v1030 = vld [vmem:[%s14] sm:$0xff]
  %v1031 = vld [vmem:[%s14 + $0x8] sm:$0xff]
  %v1032 = vld [vmem:[%s14 + $0x10] sm:$0xff]
  %v1033 = vld [vmem:[%s14 + $0x18] sm:$0xff]
  %v1034 = vld [vmem:[%s14 + $0x20] sm:$0xff]
  %v1035 = vld [vmem:[%s14 + $0x28] sm:$0xff]
  %v1036 = vld [vmem:[%s14 + $0x30] sm:$0xff]
  %v1037 = vld [vmem:[%s14 + $0x38] sm:$0xff]
  %v1038 = vld [vmem:[%s14 + $0x40] sm:$0xff]
  %v1039 = vld [vmem:[%s14 + $0x48] sm:$0xff]
  %v1040 = vld [vmem:[%s14 + $0x50] sm:$0xff]
  %v1041 = vld [vmem:[%s14 + $0x58] sm:$0xff]
  %v1042 = vld [vmem:[%s14 + $0x60] sm:$0xff]
  %v1043 = vld [vmem:[%s14 + $0x68] sm:$0xff]
  %v1044 = vld [vmem:[%s14 + $0x70] sm:$0xff]
  %v1045 = vld [vmem:[%s14 + $0x78] sm:$0xff]
  %v1046 = vld [vmem:[%s14 + $0x80] sm:$0xff]
  %v1047 = vld [vmem:[%s14 + $0x88] sm:$0xff]
  %v1048 = vld [vmem:[%s14 + $0x90] sm:$0xff]
  %v1049 = vld [vmem:[%s14 + $0x98] sm:$0xff]
  %v1050 = vld [vmem:[%s14 + $0xa0] sm:$0xff]
  %v1051 = vld [vmem:[%s14 + $0xa8] sm:$0xff]
  %v1052 = vld [vmem:[%s14 + $0xb0] sm:$0xff]
  %v1053 = vld [vmem:[%s14 + $0xb8] sm:$0xff]
  %v1054 = vld [vmem:[%s14 + $0xc0] sm:$0xff]
  %v1055 = vld [vmem:[%s14 + $0xc8] sm:$0xff]
  %v1056 = vld [vmem:[%s14 + $0xd0] sm:$0xff]
  %v1057 = vld [vmem:[%s14 + $0xd8] sm:$0xff]
  %v1058 = vld [vmem:[%s14 + $0xe0] sm:$0xff]
  %v1059 = vld [vmem:[%s14 + $0xe8] sm:$0xff]
  %v1060 = vld [vmem:[%s14 + $0xf0] sm:$0xff]
  %v1061 = vld [vmem:[%s14 + $0xf8] sm:$0xff]
  %v1062 = vld [vmem:[%s14 + $0x100] sm:$0xff]
  %v1063 = vld [vmem:[%s14 + $0x108] sm:$0xff]
  %v1064 = vld [vmem:[%s14 + $0x110] sm:$0xff]
  %v1065 = vld [vmem:[%s14 + $0x118] sm:$0xff]
  %v1066 = vld [vmem:[%s14 + $0x120] sm:$0xff]
  %v1067 = vld [vmem:[%s14 + $0x128] sm:$0xff]
  %v1068 = vld [vmem:[%s14 + $0x130] sm:$0xff]
  %v1069 = vld [vmem:[%s14 + $0x138] sm:$0xff]
  %v1070 = vld [vmem:[%s14 + $0x140] sm:$0xff]
  %v1071 = vld [vmem:[%s14 + $0x148] sm:$0xff]
  %v1072 = vld [vmem:[%s14 + $0x150] sm:$0xff]
  %v1073 = vld [vmem:[%s14 + $0x158] sm:$0xff]
  %v1074 = vld [vmem:[%s14 + $0x160] sm:$0xff]
  %v1075 = vld [vmem:[%s14 + $0x168] sm:$0xff]
  %v1076 = vld [vmem:[%s14 + $0x170] sm:$0xff]
  %v1077 = vld [vmem:[%s14 + $0x178] sm:$0xff]
  %v1078 = vld [vmem:[%s14 + $0x180] sm:$0xff]
  %v1079 = vld [vmem:[%s14 + $0x188] sm:$0xff]
  %v1080 = vld [vmem:[%s14 + $0x190] sm:$0xff]
  %v1081 = vld [vmem:[%s14 + $0x198] sm:$0xff]
  %v1082 = vld [vmem:[%s14 + $0x1a0] sm:$0xff]
  %v1083 = vld [vmem:[%s14 + $0x1a8] sm:$0xff]
  %v1084 = vld [vmem:[%s14 + $0x1b0] sm:$0xff]
  %v1085 = vld [vmem:[%s14 + $0x1b8] sm:$0xff]
  %v1086 = vld [vmem:[%s14 + $0x1c0] sm:$0xff]
  %v1087 = vld [vmem:[%s14 + $0x1c8] sm:$0xff]
  %v1088 = vld [vmem:[%s14 + $0x1d0] sm:$0xff]
  %v1089 = vld [vmem:[%s14 + $0x1d8] sm:$0xff]
  %v1090 = vld [vmem:[%s14 + $0x1e0] sm:$0xff]
  %v1091 = vld [vmem:[%s14 + $0x1e8] sm:$0xff]
  %v1092 = vld [vmem:[%s14 + $0x1f0] sm:$0xff]
  %v1093 = vld [vmem:[%s14 + $0x1f8] sm:$0xff]
  %v1094 = vld [vmem:[%s15] sm:$0x1]
  %v1096 = vlaneseq
  %v1097 = vshrl.u32 %v1096, 7
  %v1098 = vsub.s32 0, %v1097
  %v1099 = vrot.slane %v1094, %v1098
  %1101 = vmatprep.subr.mxu0 0.0
  %1102 = vmatpush1.msra.mxu0 %v1030
  %1103 = vmatprep.subr.mxu0 0.0
  %1104 = vmatpush1.msra.mxu0 %v1031
  %1105 = vmatprep.subr.mxu0 0.0
  %1106 = vmatpush1.msra.mxu0 %v1032
  %1107 = vmatprep.subr.mxu0 0.0
  %1108 = vmatpush1.msra.mxu0 %v1033
  %1109 = vmatprep.subr.mxu0 0.0
  %1110 = vmatpush1.msra.mxu0 %v1034
  %1111 = vmatprep.subr.mxu0 0.0
  %1112 = vmatpush1.msra.mxu0 %v1035
  %1113 = vmatprep.subr.mxu0 0.0
  %1114 = vmatpush1.msra.mxu0 %v1036
  %1115 = vmatprep.subr.mxu0 0.0
  %1116 = vmatpush1.msra.mxu0 %v1037
  %1117 = vmatprep.subr.mxu0 0.0
  %1118 = vmatpush1.msra.mxu0 %v1038
  %1119 = vmatprep.subr.mxu0 0.0
  %1120 = vmatpush1.msra.mxu0 %v1039
  %1121 = vmatprep.subr.mxu0 0.0
  %1122 = vmatpush1.msra.mxu0 %v1040
  %1123 = vmatprep.subr.mxu0 0.0
  %1124 = vmatpush1.msra.mxu0 %v1041
  %1125 = vmatprep.subr.mxu0 0.0
  %1126 = vmatpush1.msra.mxu0 %v1042
  %1127 = vmatprep.subr.mxu0 0.0
  %1128 = vmatpush1.msra.mxu0 %v1043
  %1129 = vmatprep.subr.mxu0 0.0
  %1130 = vmatpush1.msra.mxu0 %v1044
  %1131 = vmatprep.subr.mxu0 0.0
  %1132 = vmatpush1.msra.mxu0 %v1045
  %1133 = vmatprep.subr.mxu0 0.0
  %1134 = vmatpush1.msra.mxu0 %v1046
  %1135 = vmatprep.subr.mxu0 0.0
  %1136 = vmatpush1.msra.mxu0 %v1047
  %1137 = vmatprep.subr.mxu0 0.0
  %1138 = vmatpush1.msra.mxu0 %v1048
  %1139 = vmatprep.subr.mxu0 0.0
  %1140 = vmatpush1.msra.mxu0 %v1049
  %1141 = vmatprep.subr.mxu0 0.0
  %1142 = vmatpush1.msra.mxu0 %v1050
  %1143 = vmatprep.subr.mxu0 0.0
  %1144 = vmatpush1.msra.mxu0 %v1051
  %1145 = vmatprep.subr.mxu0 0.0
  %1146 = vmatpush1.msra.mxu0 %v1052
  %1147 = vmatprep.subr.mxu0 0.0
  %1148 = vmatpush1.msra.mxu0 %v1053
  %1149 = vmatprep.subr.mxu0 0.0
  %1150 = vmatpush1.msra.mxu0 %v1054
  %1151 = vmatprep.subr.mxu0 0.0
  %1152 = vmatpush1.msra.mxu0 %v1055
  %1153 = vmatprep.subr.mxu0 0.0
  %1154 = vmatpush1.msra.mxu0 %v1056
  %1155 = vmatprep.subr.mxu0 0.0
  %1156 = vmatpush1.msra.mxu0 %v1057
  %1157 = vmatprep.subr.mxu0 0.0
  %1158 = vmatpush1.msra.mxu0 %v1058
  %1159 = vmatprep.subr.mxu0 0.0
  %1160 = vmatpush1.msra.mxu0 %v1059
  %1161 = vmatprep.subr.mxu0 0.0
  %1162 = vmatpush1.msra.mxu0 %v1060
  %1163 = vmatprep.subr.mxu0 0.0
  %1164 = vmatpush1.msra.mxu0 %v1061
  %1165 = vmatprep.mubr.f32.mxu0 %v1027
  %1166 = vmatmul.mubr.f32.gmra.mrb[0].mxu0 %v1026
  %v1167 = vpop.f32.mrb[0].mxu0
  %v1168 = vadd.f32 %v1099, %v1167
  %v1169 = vpop.f32.mrb[0].mxu0
  %1170 = vdwg.mxu0
  %1171 = vmatprep.subr.mxu0 0.0
  %1172 = vmatpush1.msra.mxu0 %v1062
  %1173 = vmatprep.subr.mxu0 0.0
  %1174 = vmatpush1.msra.mxu0 %v1063
  %1175 = vmatprep.subr.mxu0 0.0
  %1176 = vmatpush1.msra.mxu0 %v1064
  %1177 = vmatprep.subr.mxu0 0.0
  %1178 = vmatpush1.msra.mxu0 %v1065
  %1179 = vmatprep.subr.mxu0 0.0
  %1180 = vmatpush1.msra.mxu0 %v1066
  %1181 = vmatprep.subr.mxu0 0.0
  %1182 = vmatpush1.msra.mxu0 %v1067
  %1183 = vmatprep.subr.mxu0 0.0
  %1184 = vmatpush1.msra.mxu0 %v1068
  %1185 = vmatprep.subr.mxu0 0.0
  %1186 = vmatpush1.msra.mxu0 %v1069
  %1187 = vmatprep.subr.mxu0 0.0
  %1188 = vmatpush1.msra.mxu0 %v1070
  %1189 = vmatprep.subr.mxu0 0.0
  %1190 = vmatpush1.msra.mxu0 %v1071
  %1191 = vmatprep.subr.mxu0 0.0
  %1192 = vmatpush1.msra.mxu0 %v1072
  %1193 = vmatprep.subr.mxu0 0.0
  %1194 = vmatpush1.msra.mxu0 %v1073
  %1195 = vmatprep.subr.mxu0 0.0
  %1196 = vmatpush1.msra.mxu0 %v1074
  %1197 = vmatprep.subr.mxu0 0.0
  %1198 = vmatpush1.msra.mxu0 %v1075
  %1199 = vmatprep.subr.mxu0 0.0
  %1200 = vmatpush1.msra.mxu0 %v1076
  %1201 = vmatprep.subr.mxu0 0.0
  %1202 = vmatpush1.msra.mxu0 %v1077
  %1203 = vmatprep.subr.mxu0 0.0
  %1204 = vmatpush1.msra.mxu0 %v1078
  %1205 = vmatprep.subr.mxu0 0.0
  %1206 = vmatpush1.msra.mxu0 %v1079
  %1207 = vmatprep.subr.mxu0 0.0
  %1208 = vmatpush1.msra.mxu0 %v1080
  %1209 = vmatprep.subr.mxu0 0.0
  %1210 = vmatpush1.msra.mxu0 %v1081
  %1211 = vmatprep.subr.mxu0 0.0
  %1212 = vmatpush1.msra.mxu0 %v1082
  %1213 = vmatprep.subr.mxu0 0.0
  %1214 = vmatpush1.msra.mxu0 %v1083
  %1215 = vmatprep.subr.mxu0 0.0
  %1216 = vmatpush1.msra.mxu0 %v1084
  %1217 = vmatprep.subr.mxu0 0.0
  %1218 = vmatpush1.msra.mxu0 %v1085
  %1219 = vmatprep.subr.mxu0 0.0
  %1220 = vmatpush1.msra.mxu0 %v1086
  %1221 = vmatprep.subr.mxu0 0.0
  %1222 = vmatpush1.msra.mxu0 %v1087
  %1223 = vmatprep.subr.mxu0 0.0
  %1224 = vmatpush1.msra.mxu0 %v1088
  %1225 = vmatprep.subr.mxu0 0.0
  %1226 = vmatpush1.msra.mxu0 %v1089
  %1227 = vmatprep.subr.mxu0 0.0
  %1228 = vmatpush1.msra.mxu0 %v1090
  %1229 = vmatprep.subr.mxu0 0.0
  %1230 = vmatpush1.msra.mxu0 %v1091
  %1231 = vmatprep.subr.mxu0 0.0
  %1232 = vmatpush1.msra.mxu0 %v1092
  %1233 = vmatprep.subr.mxu0 0.0
  %1234 = vmatpush1.msra.mxu0 %v1093
  %1235 = vmatprep.mubr.f32.mxu0 %v1029
  %1236 = vmatmul.mubr.f32.gmra.mrb[0].mxu0 %v1028
  %v1237 = vpop.f32.mrb[0].mxu0
  %v1238 = vadd.f32 %v1168, %v1237
  %v1239 = vpop.f32.mrb[0].mxu0
  %1240 = vdwg.mxu0
  %v1241 = vadd.f32 %v826, %v1238
  %v1242 = vld [vmem:[%s10] sm:$0x1]
  %v1243 = vld [vmem:[%s11] sm:$0x1]
  %v1244 = vsel %vm75, %v1241, 0.0
  %1245 = vadd.xlane.f32.xlu0 %v1244
  %v1246 = vpop.xlane.xlu0 %1245
  %v1247 = vmul.f32 %v1246, %v802
  %v1248 = vsub.f32 %v1241, %v1247
  %v1249 = vmul.f32 %v1248, %v1248
  %v1250 = vsel %vm75, %v1249, 0.0
  %1251 = vadd.xlane.f32.xlu0 %v1250
  %v1252 = vpop.xlane.xlu0 %1251
  %v1253 = vmul.f32 %v1252, %v802
  %v1254 = vadd.f32 %v1253, 1e-05
  %v1255 = vrsqrt.pop %v1254
  %v1256 = vmul.f32 %v1248, %v1255
  %v1258 = vlaneseq
  %v1259 = vshrl.u32 %v1258, 7
  %v1260 = vsub.s32 0, %v1259
  %v1261 = vrot.slane %v1242, %v1260
  %v1263 = vmul.f32 %v1256, %v1261
  %v1265 = vlaneseq
  %v1266 = vshrl.u32 %v1265, 7
  %v1267 = vsub.s32 0, %v1266
  %v1268 = vrot.slane %v1243, %v1267
  %v1270 = vadd.f32 %v1263, %v1268
  %s1271 = scalar_lea.vmem %s4, 128
  %v1272 = vld [vmem:[%s1271] sm:$0xff]
  %v1273 = vld [vmem:[%s1271 + $0x8] sm:$0xff]
  %v1274 = vld [vmem:[%s1271 + $0x10] sm:$0xff]
  %v1275 = vld [vmem:[%s1271 + $0x18] sm:$0xff]
  %v1276 = vld [vmem:[%s1271 + $0x20] sm:$0xff]
  %v1277 = vld [vmem:[%s1271 + $0x28] sm:$0xff]
  %v1278 = vld [vmem:[%s1271 + $0x30] sm:$0xff]
  %v1279 = vld [vmem:[%s1271 + $0x38] sm:$0xff]
  %v1280 = vld [vmem:[%s1271 + $0x40] sm:$0xff]
  %v1281 = vld [vmem:[%s1271 + $0x48] sm:$0xff]
  %v1282 = vld [vmem:[%s1271 + $0x50] sm:$0xff]
  %v1283 = vld [vmem:[%s1271 + $0x58] sm:$0xff]
  %v1284 = vld [vmem:[%s1271 + $0x60] sm:$0xff]
  %v1285 = vld [vmem:[%s1271 + $0x68] sm:$0xff]
  %v1286 = vld [vmem:[%s1271 + $0x70] sm:$0xff]
  %v1287 = vld [vmem:[%s1271 + $0x78] sm:$0xff]
  %s1288 = scalar_lea.vmem %s5, 2
  %v1289 = vld [vmem:[%s1288] sm:$0x3]
  %v1291 = vlaneseq
  %v1292 = vshrl.u32 %v1291, 7
  %v1293 = vsub.s32 0, %v1292
  %v1294 = vrot.slane %v1289, %v1293
  %v1295 = vlaneseq
  %v1296 = vshrl.u32 %v1295, 7
  %v1297 = vsub.s32 1, %v1296
  %v1298 = vrot.slane %v1289, %v1297
  %v1302 = vsel %vm75, %v1270, 0
  %1304 = vmatprep.subr.mxu0 %v1273
  %1305 = vmatpush1.msra.mxu0 %v1272
  %1306 = vmatprep.subr.mxu0 %v1275
  %1307 = vmatpush1.msra.mxu0 %v1274
  %1308 = vmatprep.subr.mxu0 %v1277
  %1309 = vmatpush1.msra.mxu0 %v1276
  %1310 = vmatprep.subr.mxu0 %v1279
  %1311 = vmatpush1.msra.mxu0 %v1278
  %1312 = vmatprep.subr.mxu0 %v1281
  %1313 = vmatpush1.msra.mxu0 %v1280
  %1314 = vmatprep.subr.mxu0 %v1283
  %1315 = vmatpush1.msra.mxu0 %v1282
  %1316 = vmatprep.subr.mxu0 %v1285
  %1317 = vmatpush1.msra.mxu0 %v1284
  %1318 = vmatprep.subr.mxu0 %v1287
  %1319 = vmatpush1.msra.mxu0 %v1286
  %1320 = vmatprep.subr.mxu0 0.0
  %1321 = vmatpush1.msra.mxu0 0.0
  %1322 = vmatprep.subr.mxu0 0.0
  %1323 = vmatpush1.msra.mxu0 0.0
  %1324 = vmatprep.subr.mxu0 0.0
  %1325 = vmatpush1.msra.mxu0 0.0
  %1326 = vmatprep.subr.mxu0 0.0
  %1327 = vmatpush1.msra.mxu0 0.0
  %1328 = vmatprep.subr.mxu0 0.0
  %1329 = vmatpush1.msra.mxu0 0.0
  %1330 = vmatprep.subr.mxu0 0.0
  %1331 = vmatpush1.msra.mxu0 0.0
  %1332 = vmatprep.subr.mxu0 0.0
  %1333 = vmatpush1.msra.mxu0 0.0
  %1334 = vmatprep.subr.mxu0 0.0
  %1335 = vmatpush1.msra.mxu0 0.0
  %1336 = vmatprep.subr.mxu0 0.0
  %1337 = vmatpush1.msra.mxu0 0.0
  %1338 = vmatprep.subr.mxu0 0.0
  %1339 = vmatpush1.msra.mxu0 0.0
  %1340 = vmatprep.subr.mxu0 0.0
  %1341 = vmatpush1.msra.mxu0 0.0
  %1342 = vmatprep.subr.mxu0 0.0
  %1343 = vmatpush1.msra.mxu0 0.0
  %1344 = vmatprep.subr.mxu0 0.0
  %1345 = vmatpush1.msra.mxu0 0.0
  %1346 = vmatprep.subr.mxu0 0.0
  %1347 = vmatpush1.msra.mxu0 0.0
  %1348 = vmatprep.subr.mxu0 0.0
  %1349 = vmatpush1.msra.mxu0 0.0
  %1350 = vmatprep.subr.mxu0 0.0
  %1351 = vmatpush1.msra.mxu0 0.0
  %1352 = vmatprep.subr.mxu0 0.0
  %1353 = vmatpush1.msra.mxu0 0.0
  %1354 = vmatprep.subr.mxu0 0.0
  %1355 = vmatpush1.msra.mxu0 0.0
  %1356 = vmatprep.subr.mxu0 0.0
  %1357 = vmatpush1.msra.mxu0 0.0
  %1358 = vmatprep.subr.mxu0 0.0
  %1359 = vmatpush1.msra.mxu0 0.0
  %1360 = vmatprep.subr.mxu0 0.0
  %1361 = vmatpush1.msra.mxu0 0.0
  %1362 = vmatprep.subr.mxu0 0.0
  %1363 = vmatpush1.msra.mxu0 0.0
  %1364 = vmatprep.subr.mxu0 0.0
  %1365 = vmatpush1.msra.mxu0 0.0
  %1366 = vmatprep.subr.mxu0 0.0
  %1367 = vmatpush1.msra.mxu0 0.0
  %1368 = vmatprep.mubr.f32.mxu0 0.0
  %1369 = vmatmul.mubr.f32.gmra.mrb[0].mxu0 %v1302
  %v1370 = vpop.f32.mrb[0].mxu0
  %v1371 = vadd.f32 %v1294, %v1370
  %v1372 = vpop.f32.mrb[0].mxu0
  %v1373 = vadd.f32 %v1298, %v1372
  %1374 = vdwg.mxu0
  %1376 = vrot.lane.b32.xlu0 %v1371, 120
  %v1377 = vpop.permute.xlu0 %1376
  %1378 = vrot.lane.b32.xlu0 %v1371, 112
  %v1379 = vpop.permute.xlu0 %1378
  %1380 = vrot.lane.b32.xlu0 %v1371, 104
  %v1381 = vpop.permute.xlu0 %1380
  %1382 = vrot.lane.b32.xlu0 %v1371, 96
  %v1383 = vpop.permute.xlu0 %1382
  %1384 = vrot.lane.b32.xlu0 %v1371, 88
  %v1385 = vpop.permute.xlu0 %1384
  %1386 = vrot.lane.b32.xlu0 %v1371, 80
  %v1387 = vpop.permute.xlu0 %1386
  %1388 = vrot.lane.b32.xlu0 %v1371, 72
  %v1389 = vpop.permute.xlu0 %1388
  %1391 = vrot.lane.b32.xlu0 %v1373, 120
  %v1392 = vpop.permute.xlu0 %1391
  %1394 = vrot.lane.b32.xlu0 %v1373, 112
  %v1395 = vpop.permute.xlu0 %1394
  %1397 = vrot.lane.b32.xlu0 %v1373, 104
  %v1398 = vpop.permute.xlu0 %1397
  %1400 = vrot.lane.b32.xlu0 %v1373, 96
  %v1401 = vpop.permute.xlu0 %1400
  %1403 = vrot.lane.b32.xlu0 %v1373, 88
  %v1404 = vpop.permute.xlu0 %1403
  %1406 = vrot.lane.b32.xlu0 %v1373, 80
  %v1407 = vpop.permute.xlu0 %1406
  %1409 = vrot.lane.b32.xlu0 %v1373, 72
  %v1410 = vpop.permute.xlu0 %1409
  %1412 = vrot.lane.b32.xlu0 %v1371, 64
  %v1413 = vpop.permute.xlu0 %1412
  %1414 = vrot.lane.b32.xlu0 %v1377, 64
  %v1415 = vpop.permute.xlu0 %1414
  %1416 = vrot.lane.b32.xlu0 %v1379, 64
  %v1417 = vpop.permute.xlu0 %1416
  %1418 = vrot.lane.b32.xlu0 %v1381, 64
  %v1419 = vpop.permute.xlu0 %1418
  %1420 = vrot.lane.b32.xlu0 %v1383, 64
  %v1421 = vpop.permute.xlu0 %1420
  %1422 = vrot.lane.b32.xlu0 %v1385, 64
  %v1423 = vpop.permute.xlu0 %1422
  %1424 = vrot.lane.b32.xlu0 %v1387, 64
  %v1425 = vpop.permute.xlu0 %1424
  %1426 = vrot.lane.b32.xlu0 %v1389, 64
  %v1427 = vpop.permute.xlu0 %1426
  %v1428 = vsel %vm312, %v1371, 0
  %v1430 = vsel %vm312, %v1377, 0
  %v1432 = vsel %vm312, %v1379, 0
  %v1434 = vsel %vm312, %v1381, 0
  %v1436 = vsel %vm312, %v1383, 0
  %v1438 = vsel %vm312, %v1385, 0
  %v1440 = vsel %vm312, %v1387, 0
  %v1442 = vsel %vm312, %v1389, 0
  %v1444 = vsel %vm312, %v1413, 0
  %v1446 = vsel %vm312, %v1415, 0
  %v1448 = vsel %vm312, %v1417, 0
  %v1450 = vsel %vm312, %v1419, 0
  %v1452 = vsel %vm312, %v1421, 0
  %v1454 = vsel %vm312, %v1423, 0
  %v1456 = vsel %vm312, %v1425, 0
  %v1458 = vsel %vm312, %v1427, 0
  %1460 = vmatprep.subr.mxu0 0.0
  %1461 = vmatpush1.xpose.msra.mxu0 %v1444
  %1462 = vmatprep.subr.mxu0 0.0
  %1463 = vmatpush1.xpose.msra.mxu0 %v1446
  %1464 = vmatprep.subr.mxu0 0.0
  %1465 = vmatpush1.xpose.msra.mxu0 %v1448
  %1466 = vmatprep.subr.mxu0 0.0
  %1467 = vmatpush1.xpose.msra.mxu0 %v1450
  %1468 = vmatprep.subr.mxu0 0.0
  %1469 = vmatpush1.xpose.msra.mxu0 %v1452
  %1470 = vmatprep.subr.mxu0 0.0
  %1471 = vmatpush1.xpose.msra.mxu0 %v1454
  %1472 = vmatprep.subr.mxu0 0.0
  %1473 = vmatpush1.xpose.msra.mxu0 %v1456
  %1474 = vmatprep.subr.mxu0 0.0
  %1475 = vmatpush1.xpose.msra.mxu0 %v1458
  %1476 = vmatprep.subr.mxu0 0.0
  %1477 = vmatpush1.xpose.msra.mxu0 0.0
  %1478 = vmatprep.subr.mxu0 0.0
  %1479 = vmatpush1.xpose.msra.mxu0 0.0
  %1480 = vmatprep.subr.mxu0 0.0
  %1481 = vmatpush1.xpose.msra.mxu0 0.0
  %1482 = vmatprep.subr.mxu0 0.0
  %1483 = vmatpush1.xpose.msra.mxu0 0.0
  %1484 = vmatprep.subr.mxu0 0.0
  %1485 = vmatpush1.xpose.msra.mxu0 0.0
  %1486 = vmatprep.subr.mxu0 0.0
  %1487 = vmatpush1.xpose.msra.mxu0 0.0
  %1488 = vmatprep.subr.mxu0 0.0
  %1489 = vmatpush1.xpose.msra.mxu0 0.0
  %1490 = vmatprep.subr.mxu0 0.0
  %1491 = vmatpush1.xpose.msra.mxu0 0.0
  %1492 = vmatprep.subr.mxu0 0.0
  %1493 = vmatpush1.xpose.msra.mxu0 0.0
  %1494 = vmatprep.subr.mxu0 0.0
  %1495 = vmatpush1.xpose.msra.mxu0 0.0
  %1496 = vmatprep.subr.mxu0 0.0
  %1497 = vmatpush1.xpose.msra.mxu0 0.0
  %1498 = vmatprep.subr.mxu0 0.0
  %1499 = vmatpush1.xpose.msra.mxu0 0.0
  %1500 = vmatprep.subr.mxu0 0.0
  %1501 = vmatpush1.xpose.msra.mxu0 0.0
  %1502 = vmatprep.subr.mxu0 0.0
  %1503 = vmatpush1.xpose.msra.mxu0 0.0
  %1504 = vmatprep.subr.mxu0 0.0
  %1505 = vmatpush1.xpose.msra.mxu0 0.0
  %1506 = vmatprep.subr.mxu0 0.0
  %1507 = vmatpush1.xpose.msra.mxu0 0.0
  %1508 = vmatprep.subr.mxu0 0.0
  %1509 = vmatpush1.xpose.msra.mxu0 0.0
  %1510 = vmatprep.subr.mxu0 0.0
  %1511 = vmatpush1.xpose.msra.mxu0 0.0
  %1512 = vmatprep.subr.mxu0 0.0
  %1513 = vmatpush1.xpose.msra.mxu0 0.0
  %1514 = vmatprep.subr.mxu0 0.0
  %1515 = vmatpush1.xpose.msra.mxu0 0.0
  %1516 = vmatprep.subr.mxu0 0.0
  %1517 = vmatpush1.xpose.msra.mxu0 0.0
  %1518 = vmatprep.subr.mxu0 0.0
  %1519 = vmatpush1.xpose.msra.mxu0 0.0
  %1520 = vmatprep.subr.mxu0 0.0
  %1521 = vmatpush1.xpose.msra.mxu0 0.0
  %1522 = vmatprep.subr.mxu0 0.0
  %1523 = vmatpush1.xpose.msra.mxu0 0.0
  %1524 = vmatprep.mubr.f32.mxu0 0.0
  %1525 = vmatmul.mubr.f32.gmra.mrb[0].mxu0 %v1428
  %v1526 = vpop.f32.mrb[0].mxu0
  %v1527 = vadd.f32 %v149, %v1526
  %v1528 = vpop.f32.mrb[0].mxu0
  %1529 = vmatprep.mubr.f32.mxu0 0.0
  %1530 = vmatmul.mubr.f32.gmra.mrb[0].mxu0 %v1430
  %v1531 = vpop.f32.mrb[0].mxu0
  %v1532 = vadd.f32 %v150, %v1531
  %v1533 = vpop.f32.mrb[0].mxu0
  %1534 = vmatprep.mubr.f32.mxu0 0.0
  %1535 = vmatmul.mubr.f32.gmra.mrb[0].mxu0 %v1432
  %v1536 = vpop.f32.mrb[0].mxu0
  %v1537 = vadd.f32 %v151, %v1536
  %v1538 = vpop.f32.mrb[0].mxu0
  %1539 = vmatprep.mubr.f32.mxu0 0.0
  %1540 = vmatmul.mubr.f32.gmra.mrb[0].mxu0 %v1434
  %v1541 = vpop.f32.mrb[0].mxu0
  %v1542 = vadd.f32 %v152, %v1541
  %v1543 = vpop.f32.mrb[0].mxu0
  %1544 = vmatprep.mubr.f32.mxu0 0.0
  %1545 = vmatmul.mubr.f32.gmra.mrb[0].mxu0 %v1436
  %v1546 = vpop.f32.mrb[0].mxu0
  %v1547 = vadd.f32 %v153, %v1546
  %v1548 = vpop.f32.mrb[0].mxu0
  %1549 = vmatprep.mubr.f32.mxu0 0.0
  %1550 = vmatmul.mubr.f32.gmra.mrb[0].mxu0 %v1438
  %v1551 = vpop.f32.mrb[0].mxu0
  %v1552 = vadd.f32 %v154, %v1551
  %v1553 = vpop.f32.mrb[0].mxu0
  %1554 = vmatprep.mubr.f32.mxu0 0.0
  %1555 = vmatmul.mubr.f32.gmra.mrb[0].mxu0 %v1440
  %v1556 = vpop.f32.mrb[0].mxu0
  %v1557 = vadd.f32 %v155, %v1556
  %v1558 = vpop.f32.mrb[0].mxu0
  %1559 = vmatprep.mubr.f32.mxu0 0.0
  %1560 = vmatmul.mubr.f32.gmra.mrb[0].mxu0 %v1442
  %v1561 = vpop.f32.mrb[0].mxu0
  %v1562 = vadd.f32 %v156, %v1561
  %v1563 = vpop.f32.mrb[0].mxu0
  %1564 = vdwg.mxu0
  %v1565 = vsel %vm75, %v1527, -inf
  %1566 = vmax.xlane.f32.xlu0 %v1565
  %v1567 = vpop.xlane.xlu0 %1566
  %v1568 = vsel %vm75, %v1532, -inf
  %1569 = vmax.xlane.f32.xlu0 %v1568
  %v1570 = vpop.xlane.xlu0 %1569
  %v1571 = vsel %vm75, %v1537, -inf
  %1572 = vmax.xlane.f32.xlu0 %v1571
  %v1573 = vpop.xlane.xlu0 %1572
  %v1574 = vsel %vm75, %v1542, -inf
  %1575 = vmax.xlane.f32.xlu0 %v1574
  %v1576 = vpop.xlane.xlu0 %1575
  %v1577 = vsel %vm75, %v1547, -inf
  %1578 = vmax.xlane.f32.xlu0 %v1577
  %v1579 = vpop.xlane.xlu0 %1578
  %v1580 = vsel %vm75, %v1552, -inf
  %1581 = vmax.xlane.f32.xlu0 %v1580
  %v1582 = vpop.xlane.xlu0 %1581
  %v1583 = vsel %vm75, %v1557, -inf
  %1584 = vmax.xlane.f32.xlu0 %v1583
  %v1585 = vpop.xlane.xlu0 %1584
  %v1586 = vsel %vm75, %v1562, -inf
  %1587 = vmax.xlane.f32.xlu0 %v1586
  %v1588 = vpop.xlane.xlu0 %1587
  %v1589 = vsub.f32 %v1527, %v1567
  %v1590 = vsub.f32 %v1532, %v1570
  %v1591 = vsub.f32 %v1537, %v1573
  %v1592 = vsub.f32 %v1542, %v1576
  %v1593 = vsub.f32 %v1547, %v1579
  %v1594 = vsub.f32 %v1552, %v1582
  %v1595 = vsub.f32 %v1557, %v1585
  %v1596 = vsub.f32 %v1562, %v1588
  %v1597 = vmul.f32 %v1589, 1.442695
  %v1598 = vpow.pop %v1597
  %v1599 = vmul.f32 %v1590, 1.442695
  %v1600 = vpow.pop %v1599
  %v1601 = vmul.f32 %v1591, 1.442695
  %v1602 = vpow.pop %v1601
  %v1603 = vmul.f32 %v1592, 1.442695
  %v1604 = vpow.pop %v1603
  %v1605 = vmul.f32 %v1593, 1.442695
  %v1606 = vpow.pop %v1605
  %v1607 = vmul.f32 %v1594, 1.442695
  %v1608 = vpow.pop %v1607
  %v1609 = vmul.f32 %v1595, 1.442695
  %v1610 = vpow.pop %v1609
  %v1611 = vmul.f32 %v1596, 1.442695
  %v1612 = vpow.pop %v1611
  %v1613 = vsel %vm75, %v1598, 0.0
  %1614 = vadd.xlane.f32.xlu0 %v1613
  %v1615 = vpop.xlane.xlu0 %1614
  %v1616 = vsel %vm75, %v1600, 0.0
  %1617 = vadd.xlane.f32.xlu0 %v1616
  %v1618 = vpop.xlane.xlu0 %1617
  %v1619 = vsel %vm75, %v1602, 0.0
  %1620 = vadd.xlane.f32.xlu0 %v1619
  %v1621 = vpop.xlane.xlu0 %1620
  %v1622 = vsel %vm75, %v1604, 0.0
  %1623 = vadd.xlane.f32.xlu0 %v1622
  %v1624 = vpop.xlane.xlu0 %1623
  %v1625 = vsel %vm75, %v1606, 0.0
  %1626 = vadd.xlane.f32.xlu0 %v1625
  %v1627 = vpop.xlane.xlu0 %1626
  %v1628 = vsel %vm75, %v1608, 0.0
  %1629 = vadd.xlane.f32.xlu0 %v1628
  %v1630 = vpop.xlane.xlu0 %1629
  %v1631 = vsel %vm75, %v1610, 0.0
  %1632 = vadd.xlane.f32.xlu0 %v1631
  %v1633 = vpop.xlane.xlu0 %1632
  %v1634 = vsel %vm75, %v1612, 0.0
  %1635 = vadd.xlane.f32.xlu0 %v1634
  %v1636 = vpop.xlane.xlu0 %1635
  %v1637 = vrcp.pop %v1615
  %v1638 = vrcp.pop %v1618
  %v1639 = vrcp.pop %v1621
  %v1640 = vrcp.pop %v1624
  %v1641 = vrcp.pop %v1627
  %v1642 = vrcp.pop %v1630
  %v1643 = vrcp.pop %v1633
  %v1644 = vrcp.pop %v1636
  %v1645 = vmul.f32 %v1598, %v1637
  %v1646 = vmul.f32 %v1600, %v1638
  %v1647 = vmul.f32 %v1602, %v1639
  %v1648 = vmul.f32 %v1604, %v1640
  %v1649 = vmul.f32 %v1606, %v1641
  %v1650 = vmul.f32 %v1608, %v1642
  %v1651 = vmul.f32 %v1610, %v1643
  %v1652 = vmul.f32 %v1612, %v1644
  %v1654 = vsel %vm75, %v1645, 0
  %v1657 = vsel %vm75, %v1646, 0
  %v1660 = vsel %vm75, %v1647, 0
  %v1663 = vsel %vm75, %v1648, 0
  %v1666 = vsel %vm75, %v1649, 0
  %v1669 = vsel %vm75, %v1650, 0
  %v1672 = vsel %vm75, %v1651, 0
  %v1675 = vsel %vm75, %v1652, 0
  %1677 = vmatprep.subr.mxu0 0.0
  %1678 = vmatpush1.msra.mxu0 %v1373
  %1679 = vmatprep.subr.mxu0 0.0
  %1680 = vmatpush1.msra.mxu0 %v1392
  %1681 = vmatprep.subr.mxu0 0.0
  %1682 = vmatpush1.msra.mxu0 %v1395
  %1683 = vmatprep.subr.mxu0 0.0
  %1684 = vmatpush1.msra.mxu0 %v1398
  %1685 = vmatprep.subr.mxu0 0.0
  %1686 = vmatpush1.msra.mxu0 %v1401
  %1687 = vmatprep.subr.mxu0 0.0
  %1688 = vmatpush1.msra.mxu0 %v1404
  %1689 = vmatprep.subr.mxu0 0.0
  %1690 = vmatpush1.msra.mxu0 %v1407
  %1691 = vmatprep.subr.mxu0 0.0
  %1692 = vmatpush1.msra.mxu0 %v1410
  %1693 = vmatprep.subr.mxu0 0.0
  %1694 = vmatpush1.msra.mxu0 0.0
  %1695 = vmatprep.subr.mxu0 0.0
  %1696 = vmatpush1.msra.mxu0 0.0
  %1697 = vmatprep.subr.mxu0 0.0
  %1698 = vmatpush1.msra.mxu0 0.0
  %1699 = vmatprep.subr.mxu0 0.0
  %1700 = vmatpush1.msra.mxu0 0.0
  %1701 = vmatprep.subr.mxu0 0.0
  %1702 = vmatpush1.msra.mxu0 0.0
  %1703 = vmatprep.subr.mxu0 0.0
  %1704 = vmatpush1.msra.mxu0 0.0
  %1705 = vmatprep.subr.mxu0 0.0
  %1706 = vmatpush1.msra.mxu0 0.0
  %1707 = vmatprep.subr.mxu0 0.0
  %1708 = vmatpush1.msra.mxu0 0.0
  %1709 = vmatprep.subr.mxu0 0.0
  %1710 = vmatpush1.msra.mxu0 0.0
  %1711 = vmatprep.subr.mxu0 0.0
  %1712 = vmatpush1.msra.mxu0 0.0
  %1713 = vmatprep.subr.mxu0 0.0
  %1714 = vmatpush1.msra.mxu0 0.0
  %1715 = vmatprep.subr.mxu0 0.0
  %1716 = vmatpush1.msra.mxu0 0.0
  %1717 = vmatprep.subr.mxu0 0.0
  %1718 = vmatpush1.msra.mxu0 0.0
  %1719 = vmatprep.subr.mxu0 0.0
  %1720 = vmatpush1.msra.mxu0 0.0
  %1721 = vmatprep.subr.mxu0 0.0
  %1722 = vmatpush1.msra.mxu0 0.0
  %1723 = vmatprep.subr.mxu0 0.0
  %1724 = vmatpush1.msra.mxu0 0.0
  %1725 = vmatprep.subr.mxu0 0.0
  %1726 = vmatpush1.msra.mxu0 0.0
  %1727 = vmatprep.subr.mxu0 0.0
  %1728 = vmatpush1.msra.mxu0 0.0
  %1729 = vmatprep.subr.mxu0 0.0
  %1730 = vmatpush1.msra.mxu0 0.0
  %1731 = vmatprep.subr.mxu0 0.0
  %1732 = vmatpush1.msra.mxu0 0.0
  %1733 = vmatprep.subr.mxu0 0.0
  %1734 = vmatpush1.msra.mxu0 0.0
  %1735 = vmatprep.subr.mxu0 0.0
  %1736 = vmatpush1.msra.mxu0 0.0
  %1737 = vmatprep.subr.mxu0 0.0
  %1738 = vmatpush1.msra.mxu0 0.0
  %1739 = vmatprep.subr.mxu0 0.0
  %1740 = vmatpush1.msra.mxu0 0.0
  %1741 = vmatprep.mubr.f32.mxu0 0.0
  %1742 = vmatmul.mubr.f32.gmra.mrb[0].mxu0 %v1654
  %v1743 = vpop.f32.mrb[0].mxu0
  %v1744 = vadd.f32 0.0, %v1743
  %v1745 = vpop.f32.mrb[0].mxu0
  %1746 = vmatprep.mubr.f32.mxu0 0.0
  %1747 = vmatmul.mubr.f32.gmra.mrb[0].mxu0 %v1657
  %v1748 = vpop.f32.mrb[0].mxu0
  %v1749 = vadd.f32 0.0, %v1748
  %v1750 = vpop.f32.mrb[0].mxu0
  %1751 = vmatprep.mubr.f32.mxu0 0.0
  %1752 = vmatmul.mubr.f32.gmra.mrb[0].mxu0 %v1660
  %v1753 = vpop.f32.mrb[0].mxu0
  %v1754 = vadd.f32 0.0, %v1753
  %v1755 = vpop.f32.mrb[0].mxu0
  %1756 = vmatprep.mubr.f32.mxu0 0.0
  %1757 = vmatmul.mubr.f32.gmra.mrb[0].mxu0 %v1663
  %v1758 = vpop.f32.mrb[0].mxu0
  %v1759 = vadd.f32 0.0, %v1758
  %v1760 = vpop.f32.mrb[0].mxu0
  %1761 = vmatprep.mubr.f32.mxu0 0.0
  %1762 = vmatmul.mubr.f32.gmra.mrb[0].mxu0 %v1666
  %v1763 = vpop.f32.mrb[0].mxu0
  %v1764 = vadd.f32 0.0, %v1763
  %v1765 = vpop.f32.mrb[0].mxu0
  %1766 = vmatprep.mubr.f32.mxu0 0.0
  %1767 = vmatmul.mubr.f32.gmra.mrb[0].mxu0 %v1669
  %v1768 = vpop.f32.mrb[0].mxu0
  %v1769 = vadd.f32 0.0, %v1768
  %v1770 = vpop.f32.mrb[0].mxu0
  %1771 = vmatprep.mubr.f32.mxu0 0.0
  %1772 = vmatmul.mubr.f32.gmra.mrb[0].mxu0 %v1672
  %v1773 = vpop.f32.mrb[0].mxu0
  %v1774 = vadd.f32 0.0, %v1773
  %v1775 = vpop.f32.mrb[0].mxu0
  %1776 = vmatprep.mubr.f32.mxu0 0.0
  %1777 = vmatmul.mubr.f32.gmra.mrb[0].mxu0 %v1675
  %v1778 = vpop.f32.mrb[0].mxu0
  %v1779 = vadd.f32 0.0, %v1778
  %v1780 = vpop.f32.mrb[0].mxu0
  %1781 = vdwg.mxu0
  %1783 = vrot.lane.b32.xlu0 %v1749, 8
  %v1784 = vpop.permute.xlu0 %1783
  %1787 = vrot.lane.b32.xlu0 %v1754, 16
  %v1788 = vpop.permute.xlu0 %1787
  %1791 = vrot.lane.b32.xlu0 %v1759, 24
  %v1792 = vpop.permute.xlu0 %1791
  %1795 = vrot.lane.b32.xlu0 %v1764, 32
  %v1796 = vpop.permute.xlu0 %1795
  %1799 = vrot.lane.b32.xlu0 %v1769, 40
  %v1800 = vpop.permute.xlu0 %1799
  %1803 = vrot.lane.b32.xlu0 %v1774, 48
  %v1804 = vpop.permute.xlu0 %1803
  %1807 = vrot.lane.b32.xlu0 %v1779, 56
  %v1808 = vpop.permute.xlu0 %1807
  %v1810 = vsel %vm312, %v1744, %v1784
  %v1811 = vsel %vm696, %v1810, %v1788
  %v1812 = vsel %vm698, %v1811, %v1792
  %v1813 = vsel %vm700, %v1812, %v1796
  %v1814 = vsel %vm702, %v1813, %v1800
  %v1815 = vsel %vm704, %v1814, %v1804
  %v1816 = vsel %vm706, %v1815, %v1808
  %s1817 = scalar_lea.vmem %s6, 64
  %v1818 = vld [vmem:[%s1817] sm:$0xff]
  %v1819 = vld [vmem:[%s1817 + $0x8] sm:$0xff]
  %v1820 = vld [vmem:[%s1817 + $0x10] sm:$0xff]
  %v1821 = vld [vmem:[%s1817 + $0x18] sm:$0xff]
  %v1822 = vld [vmem:[%s1817 + $0x20] sm:$0xff]
  %v1823 = vld [vmem:[%s1817 + $0x28] sm:$0xff]
  %v1824 = vld [vmem:[%s1817 + $0x30] sm:$0xff]
  %v1825 = vld [vmem:[%s1817 + $0x38] sm:$0xff]
  %s1826 = scalar_lea.vmem %s7, 1
  %v1827 = vld [vmem:[%s1826] sm:$0x1]
  %v1829 = vlaneseq
  %v1830 = vshrl.u32 %v1829, 7
  %v1831 = vsub.s32 0, %v1830
  %v1832 = vrot.slane %v1827, %v1831
  %v1835 = vsel %vm75, %v1816, 0
  %1837 = vmatprep.subr.mxu0 0.0
  %1838 = vmatpush1.msra.mxu0 %v1818
  %1839 = vmatprep.subr.mxu0 0.0
  %1840 = vmatpush1.msra.mxu0 %v1819
  %1841 = vmatprep.subr.mxu0 0.0
  %1842 = vmatpush1.msra.mxu0 %v1820
  %1843 = vmatprep.subr.mxu0 0.0
  %1844 = vmatpush1.msra.mxu0 %v1821
  %1845 = vmatprep.subr.mxu0 0.0
  %1846 = vmatpush1.msra.mxu0 %v1822
  %1847 = vmatprep.subr.mxu0 0.0
  %1848 = vmatpush1.msra.mxu0 %v1823
  %1849 = vmatprep.subr.mxu0 0.0
  %1850 = vmatpush1.msra.mxu0 %v1824
  %1851 = vmatprep.subr.mxu0 0.0
  %1852 = vmatpush1.msra.mxu0 %v1825
  %1853 = vmatprep.subr.mxu0 0.0
  %1854 = vmatpush1.msra.mxu0 0.0
  %1855 = vmatprep.subr.mxu0 0.0
  %1856 = vmatpush1.msra.mxu0 0.0
  %1857 = vmatprep.subr.mxu0 0.0
  %1858 = vmatpush1.msra.mxu0 0.0
  %1859 = vmatprep.subr.mxu0 0.0
  %1860 = vmatpush1.msra.mxu0 0.0
  %1861 = vmatprep.subr.mxu0 0.0
  %1862 = vmatpush1.msra.mxu0 0.0
  %1863 = vmatprep.subr.mxu0 0.0
  %1864 = vmatpush1.msra.mxu0 0.0
  %1865 = vmatprep.subr.mxu0 0.0
  %1866 = vmatpush1.msra.mxu0 0.0
  %1867 = vmatprep.subr.mxu0 0.0
  %1868 = vmatpush1.msra.mxu0 0.0
  %1869 = vmatprep.subr.mxu0 0.0
  %1870 = vmatpush1.msra.mxu0 0.0
  %1871 = vmatprep.subr.mxu0 0.0
  %1872 = vmatpush1.msra.mxu0 0.0
  %1873 = vmatprep.subr.mxu0 0.0
  %1874 = vmatpush1.msra.mxu0 0.0
  %1875 = vmatprep.subr.mxu0 0.0
  %1876 = vmatpush1.msra.mxu0 0.0
  %1877 = vmatprep.subr.mxu0 0.0
  %1878 = vmatpush1.msra.mxu0 0.0
  %1879 = vmatprep.subr.mxu0 0.0
  %1880 = vmatpush1.msra.mxu0 0.0
  %1881 = vmatprep.subr.mxu0 0.0
  %1882 = vmatpush1.msra.mxu0 0.0
  %1883 = vmatprep.subr.mxu0 0.0
  %1884 = vmatpush1.msra.mxu0 0.0
  %1885 = vmatprep.subr.mxu0 0.0
  %1886 = vmatpush1.msra.mxu0 0.0
  %1887 = vmatprep.subr.mxu0 0.0
  %1888 = vmatpush1.msra.mxu0 0.0
  %1889 = vmatprep.subr.mxu0 0.0
  %1890 = vmatpush1.msra.mxu0 0.0
  %1891 = vmatprep.subr.mxu0 0.0
  %1892 = vmatpush1.msra.mxu0 0.0
  %1893 = vmatprep.subr.mxu0 0.0
  %1894 = vmatpush1.msra.mxu0 0.0
  %1895 = vmatprep.subr.mxu0 0.0
  %1896 = vmatpush1.msra.mxu0 0.0
  %1897 = vmatprep.subr.mxu0 0.0
  %1898 = vmatpush1.msra.mxu0 0.0
  %1899 = vmatprep.subr.mxu0 0.0
  %1900 = vmatpush1.msra.mxu0 0.0
  %1901 = vmatprep.mubr.f32.mxu0 0.0
  %1902 = vmatmul.mubr.f32.gmra.mrb[0].mxu0 %v1835
  %v1903 = vpop.f32.mrb[0].mxu0
  %v1904 = vadd.f32 %v1832, %v1903
  %v1905 = vpop.f32.mrb[0].mxu0
  %1906 = vdwg.mxu0
  %v1907 = vadd.f32 %v1270, %v1904
  %s1908 = scalar_lea.vmem %s8, 1
  %v1909 = vld [vmem:[%s1908] sm:$0x1]
  %s1910 = scalar_lea.vmem %s9, 1
  %v1911 = vld [vmem:[%s1910] sm:$0x1]
  %v1912 = vsel %vm75, %v1907, 0.0
  %1913 = vadd.xlane.f32.xlu0 %v1912
  %v1914 = vpop.xlane.xlu0 %1913
  %v1915 = vmul.f32 %v1914, %v802
  %v1916 = vsub.f32 %v1907, %v1915
  %v1917 = vmul.f32 %v1916, %v1916
  %v1918 = vsel %vm75, %v1917, 0.0
  %1919 = vadd.xlane.f32.xlu0 %v1918
  %v1920 = vpop.xlane.xlu0 %1919
  %v1921 = vmul.f32 %v1920, %v802
  %v1922 = vadd.f32 %v1921, 1e-05
  %v1923 = vrsqrt.pop %v1922
  %v1924 = vmul.f32 %v1916, %v1923
  %v1926 = vlaneseq
  %v1927 = vshrl.u32 %v1926, 7
  %v1928 = vsub.s32 0, %v1927
  %v1929 = vrot.slane %v1909, %v1928
  %v1931 = vmul.f32 %v1924, %v1929
  %v1933 = vlaneseq
  %v1934 = vshrl.u32 %v1933, 7
  %v1935 = vsub.s32 0, %v1934
  %v1936 = vrot.slane %v1911, %v1935
  %v1938 = vadd.f32 %v1931, %v1936
  %s1939 = scalar_lea.vmem %s12, 256
  %v1940 = vld [vmem:[%s1939] sm:$0xff]
  %v1941 = vld [vmem:[%s1939 + $0x8] sm:$0xff]
  %v1942 = vld [vmem:[%s1939 + $0x10] sm:$0xff]
  %v1943 = vld [vmem:[%s1939 + $0x18] sm:$0xff]
  %v1944 = vld [vmem:[%s1939 + $0x20] sm:$0xff]
  %v1945 = vld [vmem:[%s1939 + $0x28] sm:$0xff]
  %v1946 = vld [vmem:[%s1939 + $0x30] sm:$0xff]
  %v1947 = vld [vmem:[%s1939 + $0x38] sm:$0xff]
  %v1948 = vld [vmem:[%s1939 + $0x40] sm:$0xff]
  %v1949 = vld [vmem:[%s1939 + $0x48] sm:$0xff]
  %v1950 = vld [vmem:[%s1939 + $0x50] sm:$0xff]
  %v1951 = vld [vmem:[%s1939 + $0x58] sm:$0xff]
  %v1952 = vld [vmem:[%s1939 + $0x60] sm:$0xff]
  %v1953 = vld [vmem:[%s1939 + $0x68] sm:$0xff]
  %v1954 = vld [vmem:[%s1939 + $0x70] sm:$0xff]
  %v1955 = vld [vmem:[%s1939 + $0x78] sm:$0xff]
  %v1956 = vld [vmem:[%s1939 + $0x80] sm:$0xff]
  %v1957 = vld [vmem:[%s1939 + $0x88] sm:$0xff]
  %v1958 = vld [vmem:[%s1939 + $0x90] sm:$0xff]
  %v1959 = vld [vmem:[%s1939 + $0x98] sm:$0xff]
  %v1960 = vld [vmem:[%s1939 + $0xa0] sm:$0xff]
  %v1961 = vld [vmem:[%s1939 + $0xa8] sm:$0xff]
  %v1962 = vld [vmem:[%s1939 + $0xb0] sm:$0xff]
  %v1963 = vld [vmem:[%s1939 + $0xb8] sm:$0xff]
  %v1964 = vld [vmem:[%s1939 + $0xc0] sm:$0xff]
  %v1965 = vld [vmem:[%s1939 + $0xc8] sm:$0xff]
  %v1966 = vld [vmem:[%s1939 + $0xd0] sm:$0xff]
  %v1967 = vld [vmem:[%s1939 + $0xd8] sm:$0xff]
  %v1968 = vld [vmem:[%s1939 + $0xe0] sm:$0xff]
  %v1969 = vld [vmem:[%s1939 + $0xe8] sm:$0xff]
  %v1970 = vld [vmem:[%s1939 + $0xf0] sm:$0xff]
  %v1971 = vld [vmem:[%s1939 + $0xf8] sm:$0xff]
  %s1972 = scalar_lea.vmem %s13, 4
  %v1973 = vld [vmem:[%s1972] sm:$0xf]
  %v1975 = vlaneseq
  %v1976 = vshrl.u32 %v1975, 7
  %v1977 = vsub.s32 0, %v1976
  %v1978 = vrot.slane %v1973, %v1977
  %v1979 = vlaneseq
  %v1980 = vshrl.u32 %v1979, 7
  %v1981 = vsub.s32 1, %v1980
  %v1982 = vrot.slane %v1973, %v1981
  %v1983 = vlaneseq
  %v1984 = vshrl.u32 %v1983, 7
  %v1985 = vsub.s32 2, %v1984
  %v1986 = vrot.slane %v1973, %v1985
  %v1987 = vlaneseq
  %v1988 = vshrl.u32 %v1987, 7
  %v1989 = vsub.s32 3, %v1988
  %v1990 = vrot.slane %v1973, %v1989
  %v1996 = vsel %vm75, %v1938, 0
  %1998 = vmatprep.subr.mxu0 %v1941
  %1999 = vmatpush1.msra.mxu0 %v1940
  %2000 = vmatprep.subr.mxu0 %v1945
  %2001 = vmatpush1.msra.mxu0 %v1944
  %2002 = vmatprep.subr.mxu0 %v1949
  %2003 = vmatpush1.msra.mxu0 %v1948
  %2004 = vmatprep.subr.mxu0 %v1953
  %2005 = vmatpush1.msra.mxu0 %v1952
  %2006 = vmatprep.subr.mxu0 %v1957
  %2007 = vmatpush1.msra.mxu0 %v1956
  %2008 = vmatprep.subr.mxu0 %v1961
  %2009 = vmatpush1.msra.mxu0 %v1960
  %2010 = vmatprep.subr.mxu0 %v1965
  %2011 = vmatpush1.msra.mxu0 %v1964
  %2012 = vmatprep.subr.mxu0 %v1969
  %2013 = vmatpush1.msra.mxu0 %v1968
  %2014 = vmatprep.subr.mxu0 0.0
  %2015 = vmatpush1.msra.mxu0 0.0
  %2016 = vmatprep.subr.mxu0 0.0
  %2017 = vmatpush1.msra.mxu0 0.0
  %2018 = vmatprep.subr.mxu0 0.0
  %2019 = vmatpush1.msra.mxu0 0.0
  %2020 = vmatprep.subr.mxu0 0.0
  %2021 = vmatpush1.msra.mxu0 0.0
  %2022 = vmatprep.subr.mxu0 0.0
  %2023 = vmatpush1.msra.mxu0 0.0
  %2024 = vmatprep.subr.mxu0 0.0
  %2025 = vmatpush1.msra.mxu0 0.0
  %2026 = vmatprep.subr.mxu0 0.0
  %2027 = vmatpush1.msra.mxu0 0.0
  %2028 = vmatprep.subr.mxu0 0.0
  %2029 = vmatpush1.msra.mxu0 0.0
  %2030 = vmatprep.subr.mxu0 0.0
  %2031 = vmatpush1.msra.mxu0 0.0
  %2032 = vmatprep.subr.mxu0 0.0
  %2033 = vmatpush1.msra.mxu0 0.0
  %2034 = vmatprep.subr.mxu0 0.0
  %2035 = vmatpush1.msra.mxu0 0.0
  %2036 = vmatprep.subr.mxu0 0.0
  %2037 = vmatpush1.msra.mxu0 0.0
  %2038 = vmatprep.subr.mxu0 0.0
  %2039 = vmatpush1.msra.mxu0 0.0
  %2040 = vmatprep.subr.mxu0 0.0
  %2041 = vmatpush1.msra.mxu0 0.0
  %2042 = vmatprep.subr.mxu0 0.0
  %2043 = vmatpush1.msra.mxu0 0.0
  %2044 = vmatprep.subr.mxu0 0.0
  %2045 = vmatpush1.msra.mxu0 0.0
  %2046 = vmatprep.subr.mxu0 0.0
  %2047 = vmatpush1.msra.mxu0 0.0
  %2048 = vmatprep.subr.mxu0 0.0
  %2049 = vmatpush1.msra.mxu0 0.0
  %2050 = vmatprep.subr.mxu0 0.0
  %2051 = vmatpush1.msra.mxu0 0.0
  %2052 = vmatprep.subr.mxu0 0.0
  %2053 = vmatpush1.msra.mxu0 0.0
  %2054 = vmatprep.subr.mxu0 0.0
  %2055 = vmatpush1.msra.mxu0 0.0
  %2056 = vmatprep.subr.mxu0 0.0
  %2057 = vmatpush1.msra.mxu0 0.0
  %2058 = vmatprep.subr.mxu0 0.0
  %2059 = vmatpush1.msra.mxu0 0.0
  %2060 = vmatprep.subr.mxu0 0.0
  %2061 = vmatpush1.msra.mxu0 0.0
  %2062 = vmatprep.mubr.f32.mxu0 0.0
  %2063 = vmatmul.mubr.f32.gmra.mrb[0].mxu0 %v1996
  %v2064 = vpop.f32.mrb[0].mxu0
  %v2065 = vadd.f32 %v1978, %v2064
  %v2066 = vpop.f32.mrb[0].mxu0
  %v2067 = vadd.f32 %v1982, %v2066
  %2068 = vdwg.mxu0
  %2069 = vmatprep.subr.mxu0 %v1943
  %2070 = vmatpush1.msra.mxu0 %v1942
  %2071 = vmatprep.subr.mxu0 %v1947
  %2072 = vmatpush1.msra.mxu0 %v1946
  %2073 = vmatprep.subr.mxu0 %v1951
  %2074 = vmatpush1.msra.mxu0 %v1950
  %2075 = vmatprep.subr.mxu0 %v1955
  %2076 = vmatpush1.msra.mxu0 %v1954
  %2077 = vmatprep.subr.mxu0 %v1959
  %2078 = vmatpush1.msra.mxu0 %v1958
  %2079 = vmatprep.subr.mxu0 %v1963
  %2080 = vmatpush1.msra.mxu0 %v1962
  %2081 = vmatprep.subr.mxu0 %v1967
  %2082 = vmatpush1.msra.mxu0 %v1966
  %2083 = vmatprep.subr.mxu0 %v1971
  %2084 = vmatpush1.msra.mxu0 %v1970
  %2085 = vmatprep.subr.mxu0 0.0
  %2086 = vmatpush1.msra.mxu0 0.0
  %2087 = vmatprep.subr.mxu0 0.0
  %2088 = vmatpush1.msra.mxu0 0.0
  %2089 = vmatprep.subr.mxu0 0.0
  %2090 = vmatpush1.msra.mxu0 0.0
  %2091 = vmatprep.subr.mxu0 0.0
  %2092 = vmatpush1.msra.mxu0 0.0
  %2093 = vmatprep.subr.mxu0 0.0
  %2094 = vmatpush1.msra.mxu0 0.0
  %2095 = vmatprep.subr.mxu0 0.0
  %2096 = vmatpush1.msra.mxu0 0.0
  %2097 = vmatprep.subr.mxu0 0.0
  %2098 = vmatpush1.msra.mxu0 0.0
  %2099 = vmatprep.subr.mxu0 0.0
  %2100 = vmatpush1.msra.mxu0 0.0
  %2101 = vmatprep.subr.mxu0 0.0
  %2102 = vmatpush1.msra.mxu0 0.0
  %2103 = vmatprep.subr.mxu0 0.0
  %2104 = vmatpush1.msra.mxu0 0.0
  %2105 = vmatprep.subr.mxu0 0.0
  %2106 = vmatpush1.msra.mxu0 0.0
  %2107 = vmatprep.subr.mxu0 0.0
  %2108 = vmatpush1.msra.mxu0 0.0
  %2109 = vmatprep.subr.mxu0 0.0
  %2110 = vmatpush1.msra.mxu0 0.0
  %2111 = vmatprep.subr.mxu0 0.0
  %2112 = vmatpush1.msra.mxu0 0.0
  %2113 = vmatprep.subr.mxu0 0.0
  %2114 = vmatpush1.msra.mxu0 0.0
  %2115 = vmatprep.subr.mxu0 0.0
  %2116 = vmatpush1.msra.mxu0 0.0
  %2117 = vmatprep.subr.mxu0 0.0
  %2118 = vmatpush1.msra.mxu0 0.0
  %2119 = vmatprep.subr.mxu0 0.0
  %2120 = vmatpush1.msra.mxu0 0.0
  %2121 = vmatprep.subr.mxu0 0.0
  %2122 = vmatpush1.msra.mxu0 0.0
  %2123 = vmatprep.subr.mxu0 0.0
  %2124 = vmatpush1.msra.mxu0 0.0
  %2125 = vmatprep.subr.mxu0 0.0
  %2126 = vmatpush1.msra.mxu0 0.0
  %2127 = vmatprep.subr.mxu0 0.0
  %2128 = vmatpush1.msra.mxu0 0.0
  %2129 = vmatprep.subr.mxu0 0.0
  %2130 = vmatpush1.msra.mxu0 0.0
  %2131 = vmatprep.subr.mxu0 0.0
  %2132 = vmatpush1.msra.mxu0 0.0
  %2133 = vmatprep.mubr.f32.mxu0 0.0
  %2134 = vmatmul.mubr.f32.gmra.mrb[0].mxu0 %v1996
  %v2135 = vpop.f32.mrb[0].mxu0
  %v2136 = vadd.f32 %v1986, %v2135
  %v2137 = vpop.f32.mrb[0].mxu0
  %v2138 = vadd.f32 %v1990, %v2137
  %2139 = vdwg.mxu0
  %v2140 = vmax.f32 %v2065, 0.0
  %v2141 = vmax.f32 %v2067, 0.0
  %v2142 = vmax.f32 %v2136, 0.0
  %v2143 = vmax.f32 %v2138, 0.0
  %s2144 = scalar_lea.vmem %s14, 512
  %v2145 = vld [vmem:[%s2144] sm:$0xff]
  %v2146 = vld [vmem:[%s2144 + $0x8] sm:$0xff]
  %v2147 = vld [vmem:[%s2144 + $0x10] sm:$0xff]
  %v2148 = vld [vmem:[%s2144 + $0x18] sm:$0xff]
  %v2149 = vld [vmem:[%s2144 + $0x20] sm:$0xff]
  %v2150 = vld [vmem:[%s2144 + $0x28] sm:$0xff]
  %v2151 = vld [vmem:[%s2144 + $0x30] sm:$0xff]
  %v2152 = vld [vmem:[%s2144 + $0x38] sm:$0xff]
  %v2153 = vld [vmem:[%s2144 + $0x40] sm:$0xff]
  %v2154 = vld [vmem:[%s2144 + $0x48] sm:$0xff]
  %v2155 = vld [vmem:[%s2144 + $0x50] sm:$0xff]
  %v2156 = vld [vmem:[%s2144 + $0x58] sm:$0xff]
  %v2157 = vld [vmem:[%s2144 + $0x60] sm:$0xff]
  %v2158 = vld [vmem:[%s2144 + $0x68] sm:$0xff]
  %v2159 = vld [vmem:[%s2144 + $0x70] sm:$0xff]
  %v2160 = vld [vmem:[%s2144 + $0x78] sm:$0xff]
  %v2161 = vld [vmem:[%s2144 + $0x80] sm:$0xff]
  %v2162 = vld [vmem:[%s2144 + $0x88] sm:$0xff]
  %v2163 = vld [vmem:[%s2144 + $0x90] sm:$0xff]
  %v2164 = vld [vmem:[%s2144 + $0x98] sm:$0xff]
  %v2165 = vld [vmem:[%s2144 + $0xa0] sm:$0xff]
  %v2166 = vld [vmem:[%s2144 + $0xa8] sm:$0xff]
  %v2167 = vld [vmem:[%s2144 + $0xb0] sm:$0xff]
  %v2168 = vld [vmem:[%s2144 + $0xb8] sm:$0xff]
  %v2169 = vld [vmem:[%s2144 + $0xc0] sm:$0xff]
  %v2170 = vld [vmem:[%s2144 + $0xc8] sm:$0xff]
  %v2171 = vld [vmem:[%s2144 + $0xd0] sm:$0xff]
  %v2172 = vld [vmem:[%s2144 + $0xd8] sm:$0xff]
  %v2173 = vld [vmem:[%s2144 + $0xe0] sm:$0xff]
  %v2174 = vld [vmem:[%s2144 + $0xe8] sm:$0xff]
  %v2175 = vld [vmem:[%s2144 + $0xf0] sm:$0xff]
  %v2176 = vld [vmem:[%s2144 + $0xf8] sm:$0xff]
  %v2177 = vld [vmem:[%s2144 + $0x100] sm:$0xff]
  %v2178 = vld [vmem:[%s2144 + $0x108] sm:$0xff]
  %v2179 = vld [vmem:[%s2144 + $0x110] sm:$0xff]
  %v2180 = vld [vmem:[%s2144 + $0x118] sm:$0xff]
  %v2181 = vld [vmem:[%s2144 + $0x120] sm:$0xff]
  %v2182 = vld [vmem:[%s2144 + $0x128] sm:$0xff]
  %v2183 = vld [vmem:[%s2144 + $0x130] sm:$0xff]
  %v2184 = vld [vmem:[%s2144 + $0x138] sm:$0xff]
  %v2185 = vld [vmem:[%s2144 + $0x140] sm:$0xff]
  %v2186 = vld [vmem:[%s2144 + $0x148] sm:$0xff]
  %v2187 = vld [vmem:[%s2144 + $0x150] sm:$0xff]
  %v2188 = vld [vmem:[%s2144 + $0x158] sm:$0xff]
  %v2189 = vld [vmem:[%s2144 + $0x160] sm:$0xff]
  %v2190 = vld [vmem:[%s2144 + $0x168] sm:$0xff]
  %v2191 = vld [vmem:[%s2144 + $0x170] sm:$0xff]
  %v2192 = vld [vmem:[%s2144 + $0x178] sm:$0xff]
  %v2193 = vld [vmem:[%s2144 + $0x180] sm:$0xff]
  %v2194 = vld [vmem:[%s2144 + $0x188] sm:$0xff]
  %v2195 = vld [vmem:[%s2144 + $0x190] sm:$0xff]
  %v2196 = vld [vmem:[%s2144 + $0x198] sm:$0xff]
  %v2197 = vld [vmem:[%s2144 + $0x1a0] sm:$0xff]
  %v2198 = vld [vmem:[%s2144 + $0x1a8] sm:$0xff]
  %v2199 = vld [vmem:[%s2144 + $0x1b0] sm:$0xff]
  %v2200 = vld [vmem:[%s2144 + $0x1b8] sm:$0xff]
  %v2201 = vld [vmem:[%s2144 + $0x1c0] sm:$0xff]
  %v2202 = vld [vmem:[%s2144 + $0x1c8] sm:$0xff]
  %v2203 = vld [vmem:[%s2144 + $0x1d0] sm:$0xff]
  %v2204 = vld [vmem:[%s2144 + $0x1d8] sm:$0xff]
  %v2205 = vld [vmem:[%s2144 + $0x1e0] sm:$0xff]
  %v2206 = vld [vmem:[%s2144 + $0x1e8] sm:$0xff]
  %v2207 = vld [vmem:[%s2144 + $0x1f0] sm:$0xff]
  %v2208 = vld [vmem:[%s2144 + $0x1f8] sm:$0xff]
  %s2209 = scalar_lea.vmem %s15, 1
  %v2210 = vld [vmem:[%s2209] sm:$0x1]
  %v2212 = vlaneseq
  %v2213 = vshrl.u32 %v2212, 7
  %v2214 = vsub.s32 0, %v2213
  %v2215 = vrot.slane %v2210, %v2214
  %2217 = vmatprep.subr.mxu0 0.0
  %2218 = vmatpush1.msra.mxu0 %v2145
  %2219 = vmatprep.subr.mxu0 0.0
  %2220 = vmatpush1.msra.mxu0 %v2146
  %2221 = vmatprep.subr.mxu0 0.0
  %2222 = vmatpush1.msra.mxu0 %v2147
  %2223 = vmatprep.subr.mxu0 0.0
  %2224 = vmatpush1.msra.mxu0 %v2148
  %2225 = vmatprep.subr.mxu0 0.0
  %2226 = vmatpush1.msra.mxu0 %v2149
  %2227 = vmatprep.subr.mxu0 0.0
  %2228 = vmatpush1.msra.mxu0 %v2150
  %2229 = vmatprep.subr.mxu0 0.0
  %2230 = vmatpush1.msra.mxu0 %v2151
  %2231 = vmatprep.subr.mxu0 0.0
  %2232 = vmatpush1.msra.mxu0 %v2152
  %2233 = vmatprep.subr.mxu0 0.0
  %2234 = vmatpush1.msra.mxu0 %v2153
  %2235 = vmatprep.subr.mxu0 0.0
  %2236 = vmatpush1.msra.mxu0 %v2154
  %2237 = vmatprep.subr.mxu0 0.0
  %2238 = vmatpush1.msra.mxu0 %v2155
  %2239 = vmatprep.subr.mxu0 0.0
  %2240 = vmatpush1.msra.mxu0 %v2156
  %2241 = vmatprep.subr.mxu0 0.0
  %2242 = vmatpush1.msra.mxu0 %v2157
  %2243 = vmatprep.subr.mxu0 0.0
  %2244 = vmatpush1.msra.mxu0 %v2158
  %2245 = vmatprep.subr.mxu0 0.0
  %2246 = vmatpush1.msra.mxu0 %v2159
  %2247 = vmatprep.subr.mxu0 0.0
  %2248 = vmatpush1.msra.mxu0 %v2160
  %2249 = vmatprep.subr.mxu0 0.0
  %2250 = vmatpush1.msra.mxu0 %v2161
  %2251 = vmatprep.subr.mxu0 0.0
  %2252 = vmatpush1.msra.mxu0 %v2162
  %2253 = vmatprep.subr.mxu0 0.0
  %2254 = vmatpush1.msra.mxu0 %v2163
  %2255 = vmatprep.subr.mxu0 0.0
  %2256 = vmatpush1.msra.mxu0 %v2164
  %2257 = vmatprep.subr.mxu0 0.0
  %2258 = vmatpush1.msra.mxu0 %v2165
  %2259 = vmatprep.subr.mxu0 0.0
  %2260 = vmatpush1.msra.mxu0 %v2166
  %2261 = vmatprep.subr.mxu0 0.0
  %2262 = vmatpush1.msra.mxu0 %v2167
  %2263 = vmatprep.subr.mxu0 0.0
  %2264 = vmatpush1.msra.mxu0 %v2168
  %2265 = vmatprep.subr.mxu0 0.0
  %2266 = vmatpush1.msra.mxu0 %v2169
  %2267 = vmatprep.subr.mxu0 0.0
  %2268 = vmatpush1.msra.mxu0 %v2170
  %2269 = vmatprep.subr.mxu0 0.0
  %2270 = vmatpush1.msra.mxu0 %v2171
  %2271 = vmatprep.subr.mxu0 0.0
  %2272 = vmatpush1.msra.mxu0 %v2172
  %2273 = vmatprep.subr.mxu0 0.0
  %2274 = vmatpush1.msra.mxu0 %v2173
  %2275 = vmatprep.subr.mxu0 0.0
  %2276 = vmatpush1.msra.mxu0 %v2174
  %2277 = vmatprep.subr.mxu0 0.0
  %2278 = vmatpush1.msra.mxu0 %v2175
  %2279 = vmatprep.subr.mxu0 0.0
  %2280 = vmatpush1.msra.mxu0 %v2176
  %2281 = vmatprep.mubr.f32.mxu0 %v2141
  %2282 = vmatmul.mubr.f32.gmra.mrb[0].mxu0 %v2140
  %v2283 = vpop.f32.mrb[0].mxu0
  %v2284 = vadd.f32 %v2215, %v2283
  %v2285 = vpop.f32.mrb[0].mxu0
  %2286 = vdwg.mxu0
  %2287 = vmatprep.subr.mxu0 0.0
  %2288 = vmatpush1.msra.mxu0 %v2177
  %2289 = vmatprep.subr.mxu0 0.0
  %2290 = vmatpush1.msra.mxu0 %v2178
  %2291 = vmatprep.subr.mxu0 0.0
  %2292 = vmatpush1.msra.mxu0 %v2179
  %2293 = vmatprep.subr.mxu0 0.0
  %2294 = vmatpush1.msra.mxu0 %v2180
  %2295 = vmatprep.subr.mxu0 0.0
  %2296 = vmatpush1.msra.mxu0 %v2181
  %2297 = vmatprep.subr.mxu0 0.0
  %2298 = vmatpush1.msra.mxu0 %v2182
  %2299 = vmatprep.subr.mxu0 0.0
  %2300 = vmatpush1.msra.mxu0 %v2183
  %2301 = vmatprep.subr.mxu0 0.0
  %2302 = vmatpush1.msra.mxu0 %v2184
  %2303 = vmatprep.subr.mxu0 0.0
  %2304 = vmatpush1.msra.mxu0 %v2185
  %2305 = vmatprep.subr.mxu0 0.0
  %2306 = vmatpush1.msra.mxu0 %v2186
  %2307 = vmatprep.subr.mxu0 0.0
  %2308 = vmatpush1.msra.mxu0 %v2187
  %2309 = vmatprep.subr.mxu0 0.0
  %2310 = vmatpush1.msra.mxu0 %v2188
  %2311 = vmatprep.subr.mxu0 0.0
  %2312 = vmatpush1.msra.mxu0 %v2189
  %2313 = vmatprep.subr.mxu0 0.0
  %2314 = vmatpush1.msra.mxu0 %v2190
  %2315 = vmatprep.subr.mxu0 0.0
  %2316 = vmatpush1.msra.mxu0 %v2191
  %2317 = vmatprep.subr.mxu0 0.0
  %2318 = vmatpush1.msra.mxu0 %v2192
  %2319 = vmatprep.subr.mxu0 0.0
  %2320 = vmatpush1.msra.mxu0 %v2193
  %2321 = vmatprep.subr.mxu0 0.0
  %2322 = vmatpush1.msra.mxu0 %v2194
  %2323 = vmatprep.subr.mxu0 0.0
  %2324 = vmatpush1.msra.mxu0 %v2195
  %2325 = vmatprep.subr.mxu0 0.0
  %2326 = vmatpush1.msra.mxu0 %v2196
  %2327 = vmatprep.subr.mxu0 0.0
  %2328 = vmatpush1.msra.mxu0 %v2197
  %2329 = vmatprep.subr.mxu0 0.0
  %2330 = vmatpush1.msra.mxu0 %v2198
  %2331 = vmatprep.subr.mxu0 0.0
  %2332 = vmatpush1.msra.mxu0 %v2199
  %2333 = vmatprep.subr.mxu0 0.0
  %2334 = vmatpush1.msra.mxu0 %v2200
  %2335 = vmatprep.subr.mxu0 0.0
  %2336 = vmatpush1.msra.mxu0 %v2201
  %2337 = vmatprep.subr.mxu0 0.0
  %2338 = vmatpush1.msra.mxu0 %v2202
  %2339 = vmatprep.subr.mxu0 0.0
  %2340 = vmatpush1.msra.mxu0 %v2203
  %2341 = vmatprep.subr.mxu0 0.0
  %2342 = vmatpush1.msra.mxu0 %v2204
  %2343 = vmatprep.subr.mxu0 0.0
  %2344 = vmatpush1.msra.mxu0 %v2205
  %2345 = vmatprep.subr.mxu0 0.0
  %2346 = vmatpush1.msra.mxu0 %v2206
  %2347 = vmatprep.subr.mxu0 0.0
  %2348 = vmatpush1.msra.mxu0 %v2207
  %2349 = vmatprep.subr.mxu0 0.0
  %2350 = vmatpush1.msra.mxu0 %v2208
  %2351 = vmatprep.mubr.f32.mxu0 %v2143
  %2352 = vmatmul.mubr.f32.gmra.mrb[0].mxu0 %v2142
  %v2353 = vpop.f32.mrb[0].mxu0
  %v2354 = vadd.f32 %v2284, %v2353
  %v2355 = vpop.f32.mrb[0].mxu0
  %2356 = vdwg.mxu0
  %v2357 = vadd.f32 %v1938, %v2354
  %s2358 = scalar_lea.vmem %s10, 1
  %v2359 = vld [vmem:[%s2358] sm:$0x1]
  %s2360 = scalar_lea.vmem %s11, 1
  %v2361 = vld [vmem:[%s2360] sm:$0x1]
  %v2362 = vsel %vm75, %v2357, 0.0
  %2363 = vadd.xlane.f32.xlu0 %v2362
  %v2364 = vpop.xlane.xlu0 %2363
  %v2365 = vmul.f32 %v2364, %v802
  %v2366 = vsub.f32 %v2357, %v2365
  %v2367 = vmul.f32 %v2366, %v2366
  %v2368 = vsel %vm75, %v2367, 0.0
  %2369 = vadd.xlane.f32.xlu0 %v2368
  %v2370 = vpop.xlane.xlu0 %2369
  %v2371 = vmul.f32 %v2370, %v802
  %v2372 = vadd.f32 %v2371, 1e-05
  %v2373 = vrsqrt.pop %v2372
  %v2374 = vmul.f32 %v2366, %v2373
  %v2376 = vlaneseq
  %v2377 = vshrl.u32 %v2376, 7
  %v2378 = vsub.s32 0, %v2377
  %v2379 = vrot.slane %v2359, %v2378
  %v2381 = vmul.f32 %v2374, %v2379
  %v2383 = vlaneseq
  %v2384 = vshrl.u32 %v2383, 7
  %v2385 = vsub.s32 0, %v2384
  %v2386 = vrot.slane %v2361, %v2385
  %v2388 = vadd.f32 %v2381, %v2386
  %v2389 = vld [vmem:[%s16] sm:$0x1]
  %v2390 = vld [vmem:[%s17] sm:$0x1]
  %v2391 = vsel %vm75, %v2388, 0.0
  %2392 = vadd.xlane.f32.xlu0 %v2391
  %v2393 = vpop.xlane.xlu0 %2392
  %v2394 = vmul.f32 %v2393, %v802
  %v2395 = vsub.f32 %v2388, %v2394
  %v2396 = vmul.f32 %v2395, %v2395
  %v2397 = vsel %vm75, %v2396, 0.0
  %2398 = vadd.xlane.f32.xlu0 %v2397
  %v2399 = vpop.xlane.xlu0 %2398
  %v2400 = vmul.f32 %v2399, %v802
  %v2401 = vadd.f32 %v2400, 1e-05
  %v2402 = vrsqrt.pop %v2401
  %v2403 = vmul.f32 %v2395, %v2402
  %v2405 = vlaneseq
  %v2406 = vshrl.u32 %v2405, 7
  %v2407 = vsub.s32 0, %v2406
  %v2408 = vrot.slane %v2389, %v2407
  %v2410 = vmul.f32 %v2403, %v2408
  %v2412 = vlaneseq
  %v2413 = vshrl.u32 %v2412, 7
  %v2414 = vsub.s32 0, %v2413
  %v2415 = vrot.slane %v2390, %v2414
  %v2417 = vadd.f32 %v2410, %v2415
  %v2418 = vld [vmem:[%s18] sm:$0xff]
  %v2419 = vld [vmem:[%s18 + $0x8] sm:$0xff]
  %v2420 = vld [vmem:[%s18 + $0x10] sm:$0xff]
  %v2421 = vld [vmem:[%s18 + $0x18] sm:$0xff]
  %v2422 = vld [vmem:[%s18 + $0x20] sm:$0xff]
  %v2423 = vld [vmem:[%s18 + $0x28] sm:$0xff]
  %v2424 = vld [vmem:[%s18 + $0x30] sm:$0xff]
  %v2425 = vld [vmem:[%s18 + $0x38] sm:$0xff]
  %v2426 = vld [vmem:[%s19] sm:$0x1]
  %v2428 = vlaneseq
  %v2429 = vshrl.u32 %v2428, 7
  %v2430 = vsub.s32 0, %v2429
  %v2431 = vrot.slane %v2426, %v2430
  %v2434 = vsel %vm75, %v2417, 0
  %2436 = vmatprep.subr.mxu0 0.0
  %2437 = vmatpush1.msra.mxu0 %v2418
  %2438 = vmatprep.subr.mxu0 0.0
  %2439 = vmatpush1.msra.mxu0 %v2419
  %2440 = vmatprep.subr.mxu0 0.0
  %2441 = vmatpush1.msra.mxu0 %v2420
  %2442 = vmatprep.subr.mxu0 0.0
  %2443 = vmatpush1.msra.mxu0 %v2421
  %2444 = vmatprep.subr.mxu0 0.0
  %2445 = vmatpush1.msra.mxu0 %v2422
  %2446 = vmatprep.subr.mxu0 0.0
  %2447 = vmatpush1.msra.mxu0 %v2423
  %2448 = vmatprep.subr.mxu0 0.0
  %2449 = vmatpush1.msra.mxu0 %v2424
  %2450 = vmatprep.subr.mxu0 0.0
  %2451 = vmatpush1.msra.mxu0 %v2425
  %2452 = vmatprep.subr.mxu0 0.0
  %2453 = vmatpush1.msra.mxu0 0.0
  %2454 = vmatprep.subr.mxu0 0.0
  %2455 = vmatpush1.msra.mxu0 0.0
  %2456 = vmatprep.subr.mxu0 0.0
  %2457 = vmatpush1.msra.mxu0 0.0
  %2458 = vmatprep.subr.mxu0 0.0
  %2459 = vmatpush1.msra.mxu0 0.0
  %2460 = vmatprep.subr.mxu0 0.0
  %2461 = vmatpush1.msra.mxu0 0.0
  %2462 = vmatprep.subr.mxu0 0.0
  %2463 = vmatpush1.msra.mxu0 0.0
  %2464 = vmatprep.subr.mxu0 0.0
  %2465 = vmatpush1.msra.mxu0 0.0
  %2466 = vmatprep.subr.mxu0 0.0
  %2467 = vmatpush1.msra.mxu0 0.0
  %2468 = vmatprep.subr.mxu0 0.0
  %2469 = vmatpush1.msra.mxu0 0.0
  %2470 = vmatprep.subr.mxu0 0.0
  %2471 = vmatpush1.msra.mxu0 0.0
  %2472 = vmatprep.subr.mxu0 0.0
  %2473 = vmatpush1.msra.mxu0 0.0
  %2474 = vmatprep.subr.mxu0 0.0
  %2475 = vmatpush1.msra.mxu0 0.0
  %2476 = vmatprep.subr.mxu0 0.0
  %2477 = vmatpush1.msra.mxu0 0.0
  %2478 = vmatprep.subr.mxu0 0.0
  %2479 = vmatpush1.msra.mxu0 0.0
  %2480 = vmatprep.subr.mxu0 0.0
  %2481 = vmatpush1.msra.mxu0 0.0
  %2482 = vmatprep.subr.mxu0 0.0
  %2483 = vmatpush1.msra.mxu0 0.0
  %2484 = vmatprep.subr.mxu0 0.0
  %2485 = vmatpush1.msra.mxu0 0.0
  %2486 = vmatprep.subr.mxu0 0.0
  %2487 = vmatpush1.msra.mxu0 0.0
  %2488 = vmatprep.subr.mxu0 0.0
  %2489 = vmatpush1.msra.mxu0 0.0
  %2490 = vmatprep.subr.mxu0 0.0
  %2491 = vmatpush1.msra.mxu0 0.0
  %2492 = vmatprep.subr.mxu0 0.0
  %2493 = vmatpush1.msra.mxu0 0.0
  %2494 = vmatprep.subr.mxu0 0.0
  %2495 = vmatpush1.msra.mxu0 0.0
  %2496 = vmatprep.subr.mxu0 0.0
  %2497 = vmatpush1.msra.mxu0 0.0
  %2498 = vmatprep.subr.mxu0 0.0
  %2499 = vmatpush1.msra.mxu0 0.0
  %2500 = vmatprep.mubr.f32.mxu0 0.0
  %2501 = vmatmul.mubr.f32.gmra.mrb[0].mxu0 %v2434
  %v2502 = vpop.f32.mrb[0].mxu0
  %v2503 = vadd.f32 %v2431, %v2502
  %v2504 = vpop.f32.mrb[0].mxu0
  %2505 = vdwg.mxu0
  %2506 = vst.msk [vmem:[%s20] sm:$0xff] %vm75, %v2503
  // Predicated region
  $region82: #{_lambda_.2} parent=0 // pred_check
    _
  $region83: #{_lambda_.2} parent=0 // pred_check_branch
    %2508 = sbr.rel (0) target = $region85
  $region84: #{_lambda_.2} parent=0 // pred_region
    _
  $region85: #{_lambda_.2} parent=0 // pred_fallthru
    _
  // Predicated region
  $region86: #{_lambda_.2} parent=0 // pred_check
    _
  $region87: #{_lambda_.2} parent=0 // pred_check_branch
    %2510 = sbr.rel (0) target = $region89
  $region88: #{_lambda_.2} parent=0 // pred_region
    _
  $region89: #{_lambda_.2} parent=0 // pred_fallthru
    _

</llo_original>
